<compile_context>
chip_gen: v7x
topology: tpu7x:2x2x1
jax: 0.10.0
libtpu: 0.0.40
codegen_flags: <defaults>
</compile_context>

<pallas_src>
import functools

import jax
import jax.numpy as jnp
from jax.experimental import pallas as pl
from jax.experimental.pallas import tpu as pltpu


# ----------------------------------------------------------------------------
# Kernel A: fused [3x3 conv + BN(folded) + ReLU + 1x1 conv] on one output row.
# ----------------------------------------------------------------------------
def _conv3x3_fused_kernel(r0_ref, r1_ref, r2_ref, wt_ref, bm_ref,
                          w2_ref, b2_ref, o_ref, *, wo):
    rows = (r0_ref[0, 0], r1_ref[0, 0], r2_ref[0, 0])       # each (Wp, Cin) bf16
    acc = jnp.dot(rows[0][0:wo, :], wt_ref[0],
                  preferred_element_type=jnp.float32)
    for tap in range(1, 9):
        ky, kx = divmod(tap, 3)
        acc = acc + jnp.dot(rows[ky][kx:kx + wo, :], wt_ref[tap],
                            preferred_element_type=jnp.float32)
    h = jnp.maximum(acc + bm_ref[...], 0.0)                  # BN folded, ReLU (f32)
    out = jnp.dot(h.astype(jnp.bfloat16), w2_ref[...],
                  preferred_element_type=jnp.float32) + b2_ref[...]
    o_ref[0, 0] = out


def conv3x3_fused(xpad_bf16, w_taps, b_mid, w_second, b_second):
    """xpad_bf16: (N, Ho+2, Wo+2, Cin) bf16 (zero padded). Returns (N,Ho,Wo,Cout) f32."""
    N, Hp, Wp, Cin = xpad_bf16.shape
    Ho, Wo = Hp - 2, Wp - 2
    Cmid = w_taps.shape[-1]
    Cout = w_second.shape[-1]
    kern = functools.partial(_conv3x3_fused_kernel, wo=Wo)
    return pl.pallas_call(
        kern,
        out_shape=jax.ShapeDtypeStruct((N, Ho, Wo, Cout), jnp.float32),
        grid_spec=pltpu.PrefetchScalarGridSpec(
            num_scalar_prefetch=0,
            grid=(N, Ho),
            in_specs=[
                pl.BlockSpec((1, 1, Wp, Cin), lambda n, h: (n, h, 0, 0)),
                pl.BlockSpec((1, 1, Wp, Cin), lambda n, h: (n, h + 1, 0, 0)),
                pl.BlockSpec((1, 1, Wp, Cin), lambda n, h: (n, h + 2, 0, 0)),
                pl.BlockSpec((9, Cin, Cmid), lambda n, h: (0, 0, 0)),
                pl.BlockSpec((1, Cmid), lambda n, h: (0, 0)),
                pl.BlockSpec((Cmid, Cout), lambda n, h: (0, 0)),
                pl.BlockSpec((1, Cout), lambda n, h: (0, 0)),
            ],
            out_specs=pl.BlockSpec((1, 1, Wo, Cout), lambda n, h: (n, h, 0, 0)),
        ),
        compiler_params=pltpu.CompilerParams(
            dimension_semantics=("parallel", "parallel")),
    )(xpad_bf16, xpad_bf16, xpad_bf16, w_taps, b_mid.reshape(1, Cmid),
      w_second, b_second.reshape(1, Cout))


# ----------------------------------------------------------------------------
# Kernel B: grouped 3x3 conv (96 -> 12, groups=12) on one output row.
# ----------------------------------------------------------------------------
def _grouped_conv3x3_kernel(r0_ref, r1_ref, r2_ref, wt_ref, b_ref, o_ref, *, wo):
    rows = (r0_ref[0, 0], r1_ref[0, 0], r2_ref[0, 0])        # (Wp, 96) bf16
    acc = jnp.dot(rows[0][0:wo, :], wt_ref[0],
                  preferred_element_type=jnp.float32)
    for tap in range(1, 9):
        ky, kx = divmod(tap, 3)
        acc = acc + jnp.dot(rows[ky][kx:kx + wo, :], wt_ref[tap],
                            preferred_element_type=jnp.float32)
    o_ref[0, 0] = acc + b_ref[...]


def grouped_conv3x3(xpad_bf16, w_taps, bias):
    N, Hp, Wp, Cin = xpad_bf16.shape
    Ho, Wo = Hp - 2, Wp - 2
    Cout = w_taps.shape[-1]
    kern = functools.partial(_grouped_conv3x3_kernel, wo=Wo)
    return pl.pallas_call(
        kern,
        out_shape=jax.ShapeDtypeStruct((N, Ho, Wo, Cout), jnp.float32),
        grid_spec=pltpu.PrefetchScalarGridSpec(
            num_scalar_prefetch=0,
            grid=(N, Ho),
            in_specs=[
                pl.BlockSpec((1, 1, Wp, Cin), lambda n, h: (n, h, 0, 0)),
                pl.BlockSpec((1, 1, Wp, Cin), lambda n, h: (n, h + 1, 0, 0)),
                pl.BlockSpec((1, 1, Wp, Cin), lambda n, h: (n, h + 2, 0, 0)),
                pl.BlockSpec((9, Cin, Cout), lambda n, h: (0, 0, 0)),
                pl.BlockSpec((1, Cout), lambda n, h: (0, 0)),
            ],
            out_specs=pl.BlockSpec((1, 1, Wo, Cout), lambda n, h: (n, h, 0, 0)),
        ),
        compiler_params=pltpu.CompilerParams(
            dimension_semantics=("parallel", "parallel")),
    )(xpad_bf16, xpad_bf16, xpad_bf16, w_taps, bias.reshape(1, Cout))


# ----------------------------------------------------------------------------
# Kernel C1: attention energy accumulation, conv1 (1x1 + folded BN + ReLU) fused.
#   energy[n] = sum_over_HW_tiles  q_tile (D,t) @ relu(x_tile (t,C) @ W1 + b1)
# ----------------------------------------------------------------------------
def _acf_energy_kernel(q_ref, x_ref, w1_ref, b1_ref, e_ref):
    @pl.when(pl.program_id(1) == 0)
    def _():
        e_ref[...] = jnp.zeros_like(e_ref)

    feat = jnp.dot(x_ref[0].astype(jnp.bfloat16), w1_ref[...],
                   preferred_element_type=jnp.float32) + b1_ref[...]
    feat = jnp.maximum(feat, 0.0)                            # conv1 + BN + ReLU
    contrib = jnp.dot(q_ref[0].astype(jnp.bfloat16), feat.astype(jnp.bfloat16),
                      preferred_element_type=jnp.float32)    # (D, C)
    e_ref[0] = e_ref[0] + contrib


def acf_energy(q, xt, w1, b1, tile):
    N, D, HWp = q.shape
    C = xt.shape[-1]
    nT = HWp // tile
    return pl.pallas_call(
        _acf_energy_kernel,
        out_shape=jax.ShapeDtypeStruct((N, D, C), jnp.float32),
        grid_spec=pltpu.PrefetchScalarGridSpec(
            num_scalar_prefetch=0,
            grid=(N, nT),
            in_specs=[
                pl.BlockSpec((1, D, tile), lambda n, j: (n, 0, j)),
                pl.BlockSpec((1, tile, C), lambda n, j: (n, j, 0)),
                pl.BlockSpec((C, C), lambda n, j: (0, 0)),
                pl.BlockSpec((1, C), lambda n, j: (0, 0)),
            ],
            out_specs=pl.BlockSpec((1, D, C), lambda n, j: (n, 0, 0)),
        ),
        compiler_params=pltpu.CompilerParams(
            dimension_semantics=("parallel", "arbitrary")),
    )(q, xt, w1, b1.reshape(1, C))


# ----------------------------------------------------------------------------
# Kernel C2: softmax + algebraically-refactored epilogue + conv2 + residual.
#   aw = softmax(rowmax(E)-E) @ W2  (once per batch, kept in VMEM scratch)
#   out_tile = x_tile + qt_tile @ aw + b2
# ----------------------------------------------------------------------------
def _acf_output_kernel(e_ref, qt_ref, x_ref, w2_ref, b2_ref, o_ref, aw_ref):
    @pl.when(pl.program_id(1) == 0)
    def _():
        energy = e_ref[0]                                    # (D, C) f32
        e_new = jnp.max(energy, axis=-1, keepdims=True) - energy
        e_new = e_new - jnp.max(e_new, axis=-1, keepdims=True)
        p = jnp.exp(e_new)
        attn = p / jnp.sum(p, axis=-1, keepdims=True)        # (D, C)
        aw = jnp.dot(attn.astype(jnp.bfloat16), w2_ref[...],
                     preferred_element_type=jnp.float32)     # (D, C) tiny matmul
        aw_ref[...] = aw.astype(jnp.bfloat16)

    y = jnp.dot(qt_ref[0].astype(jnp.bfloat16), aw_ref[...],
                preferred_element_type=jnp.float32) + b2_ref[...]
    o_ref[0] = x_ref[0] + y                                  # residual in f32


def acf_output(energy, qt, xt, w2, b2, tile):
    N, D, C = energy.shape
    HWp = xt.shape[1]
    nT = HWp // tile
    return pl.pallas_call(
        _acf_output_kernel,
        out_shape=jax.ShapeDtypeStruct((N, HWp, C), jnp.float32),
        grid_spec=pltpu.PrefetchScalarGridSpec(
            num_scalar_prefetch=0,
            grid=(N, nT),
            in_specs=[
                pl.BlockSpec((1, D, C), lambda n, j: (n, 0, 0)),
                pl.BlockSpec((1, tile, D), lambda n, j: (n, j, 0)),
                pl.BlockSpec((1, tile, C), lambda n, j: (n, j, 0)),
                pl.BlockSpec((C, C), lambda n, j: (0, 0)),
                pl.BlockSpec((1, C), lambda n, j: (0, 0)),
            ],
            out_specs=pl.BlockSpec((1, tile, C), lambda n, j: (n, j, 0)),
            scratch_shapes=[pltpu.VMEM((D, C), jnp.bfloat16)],
        ),
        compiler_params=pltpu.CompilerParams(
            dimension_semantics=("parallel", "arbitrary")),
    )(energy, qt, xt, w2, b2.reshape(1, C))


# ----------------------------------------------------------------------------
# Plain-JAX glue: bilinear resize (PyTorch semantics), BN folding, params.
# ----------------------------------------------------------------------------
def _src_index(out_size, in_size, align_corners):
    d = jnp.arange(out_size, dtype=jnp.float32)
    if align_corners:
        src = jnp.zeros_like(d) if out_size == 1 else d * ((in_size - 1) / (out_size - 1))
    else:
        src = (d + 0.5) * (in_size / out_size) - 0.5
        src = jnp.maximum(src, 0.0)
    i0 = jnp.clip(jnp.floor(src).astype(jnp.int32), 0, in_size - 1)
    i1 = jnp.minimum(i0 + 1, in_size - 1)
    frac = src - i0.astype(jnp.float32)
    return i0, i1, frac


def resize_bilinear_nhwc(x, out_h, out_w, align_corners):
    """Matches torch.nn.functional.interpolate(mode='bilinear') on NHWC data."""
    N, H, W, C = x.shape
    h0, h1, lh = _src_index(out_h, H, align_corners)
    w0, w1, lw = _src_index(out_w, W, align_corners)
    x_h0 = x[:, h0, :, :]
    x_h1 = x[:, h1, :, :]
    lw_b = lw[None, None, :, None]
    top = x_h0[:, :, w0, :] * (1.0 - lw_b) + x_h0[:, :, w1, :] * lw_b
    bot = x_h1[:, :, w0, :] * (1.0 - lw_b) + x_h1[:, :, w1, :] * lw_b
    lh_b = lh[None, :, None, None]
    return top * (1.0 - lh_b) + bot * lh_b


def fold_bn(w, b, gamma, beta, mean, var, eps=1e-5):
    scale = gamma / jnp.sqrt(var + eps)      # broadcasts over the last (output) axis
    return w * scale, (b - mean) * scale + beta


def init_params(key, C=256):
    ks = jax.random.split(key, 9)
    Ch = C // 2
    p = {}
    # depth_output: conv3x3(C->C/2) [tap-major (9, C, Ch)] + BN + ReLU + conv1x1(C/2->96)
    p['w_do3'] = jax.random.normal(ks[0], (9, C, Ch), jnp.float32) * 0.02
    p['b_do3'] = jax.random.normal(ks[1], (Ch,), jnp.float32) * 0.02
    p['bn1_gamma'] = jnp.ones((Ch,), jnp.float32)
    p['bn1_beta'] = jnp.zeros((Ch,), jnp.float32)
    p['bn1_mean'] = jnp.zeros((Ch,), jnp.float32)
    p['bn1_var'] = jnp.ones((Ch,), jnp.float32)
    p['w_do1'] = jax.random.normal(ks[2], (Ch, 96), jnp.float32) * 0.02
    p['b_do1'] = jax.random.normal(ks[3], (96,), jnp.float32) * 0.02
    # depth_down: grouped conv3x3 96->12, groups=12 -> per-tap block-diagonal (9, 96, 12)
    wg = jax.random.normal(ks[4], (12, 8, 3, 3), jnp.float32) * 0.02   # torch (out, in/grp, kh, kw)
    p['b_dd'] = jax.random.normal(ks[5], (12,), jnp.float32) * 0.02
    wg_t = wg.transpose(2, 3, 0, 1).reshape(9, 12, 8)                  # (tap, group, cin_in_group)
    p['w_dd'] = jnp.einsum('tgc,gk->tgck', wg_t,
                           jnp.eye(12, dtype=jnp.float32)).reshape(9, 96, 12)
    # acf = dfe_module(256, 256): conv1 1x1 (no bias) + BN + ReLU, conv2 1x1 (bias)
    p['w_acf1'] = jax.random.normal(ks[6], (C, C), jnp.float32) * 0.02
    p['bn2_gamma'] = jnp.ones((C,), jnp.float32)
    p['bn2_beta'] = jnp.zeros((C,), jnp.float32)
    p['bn2_mean'] = jnp.zeros((C,), jnp.float32)
    p['bn2_var'] = jnp.ones((C,), jnp.float32)
    p['w_acf2'] = jax.random.normal(ks[7], (C, C), jnp.float32) * 0.02
    p['b_acf2'] = jax.random.normal(ks[8], (C,), jnp.float32) * 0.02
    return p


# ----------------------------------------------------------------------------
# Forward pass of DepthAwareFE
# ----------------------------------------------------------------------------
def depth_aware_fe(params, x):
    N, C, H, W = x.shape
    x_nhwc = jnp.transpose(x, (0, 2, 3, 1))                            # (N, H, W, C) f32

    # --- depth = depth_output(x): upsample x2 -> conv3x3 + BN + ReLU -> conv1x1 ---
    Hu, Wu = 2 * H, 2 * W
    up = resize_bilinear_nhwc(x_nhwc, Hu, Wu, align_corners=True)      # (N, Hu, Wu, C)
    up_pad = jnp.pad(up, ((0, 0), (1, 1), (1, 1), (0, 0))).astype(jnp.bfloat16)
    w3f, b3f = fold_bn(params['w_do3'], params['b_do3'],
                       params['bn1_gamma'], params['bn1_beta'],
                       params['bn1_mean'], params['bn1_var'])
    depth_nhwc = conv3x3_fused(up_pad, w3f.astype(jnp.bfloat16), b3f,
                               params['w_do1'].astype(jnp.bfloat16),
                               params['b_do1'])                        # (N, Hu, Wu, 96) f32
    depth = jnp.transpose(depth_nhwc, (0, 3, 1, 2))                    # (N, 96, Hu, Wu)

    # --- depth_guide = depth_down(interpolate(depth, (H, W))) ---
    dg = resize_bilinear_nhwc(depth_nhwc, H, W, align_corners=False)   # (N, H, W, 96)
    dg_pad = jnp.pad(dg, ((0, 0), (1, 1), (1, 1), (0, 0))).astype(jnp.bfloat16)
    dg_nhwc = grouped_conv3x3(dg_pad, params['w_dd'].astype(jnp.bfloat16),
                              params['b_dd'])                          # (N, H, W, 12) f32
    depth_guide = jnp.transpose(dg_nhwc, (0, 3, 1, 2))                 # (N, 12, H, W)

    # --- x = x + acf(x, depth_guide) ---
    HW = H * W
    tile = 512 if HW > 512 else ((HW + 7) // 8) * 8
    HWp = ((HW + tile - 1) // tile) * tile
    xt = x_nhwc.reshape(N, HW, C)
    qt = dg_nhwc.reshape(N, HW, 12)
    if HWp != HW:
        pad = ((0, 0), (0, HWp - HW), (0, 0))
        xt = jnp.pad(xt, pad)
        qt = jnp.pad(qt, pad)                                          # zero q => zero energy
    q = jnp.transpose(qt, (0, 2, 1))                                   # (N, 12, HWp)

    w1f, b1f = fold_bn(params['w_acf1'], jnp.zeros((C,), jnp.float32),
                       params['bn2_gamma'], params['bn2_beta'],
                       params['bn2_mean'], params['bn2_var'])
    energy = acf_energy(q, xt, w1f.astype(jnp.bfloat16), b1f, tile)    # (N, 12, C)
    out_pix = acf_output(energy, qt, xt,
                         params['w_acf2'].astype(jnp.bfloat16),
                         params['b_acf2'], tile)                       # (N, HWp, C)
    x_new = out_pix[:, :HW, :].reshape(N, H, W, C).transpose(0, 3, 1, 2)

    return depth, depth_guide, x_new


if __name__ == "__main__":
    key = jax.random.PRNGKey(0)
    kp, kx = jax.random.split(key)

    # dfe_module(256, 256) is hard-coded in the reference, so C must be 256.
    N, C, H, W = 2, 256, 8, 8
    params = init_params(kp, C)
    x = jax.random.normal(kx, (N, C, H, W), jnp.float32)

    fwd = jax.jit(functools.partial(depth_aware_fe, params))
    depth, depth_guide, x_out = fwd(x)
    jax.block_until_ready((depth, depth_guide, x_out))

    assert depth.shape == (N, 96, 2 * H, 2 * W)
    assert depth_guide.shape == (N, 12, H, W)
    assert x_out.shape == (N, C, H, W)
    assert jnp.isfinite(depth).all()
    assert jnp.isfinite(depth_guide).all()
    assert jnp.isfinite(x_out).all()

    print("KERNEL_OK")
</pallas_src>

<mosaic_0001>
module attributes {stable_mosaic.version = 11 : i64} {
  func.func @_conv3x3_fused_kernel(%arg0: i32, %arg1: i32, %arg2: memref<1x1x18x256xbf16, #tpu.memory_space<vmem>>, %arg3: memref<1x1x18x256xbf16, #tpu.memory_space<vmem>>, %arg4: memref<1x1x18x256xbf16, #tpu.memory_space<vmem>>, %arg5: memref<9x256x128xbf16, #tpu.memory_space<vmem>>, %arg6: memref<1x128xf32, #tpu.memory_space<vmem>>, %arg7: memref<128x96xbf16, #tpu.memory_space<vmem>>, %arg8: memref<1x96xf32, #tpu.memory_space<vmem>>, %arg9: memref<1x1x16x96xf32, #tpu.memory_space<vmem>>) attributes {dimension_semantics = [#tpu.dimension_semantics<parallel>, #tpu.dimension_semantics<parallel>], iteration_bounds = array<i64: 2, 16>, scalar_prefetch = 0 : i64, scratch_operands = 0 : i64, tpu.core_type = #tpu.core_type<tc>, window_params = [{transform_indices = @transform_0, window_bounds = array<i64: 1, 1, 18, 256>}, {transform_indices = @transform_1, window_bounds = array<i64: 1, 1, 18, 256>}, {transform_indices = @transform_2, window_bounds = array<i64: 1, 1, 18, 256>}, {pipeline_mode = #tpu.pipeline_mode<synchronous>, transform_indices = @transform_3, window_bounds = array<i64: 9, 256, 128>}, {pipeline_mode = #tpu.pipeline_mode<synchronous>, transform_indices = @transform_4, window_bounds = array<i64: 1, 128>}, {pipeline_mode = #tpu.pipeline_mode<synchronous>, transform_indices = @transform_5, window_bounds = array<i64: 128, 96>}, {pipeline_mode = #tpu.pipeline_mode<synchronous>, transform_indices = @transform_6, window_bounds = array<i64: 1, 96>}, {transform_indices = @transform_7, window_bounds = array<i64: 1, 1, 16, 96>}]} {
    %c0 = arith.constant 0 : index
    %c0_0 = arith.constant 0 : index
    %c0_1 = arith.constant 0 : index
    %c0_2 = arith.constant 0 : index
    %0 = vector.load %arg2[%c0, %c0_0, %c0_1, %c0_2] : memref<1x1x18x256xbf16, #tpu.memory_space<vmem>>, vector<1x1x18x256xbf16>
    %1 = vector.shape_cast %0 : vector<1x1x18x256xbf16> to vector<18x256xbf16>
    %c0_3 = arith.constant 0 : index
    %c0_4 = arith.constant 0 : index
    %c0_5 = arith.constant 0 : index
    %c0_6 = arith.constant 0 : index
    %2 = vector.load %arg3[%c0_3, %c0_4, %c0_5, %c0_6] : memref<1x1x18x256xbf16, #tpu.memory_space<vmem>>, vector<1x1x18x256xbf16>
    %3 = vector.shape_cast %2 : vector<1x1x18x256xbf16> to vector<18x256xbf16>
    %c0_7 = arith.constant 0 : index
    %c0_8 = arith.constant 0 : index
    %c0_9 = arith.constant 0 : index
    %c0_10 = arith.constant 0 : index
    %4 = vector.load %arg4[%c0_7, %c0_8, %c0_9, %c0_10] : memref<1x1x18x256xbf16, #tpu.memory_space<vmem>>, vector<1x1x18x256xbf16>
    %5 = vector.shape_cast %4 : vector<1x1x18x256xbf16> to vector<18x256xbf16>
    %6 = vector.extract_strided_slice %1 {offsets = [0, 0], sizes = [16, 256], strides = [1, 1]} : vector<18x256xbf16> to vector<16x256xbf16>
    %c0_11 = arith.constant 0 : index
    %c0_12 = arith.constant 0 : index
    %c0_13 = arith.constant 0 : index
    %7 = vector.load %arg5[%c0_11, %c0_12, %c0_13] : memref<9x256x128xbf16, #tpu.memory_space<vmem>>, vector<1x256x128xbf16>
    %8 = vector.shape_cast %7 : vector<1x256x128xbf16> to vector<256x128xbf16>
    %cst = arith.constant dense<0.000000e+00> : vector<16x128xf32>
    %9 = tpu.matmul %6, %8, %cst {dimension_numbers = #tpu.dot_dimension_numbers<[1], [0], [0], [1], [0, 0, 1, 1], [], []>} : vector<16x256xbf16>, vector<256x128xbf16>, vector<16x128xf32> -> vector<16x128xf32>
    %10 = vector.extract_strided_slice %1 {offsets = [1, 0], sizes = [16, 256], strides = [1, 1]} : vector<18x256xbf16> to vector<16x256xbf16>
    %c1 = arith.constant 1 : index
    %c0_14 = arith.constant 0 : index
    %c0_15 = arith.constant 0 : index
    %11 = vector.load %arg5[%c1, %c0_14, %c0_15] : memref<9x256x128xbf16, #tpu.memory_space<vmem>>, vector<1x256x128xbf16>
    %12 = vector.shape_cast %11 : vector<1x256x128xbf16> to vector<256x128xbf16>
    %cst_16 = arith.constant dense<0.000000e+00> : vector<16x128xf32>
    %13 = tpu.matmul %10, %12, %cst_16 {dimension_numbers = #tpu.dot_dimension_numbers<[1], [0], [0], [1], [0, 0, 1, 1], [], []>} : vector<16x256xbf16>, vector<256x128xbf16>, vector<16x128xf32> -> vector<16x128xf32>
    %14 = arith.addf %9, %13 : vector<16x128xf32>
    %15 = vector.extract_strided_slice %1 {offsets = [2, 0], sizes = [16, 256], strides = [1, 1]} : vector<18x256xbf16> to vector<16x256xbf16>
    %c2 = arith.constant 2 : index
    %c0_17 = arith.constant 0 : index
    %c0_18 = arith.constant 0 : index
    %16 = vector.load %arg5[%c2, %c0_17, %c0_18] : memref<9x256x128xbf16, #tpu.memory_space<vmem>>, vector<1x256x128xbf16>
    %17 = vector.shape_cast %16 : vector<1x256x128xbf16> to vector<256x128xbf16>
    %cst_19 = arith.constant dense<0.000000e+00> : vector<16x128xf32>
    %18 = tpu.matmul %15, %17, %cst_19 {dimension_numbers = #tpu.dot_dimension_numbers<[1], [0], [0], [1], [0, 0, 1, 1], [], []>} : vector<16x256xbf16>, vector<256x128xbf16>, vector<16x128xf32> -> vector<16x128xf32>
    %19 = arith.addf %14, %18 : vector<16x128xf32>
    %20 = vector.extract_strided_slice %3 {offsets = [0, 0], sizes = [16, 256], strides = [1, 1]} : vector<18x256xbf16> to vector<16x256xbf16>
    %c3 = arith.constant 3 : index
    %c0_20 = arith.constant 0 : index
    %c0_21 = arith.constant 0 : index
    %21 = vector.load %arg5[%c3, %c0_20, %c0_21] : memref<9x256x128xbf16, #tpu.memory_space<vmem>>, vector<1x256x128xbf16>
    %22 = vector.shape_cast %21 : vector<1x256x128xbf16> to vector<256x128xbf16>
    %cst_22 = arith.constant dense<0.000000e+00> : vector<16x128xf32>
    %23 = tpu.matmul %20, %22, %cst_22 {dimension_numbers = #tpu.dot_dimension_numbers<[1], [0], [0], [1], [0, 0, 1, 1], [], []>} : vector<16x256xbf16>, vector<256x128xbf16>, vector<16x128xf32> -> vector<16x128xf32>
    %24 = arith.addf %19, %23 : vector<16x128xf32>
    %25 = vector.extract_strided_slice %3 {offsets = [1, 0], sizes = [16, 256], strides = [1, 1]} : vector<18x256xbf16> to vector<16x256xbf16>
    %c4 = arith.constant 4 : index
    %c0_23 = arith.constant 0 : index
    %c0_24 = arith.constant 0 : index
    %26 = vector.load %arg5[%c4, %c0_23, %c0_24] : memref<9x256x128xbf16, #tpu.memory_space<vmem>>, vector<1x256x128xbf16>
    %27 = vector.shape_cast %26 : vector<1x256x128xbf16> to vector<256x128xbf16>
    %cst_25 = arith.constant dense<0.000000e+00> : vector<16x128xf32>
    %28 = tpu.matmul %25, %27, %cst_25 {dimension_numbers = #tpu.dot_dimension_numbers<[1], [0], [0], [1], [0, 0, 1, 1], [], []>} : vector<16x256xbf16>, vector<256x128xbf16>, vector<16x128xf32> -> vector<16x128xf32>
    %29 = arith.addf %24, %28 : vector<16x128xf32>
    %30 = vector.extract_strided_slice %3 {offsets = [2, 0], sizes = [16, 256], strides = [1, 1]} : vector<18x256xbf16> to vector<16x256xbf16>
    %c5 = arith.constant 5 : index
    %c0_26 = arith.constant 0 : index
    %c0_27 = arith.constant 0 : index
    %31 = vector.load %arg5[%c5, %c0_26, %c0_27] : memref<9x256x128xbf16, #tpu.memory_space<vmem>>, vector<1x256x128xbf16>
    %32 = vector.shape_cast %31 : vector<1x256x128xbf16> to vector<256x128xbf16>
    %cst_28 = arith.constant dense<0.000000e+00> : vector<16x128xf32>
    %33 = tpu.matmul %30, %32, %cst_28 {dimension_numbers = #tpu.dot_dimension_numbers<[1], [0], [0], [1], [0, 0, 1, 1], [], []>} : vector<16x256xbf16>, vector<256x128xbf16>, vector<16x128xf32> -> vector<16x128xf32>
    %34 = arith.addf %29, %33 : vector<16x128xf32>
    %35 = vector.extract_strided_slice %5 {offsets = [0, 0], sizes = [16, 256], strides = [1, 1]} : vector<18x256xbf16> to vector<16x256xbf16>
    %c6 = arith.constant 6 : index
    %c0_29 = arith.constant 0 : index
    %c0_30 = arith.constant 0 : index
    %36 = vector.load %arg5[%c6, %c0_29, %c0_30] : memref<9x256x128xbf16, #tpu.memory_space<vmem>>, vector<1x256x128xbf16>
    %37 = vector.shape_cast %36 : vector<1x256x128xbf16> to vector<256x128xbf16>
    %cst_31 = arith.constant dense<0.000000e+00> : vector<16x128xf32>
    %38 = tpu.matmul %35, %37, %cst_31 {dimension_numbers = #tpu.dot_dimension_numbers<[1], [0], [0], [1], [0, 0, 1, 1], [], []>} : vector<16x256xbf16>, vector<256x128xbf16>, vector<16x128xf32> -> vector<16x128xf32>
    %39 = arith.addf %34, %38 : vector<16x128xf32>
    %40 = vector.extract_strided_slice %5 {offsets = [1, 0], sizes = [16, 256], strides = [1, 1]} : vector<18x256xbf16> to vector<16x256xbf16>
    %c7 = arith.constant 7 : index
    %c0_32 = arith.constant 0 : index
    %c0_33 = arith.constant 0 : index
    %41 = vector.load %arg5[%c7, %c0_32, %c0_33] : memref<9x256x128xbf16, #tpu.memory_space<vmem>>, vector<1x256x128xbf16>
    %42 = vector.shape_cast %41 : vector<1x256x128xbf16> to vector<256x128xbf16>
    %cst_34 = arith.constant dense<0.000000e+00> : vector<16x128xf32>
    %43 = tpu.matmul %40, %42, %cst_34 {dimension_numbers = #tpu.dot_dimension_numbers<[1], [0], [0], [1], [0, 0, 1, 1], [], []>} : vector<16x256xbf16>, vector<256x128xbf16>, vector<16x128xf32> -> vector<16x128xf32>
    %44 = arith.addf %39, %43 : vector<16x128xf32>
    %45 = vector.extract_strided_slice %5 {offsets = [2, 0], sizes = [16, 256], strides = [1, 1]} : vector<18x256xbf16> to vector<16x256xbf16>
    %c8 = arith.constant 8 : index
    %c0_35 = arith.constant 0 : index
    %c0_36 = arith.constant 0 : index
    %46 = vector.load %arg5[%c8, %c0_35, %c0_36] : memref<9x256x128xbf16, #tpu.memory_space<vmem>>, vector<1x256x128xbf16>
    %47 = vector.shape_cast %46 : vector<1x256x128xbf16> to vector<256x128xbf16>
    %cst_37 = arith.constant dense<0.000000e+00> : vector<16x128xf32>
    %48 = tpu.matmul %45, %47, %cst_37 {dimension_numbers = #tpu.dot_dimension_numbers<[1], [0], [0], [1], [0, 0, 1, 1], [], []>} : vector<16x256xbf16>, vector<256x128xbf16>, vector<16x128xf32> -> vector<16x128xf32>
    %49 = arith.addf %44, %48 : vector<16x128xf32>
    %c0_38 = arith.constant 0 : index
    %c0_39 = arith.constant 0 : index
    %50 = vector.load %arg6[%c0_38, %c0_39] : memref<1x128xf32, #tpu.memory_space<vmem>>, vector<1x128xf32>
    %51 = vector.broadcast %50 : vector<1x128xf32> to vector<16x128xf32>
    %52 = arith.addf %49, %51 : vector<16x128xf32>
    %cst_40 = arith.constant 0.000000e+00 : f32
    %53 = vector.broadcast %cst_40 : f32 to vector<16x128xf32>
    %54 = arith.maximumf %52, %53 : vector<16x128xf32>
    %55 = arith.truncf %54 : vector<16x128xf32> to vector<16x128xbf16>
    %c0_41 = arith.constant 0 : index
    %c0_42 = arith.constant 0 : index
    %56 = vector.load %arg7[%c0_41, %c0_42] : memref<128x96xbf16, #tpu.memory_space<vmem>>, vector<128x96xbf16>
    %cst_43 = arith.constant dense<0.000000e+00> : vector<16x96xf32>
    %57 = tpu.matmul %55, %56, %cst_43 {dimension_numbers = #tpu.dot_dimension_numbers<[1], [0], [0], [1], [0, 0, 1, 1], [], []>} : vector<16x128xbf16>, vector<128x96xbf16>, vector<16x96xf32> -> vector<16x96xf32>
    %c0_44 = arith.constant 0 : index
    %c0_45 = arith.constant 0 : index
    %58 = vector.load %arg8[%c0_44, %c0_45] : memref<1x96xf32, #tpu.memory_space<vmem>>, vector<1x96xf32>
    %59 = vector.broadcast %58 : vector<1x96xf32> to vector<16x96xf32>
    %60 = arith.addf %57, %59 : vector<16x96xf32>
    %c0_46 = arith.constant 0 : index
    %c0_47 = arith.constant 0 : index
    %c0_48 = arith.constant 0 : index
    %c0_49 = arith.constant 0 : index
    %61 = vector.load %arg9[%c0_46, %c0_47, %c0_48, %c0_49] : memref<1x1x16x96xf32, #tpu.memory_space<vmem>>, vector<1x1x16x96xf32>
    %62 = vector.shape_cast %61 : vector<1x1x16x96xf32> to vector<16x96xf32>
    %63 = vector.shape_cast %60 : vector<16x96xf32> to vector<1x1x16x96xf32>
    tpu.vector_store %arg9[%c0_46, %c0_47, %c0_48, %c0_49], %63 {strides = array<i32>} : memref<1x1x16x96xf32, #tpu.memory_space<vmem>>, vector<1x1x16x96xf32>,
    return
  }
  func.func @transform_0(%arg0: i32, %arg1: i32) -> (i32, i32, i32, i32) {
    %c0_i32 = arith.constant 0 : i32
    %c0_i32_0 = arith.constant 0 : i32
    %c0_i32_1 = arith.constant 0 : i32
    return %arg0, %arg1, %c0_i32, %c0_i32_0 : i32, i32, i32, i32
  }
  func.func @transform_1(%arg0: i32, %arg1: i32) -> (i32, i32, i32, i32) {
    %c1_i32 = arith.constant 1 : i32
    %0 = arith.addi %arg1, %c1_i32 : i32
    %c0_i32 = arith.constant 0 : i32
    %c0_i32_0 = arith.constant 0 : i32
    %c0_i32_1 = arith.constant 0 : i32
    return %arg0, %0, %c0_i32, %c0_i32_0 : i32, i32, i32, i32
  }
  func.func @transform_2(%arg0: i32, %arg1: i32) -> (i32, i32, i32, i32) {
    %c2_i32 = arith.constant 2 : i32
    %0 = arith.addi %arg1, %c2_i32 : i32
    %c0_i32 = arith.constant 0 : i32
    %c0_i32_0 = arith.constant 0 : i32
    %c0_i32_1 = arith.constant 0 : i32
    return %arg0, %0, %c0_i32, %c0_i32_0 : i32, i32, i32, i32
  }
  func.func @transform_3(%arg0: i32, %arg1: i32) -> (i32, i32, i32) {
    %c0_i32 = arith.constant 0 : i32
    %c0_i32_0 = arith.constant 0 : i32
    %c0_i32_1 = arith.constant 0 : i32
    %c0_i32_2 = arith.constant 0 : i32
    return %c0_i32, %c0_i32_0, %c0_i32_1 : i32, i32, i32
  }
  func.func @transform_4(%arg0: i32, %arg1: i32) -> (i32, i32) {
    %c0_i32 = arith.constant 0 : i32
    %c0_i32_0 = arith.constant 0 : i32
    %c0_i32_1 = arith.constant 0 : i32
    return %c0_i32, %c0_i32_0 : i32, i32
  }
  func.func @transform_5(%arg0: i32, %arg1: i32) -> (i32, i32) {
    %c0_i32 = arith.constant 0 : i32
    %c0_i32_0 = arith.constant 0 : i32
    %c0_i32_1 = arith.constant 0 : i32
    return %c0_i32, %c0_i32_0 : i32, i32
  }
  func.func @transform_6(%arg0: i32, %arg1: i32) -> (i32, i32) {
    %c0_i32 = arith.constant 0 : i32
    %c0_i32_0 = arith.constant 0 : i32
    %c0_i32_1 = arith.constant 0 : i32
    return %c0_i32, %c0_i32_0 : i32, i32
  }
  func.func @transform_7(%arg0: i32, %arg1: i32) -> (i32, i32, i32, i32) {
    %c0_i32 = arith.constant 0 : i32
    %c0_i32_0 = arith.constant 0 : i32
    %c0_i32_1 = arith.constant 0 : i32
    return %arg0, %arg1, %c0_i32, %c0_i32_0 : i32, i32, i32, i32
  }
}

module attributes {stable_mosaic.version = 11 : i64} {
  func.func @_grouped_conv3x3_kernel(%arg0: i32, %arg1: i32, %arg2: memref<1x1x10x96xbf16, #tpu.memory_space<vmem>>, %arg3: memref<1x1x10x96xbf16, #tpu.memory_space<vmem>>, %arg4: memref<1x1x10x96xbf16, #tpu.memory_space<vmem>>, %arg5: memref<9x96x12xbf16, #tpu.memory_space<vmem>>, %arg6: memref<1x12xf32, #tpu.memory_space<vmem>>, %arg7: memref<1x1x8x12xf32, #tpu.memory_space<vmem>>) attributes {dimension_semantics = [#tpu.dimension_semantics<parallel>, #tpu.dimension_semantics<parallel>], iteration_bounds = array<i64: 2, 8>, scalar_prefetch = 0 : i64, scratch_operands = 0 : i64, tpu.core_type = #tpu.core_type<tc>, window_params = [{transform_indices = @transform_0, window_bounds = array<i64: 1, 1, 10, 96>}, {transform_indices = @transform_1, window_bounds = array<i64: 1, 1, 10, 96>}, {transform_indices = @transform_2, window_bounds = array<i64: 1, 1, 10, 96>}, {pipeline_mode = #tpu.pipeline_mode<synchronous>, transform_indices = @transform_3, window_bounds = array<i64: 9, 96, 12>}, {pipeline_mode = #tpu.pipeline_mode<synchronous>, transform_indices = @transform_4, window_bounds = array<i64: 1, 12>}, {transform_indices = @transform_5, window_bounds = array<i64: 1, 1, 8, 12>}]} {
    %c0 = arith.constant 0 : index
    %c0_0 = arith.constant 0 : index
    %c0_1 = arith.constant 0 : index
    %c0_2 = arith.constant 0 : index
    %0 = vector.load %arg2[%c0, %c0_0, %c0_1, %c0_2] : memref<1x1x10x96xbf16, #tpu.memory_space<vmem>>, vector<1x1x10x96xbf16>
    %1 = vector.shape_cast %0 : vector<1x1x10x96xbf16> to vector<10x96xbf16>
    %c0_3 = arith.constant 0 : index
    %c0_4 = arith.constant 0 : index
    %c0_5 = arith.constant 0 : index
    %c0_6 = arith.constant 0 : index
    %2 = vector.load %arg3[%c0_3, %c0_4, %c0_5, %c0_6] : memref<1x1x10x96xbf16, #tpu.memory_space<vmem>>, vector<1x1x10x96xbf16>
    %3 = vector.shape_cast %2 : vector<1x1x10x96xbf16> to vector<10x96xbf16>
    %c0_7 = arith.constant 0 : index
    %c0_8 = arith.constant 0 : index
    %c0_9 = arith.constant 0 : index
    %c0_10 = arith.constant 0 : index
    %4 = vector.load %arg4[%c0_7, %c0_8, %c0_9, %c0_10] : memref<1x1x10x96xbf16, #tpu.memory_space<vmem>>, vector<1x1x10x96xbf16>
    %5 = vector.shape_cast %4 : vector<1x1x10x96xbf16> to vector<10x96xbf16>
    %6 = vector.extract_strided_slice %1 {offsets = [0, 0], sizes = [8, 96], strides = [1, 1]} : vector<10x96xbf16> to vector<8x96xbf16>
    %c0_11 = arith.constant 0 : index
    %c0_12 = arith.constant 0 : index
    %c0_13 = arith.constant 0 : index
    %7 = vector.load %arg5[%c0_11, %c0_12, %c0_13] : memref<9x96x12xbf16, #tpu.memory_space<vmem>>, vector<1x96x12xbf16>
    %8 = vector.shape_cast %7 : vector<1x96x12xbf16> to vector<96x12xbf16>
    %cst = arith.constant dense<0.000000e+00> : vector<8x12xf32>
    %9 = tpu.matmul %6, %8, %cst {dimension_numbers = #tpu.dot_dimension_numbers<[1], [0], [0], [1], [0, 0, 1, 1], [], []>} : vector<8x96xbf16>, vector<96x12xbf16>, vector<8x12xf32> -> vector<8x12xf32>
    %10 = vector.extract_strided_slice %1 {offsets = [1, 0], sizes = [8, 96], strides = [1, 1]} : vector<10x96xbf16> to vector<8x96xbf16>
    %c1 = arith.constant 1 : index
    %c0_14 = arith.constant 0 : index
    %c0_15 = arith.constant 0 : index
    %11 = vector.load %arg5[%c1, %c0_14, %c0_15] : memref<9x96x12xbf16, #tpu.memory_space<vmem>>, vector<1x96x12xbf16>
    %12 = vector.shape_cast %11 : vector<1x96x12xbf16> to vector<96x12xbf16>
    %cst_16 = arith.constant dense<0.000000e+00> : vector<8x12xf32>
    %13 = tpu.matmul %10, %12, %cst_16 {dimension_numbers = #tpu.dot_dimension_numbers<[1], [0], [0], [1], [0, 0, 1, 1], [], []>} : vector<8x96xbf16>, vector<96x12xbf16>, vector<8x12xf32> -> vector<8x12xf32>
    %14 = arith.addf %9, %13 : vector<8x12xf32>
    %15 = vector.extract_strided_slice %1 {offsets = [2, 0], sizes = [8, 96], strides = [1, 1]} : vector<10x96xbf16> to vector<8x96xbf16>
    %c2 = arith.constant 2 : index
    %c0_17 = arith.constant 0 : index
    %c0_18 = arith.constant 0 : index
    %16 = vector.load %arg5[%c2, %c0_17, %c0_18] : memref<9x96x12xbf16, #tpu.memory_space<vmem>>, vector<1x96x12xbf16>
    %17 = vector.shape_cast %16 : vector<1x96x12xbf16> to vector<96x12xbf16>
    %cst_19 = arith.constant dense<0.000000e+00> : vector<8x12xf32>
    %18 = tpu.matmul %15, %17, %cst_19 {dimension_numbers = #tpu.dot_dimension_numbers<[1], [0], [0], [1], [0, 0, 1, 1], [], []>} : vector<8x96xbf16>, vector<96x12xbf16>, vector<8x12xf32> -> vector<8x12xf32>
    %19 = arith.addf %14, %18 : vector<8x12xf32>
    %20 = vector.extract_strided_slice %3 {offsets = [0, 0], sizes = [8, 96], strides = [1, 1]} : vector<10x96xbf16> to vector<8x96xbf16>
    %c3 = arith.constant 3 : index
    %c0_20 = arith.constant 0 : index
    %c0_21 = arith.constant 0 : index
    %21 = vector.load %arg5[%c3, %c0_20, %c0_21] : memref<9x96x12xbf16, #tpu.memory_space<vmem>>, vector<1x96x12xbf16>
    %22 = vector.shape_cast %21 : vector<1x96x12xbf16> to vector<96x12xbf16>
    %cst_22 = arith.constant dense<0.000000e+00> : vector<8x12xf32>
    %23 = tpu.matmul %20, %22, %cst_22 {dimension_numbers = #tpu.dot_dimension_numbers<[1], [0], [0], [1], [0, 0, 1, 1], [], []>} : vector<8x96xbf16>, vector<96x12xbf16>, vector<8x12xf32> -> vector<8x12xf32>
    %24 = arith.addf %19, %23 : vector<8x12xf32>
    %25 = vector.extract_strided_slice %3 {offsets = [1, 0], sizes = [8, 96], strides = [1, 1]} : vector<10x96xbf16> to vector<8x96xbf16>
    %c4 = arith.constant 4 : index
    %c0_23 = arith.constant 0 : index
    %c0_24 = arith.constant 0 : index
    %26 = vector.load %arg5[%c4, %c0_23, %c0_24] : memref<9x96x12xbf16, #tpu.memory_space<vmem>>, vector<1x96x12xbf16>
    %27 = vector.shape_cast %26 : vector<1x96x12xbf16> to vector<96x12xbf16>
    %cst_25 = arith.constant dense<0.000000e+00> : vector<8x12xf32>
    %28 = tpu.matmul %25, %27, %cst_25 {dimension_numbers = #tpu.dot_dimension_numbers<[1], [0], [0], [1], [0, 0, 1, 1], [], []>} : vector<8x96xbf16>, vector<96x12xbf16>, vector<8x12xf32> -> vector<8x12xf32>
    %29 = arith.addf %24, %28 : vector<8x12xf32>
    %30 = vector.extract_strided_slice %3 {offsets = [2, 0], sizes = [8, 96], strides = [1, 1]} : vector<10x96xbf16> to vector<8x96xbf16>
    %c5 = arith.constant 5 : index
    %c0_26 = arith.constant 0 : index
    %c0_27 = arith.constant 0 : index
    %31 = vector.load %arg5[%c5, %c0_26, %c0_27] : memref<9x96x12xbf16, #tpu.memory_space<vmem>>, vector<1x96x12xbf16>
    %32 = vector.shape_cast %31 : vector<1x96x12xbf16> to vector<96x12xbf16>
    %cst_28 = arith.constant dense<0.000000e+00> : vector<8x12xf32>
    %33 = tpu.matmul %30, %32, %cst_28 {dimension_numbers = #tpu.dot_dimension_numbers<[1], [0], [0], [1], [0, 0, 1, 1], [], []>} : vector<8x96xbf16>, vector<96x12xbf16>, vector<8x12xf32> -> vector<8x12xf32>
    %34 = arith.addf %29, %33 : vector<8x12xf32>
    %35 = vector.extract_strided_slice %5 {offsets = [0, 0], sizes = [8, 96], strides = [1, 1]} : vector<10x96xbf16> to vector<8x96xbf16>
    %c6 = arith.constant 6 : index
    %c0_29 = arith.constant 0 : index
    %c0_30 = arith.constant 0 : index
    %36 = vector.load %arg5[%c6, %c0_29, %c0_30] : memref<9x96x12xbf16, #tpu.memory_space<vmem>>, vector<1x96x12xbf16>
    %37 = vector.shape_cast %36 : vector<1x96x12xbf16> to vector<96x12xbf16>
    %cst_31 = arith.constant dense<0.000000e+00> : vector<8x12xf32>
    %38 = tpu.matmul %35, %37, %cst_31 {dimension_numbers = #tpu.dot_dimension_numbers<[1], [0], [0], [1], [0, 0, 1, 1], [], []>} : vector<8x96xbf16>, vector<96x12xbf16>, vector<8x12xf32> -> vector<8x12xf32>
    %39 = arith.addf %34, %38 : vector<8x12xf32>
    %40 = vector.extract_strided_slice %5 {offsets = [1, 0], sizes = [8, 96], strides = [1, 1]} : vector<10x96xbf16> to vector<8x96xbf16>
    %c7 = arith.constant 7 : index
    %c0_32 = arith.constant 0 : index
    %c0_33 = arith.constant 0 : index
    %41 = vector.load %arg5[%c7, %c0_32, %c0_33] : memref<9x96x12xbf16, #tpu.memory_space<vmem>>, vector<1x96x12xbf16>
    %42 = vector.shape_cast %41 : vector<1x96x12xbf16> to vector<96x12xbf16>
    %cst_34 = arith.constant dense<0.000000e+00> : vector<8x12xf32>
    %43 = tpu.matmul %40, %42, %cst_34 {dimension_numbers = #tpu.dot_dimension_numbers<[1], [0], [0], [1], [0, 0, 1, 1], [], []>} : vector<8x96xbf16>, vector<96x12xbf16>, vector<8x12xf32> -> vector<8x12xf32>
    %44 = arith.addf %39, %43 : vector<8x12xf32>
    %45 = vector.extract_strided_slice %5 {offsets = [2, 0], sizes = [8, 96], strides = [1, 1]} : vector<10x96xbf16> to vector<8x96xbf16>
    %c8 = arith.constant 8 : index
    %c0_35 = arith.constant 0 : index
    %c0_36 = arith.constant 0 : index
    %46 = vector.load %arg5[%c8, %c0_35, %c0_36] : memref<9x96x12xbf16, #tpu.memory_space<vmem>>, vector<1x96x12xbf16>
    %47 = vector.shape_cast %46 : vector<1x96x12xbf16> to vector<96x12xbf16>
    %cst_37 = arith.constant dense<0.000000e+00> : vector<8x12xf32>
    %48 = tpu.matmul %45, %47, %cst_37 {dimension_numbers = #tpu.dot_dimension_numbers<[1], [0], [0], [1], [0, 0, 1, 1], [], []>} : vector<8x96xbf16>, vector<96x12xbf16>, vector<8x12xf32> -> vector<8x12xf32>
    %49 = arith.addf %44, %48 : vector<8x12xf32>
    %c0_38 = arith.constant 0 : index
    %c0_39 = arith.constant 0 : index
    %50 = vector.load %arg6[%c0_38, %c0_39] : memref<1x12xf32, #tpu.memory_space<vmem>>, vector<1x12xf32>
    %51 = vector.broadcast %50 : vector<1x12xf32> to vector<8x12xf32>
    %52 = arith.addf %49, %51 : vector<8x12xf32>
    %c0_40 = arith.constant 0 : index
    %c0_41 = arith.constant 0 : index
    %c0_42 = arith.constant 0 : index
    %c0_43 = arith.constant 0 : index
    %53 = vector.load %arg7[%c0_40, %c0_41, %c0_42, %c0_43] : memref<1x1x8x12xf32, #tpu.memory_space<vmem>>, vector<1x1x8x12xf32>
    %54 = vector.shape_cast %53 : vector<1x1x8x12xf32> to vector<8x12xf32>
    %55 = vector.shape_cast %52 : vector<8x12xf32> to vector<1x1x8x12xf32>
    tpu.vector_store %arg7[%c0_40, %c0_41, %c0_42, %c0_43], %55 {strides = array<i32>} : memref<1x1x8x12xf32, #tpu.memory_space<vmem>>, vector<1x1x8x12xf32>,
    return
  }
  func.func @transform_0(%arg0: i32, %arg1: i32) -> (i32, i32, i32, i32) {
    %c0_i32 = arith.constant 0 : i32
    %c0_i32_0 = arith.constant 0 : i32
    %c0_i32_1 = arith.constant 0 : i32
    return %arg0, %arg1, %c0_i32, %c0_i32_0 : i32, i32, i32, i32
  }
  func.func @transform_1(%arg0: i32, %arg1: i32) -> (i32, i32, i32, i32) {
    %c1_i32 = arith.constant 1 : i32
    %0 = arith.addi %arg1, %c1_i32 : i32
    %c0_i32 = arith.constant 0 : i32
    %c0_i32_0 = arith.constant 0 : i32
    %c0_i32_1 = arith.constant 0 : i32
    return %arg0, %0, %c0_i32, %c0_i32_0 : i32, i32, i32, i32
  }
  func.func @transform_2(%arg0: i32, %arg1: i32) -> (i32, i32, i32, i32) {
    %c2_i32 = arith.constant 2 : i32
    %0 = arith.addi %arg1, %c2_i32 : i32
    %c0_i32 = arith.constant 0 : i32
    %c0_i32_0 = arith.constant 0 : i32
    %c0_i32_1 = arith.constant 0 : i32
    return %arg0, %0, %c0_i32, %c0_i32_0 : i32, i32, i32, i32
  }
  func.func @transform_3(%arg0: i32, %arg1: i32) -> (i32, i32, i32) {
    %c0_i32 = arith.constant 0 : i32
    %c0_i32_0 = arith.constant 0 : i32
    %c0_i32_1 = arith.constant 0 : i32
    %c0_i32_2 = arith.constant 0 : i32
    return %c0_i32, %c0_i32_0, %c0_i32_1 : i32, i32, i32
  }
  func.func @transform_4(%arg0: i32, %arg1: i32) -> (i32, i32) {
    %c0_i32 = arith.constant 0 : i32
    %c0_i32_0 = arith.constant 0 : i32
    %c0_i32_1 = arith.constant 0 : i32
    return %c0_i32, %c0_i32_0 : i32, i32
  }
  func.func @transform_5(%arg0: i32, %arg1: i32) -> (i32, i32, i32, i32) {
    %c0_i32 = arith.constant 0 : i32
    %c0_i32_0 = arith.constant 0 : i32
    %c0_i32_1 = arith.constant 0 : i32
    return %arg0, %arg1, %c0_i32, %c0_i32_0 : i32, i32, i32, i32
  }
}

module attributes {stable_mosaic.version = 11 : i64} {
  func.func @_acf_energy_kernel(%arg0: i32, %arg1: i32, %arg2: memref<1x12x64xf32, #tpu.memory_space<vmem>>, %arg3: memref<1x64x256xf32, #tpu.memory_space<vmem>>, %arg4: memref<256x256xbf16, #tpu.memory_space<vmem>>, %arg5: memref<1x256xf32, #tpu.memory_space<vmem>>, %arg6: memref<1x12x256xf32, #tpu.memory_space<vmem>>) attributes {dimension_semantics = [#tpu.dimension_semantics<parallel>, #tpu.dimension_semantics<arbitrary>], iteration_bounds = array<i64: 2, 1>, scalar_prefetch = 0 : i64, scratch_operands = 0 : i64, tpu.core_type = #tpu.core_type<tc>, window_params = [{transform_indices = @transform_0, window_bounds = array<i64: 1, 12, 64>}, {transform_indices = @transform_1, window_bounds = array<i64: 1, 64, 256>}, {pipeline_mode = #tpu.pipeline_mode<synchronous>, transform_indices = @transform_2, window_bounds = array<i64: 256, 256>}, {pipeline_mode = #tpu.pipeline_mode<synchronous>, transform_indices = @transform_3, window_bounds = array<i64: 1, 256>}, {transform_indices = @transform_4, window_bounds = array<i64: 1, 12, 256>}]} {
    %c0_i32 = arith.constant 0 : i32
    %0 = arith.cmpi eq, %arg1, %c0_i32 : i32
    %1 = arith.extui %0 : i1 to i32
    %c0_i32_0 = arith.constant 0 : i32
    %2 = arith.cmpi ne, %1, %c0_i32_0 : i32
    scf.if %2 {
      %cst_18 = arith.constant 0.000000e+00 : f32
      %24 = vector.broadcast %cst_18 : f32 to vector<1x12x256xf32>
      %c0_19 = arith.constant 0 : index
      %c0_20 = arith.constant 0 : index
      %c0_21 = arith.constant 0 : index
      %25 = vector.load %arg6[%c0_19, %c0_20, %c0_21] : memref<1x12x256xf32, #tpu.memory_space<vmem>>, vector<1x12x256xf32>
      tpu.vector_store %arg6[%c0_19, %c0_20, %c0_21], %24 {strides = array<i32>} : memref<1x12x256xf32, #tpu.memory_space<vmem>>, vector<1x12x256xf32>,
    } else {
    }
    %c0 = arith.constant 0 : index
    %c0_1 = arith.constant 0 : index
    %c0_2 = arith.constant 0 : index
    %3 = vector.load %arg3[%c0, %c0_1, %c0_2] : memref<1x64x256xf32, #tpu.memory_space<vmem>>, vector<1x64x256xf32>
    %4 = vector.shape_cast %3 : vector<1x64x256xf32> to vector<64x256xf32>
    %5 = arith.truncf %4 : vector<64x256xf32> to vector<64x256xbf16>
    %c0_3 = arith.constant 0 : index
    %c0_4 = arith.constant 0 : index
    %6 = vector.load %arg4[%c0_3, %c0_4] : memref<256x256xbf16, #tpu.memory_space<vmem>>, vector<256x256xbf16>
    %cst = arith.constant dense<0.000000e+00> : vector<64x256xf32>
    %7 = tpu.matmul %5, %6, %cst {dimension_numbers = #tpu.dot_dimension_numbers<[1], [0], [0], [1], [0, 0, 1, 1], [], []>} : vector<64x256xbf16>, vector<256x256xbf16>, vector<64x256xf32> -> vector<64x256xf32>
    %c0_5 = arith.constant 0 : index
    %c0_6 = arith.constant 0 : index
    %8 = vector.load %arg5[%c0_5, %c0_6] : memref<1x256xf32, #tpu.memory_space<vmem>>, vector<1x256xf32>
    %9 = vector.broadcast %8 : vector<1x256xf32> to vector<64x256xf32>
    %10 = arith.addf %7, %9 : vector<64x256xf32>
    %cst_7 = arith.constant 0.000000e+00 : f32
    %11 = vector.broadcast %cst_7 : f32 to vector<64x256xf32>
    %12 = arith.maximumf %10, %11 : vector<64x256xf32>
    %c0_8 = arith.constant 0 : index
    %c0_9 = arith.constant 0 : index
    %c0_10 = arith.constant 0 : index
    %13 = vector.load %arg2[%c0_8, %c0_9, %c0_10] : memref<1x12x64xf32, #tpu.memory_space<vmem>>, vector<1x12x64xf32>
    %14 = vector.shape_cast %13 : vector<1x12x64xf32> to vector<12x64xf32>
    %15 = arith.truncf %14 : vector<12x64xf32> to vector<12x64xbf16>
    %16 = arith.truncf %12 : vector<64x256xf32> to vector<64x256xbf16>
    %cst_11 = arith.constant dense<0.000000e+00> : vector<12x256xf32>
    %17 = tpu.matmul %15, %16, %cst_11 {dimension_numbers = #tpu.dot_dimension_numbers<[1], [0], [0], [1], [0, 0, 1, 1], [], []>} : vector<12x64xbf16>, vector<64x256xbf16>, vector<12x256xf32> -> vector<12x256xf32>
    %c0_12 = arith.constant 0 : index
    %c0_13 = arith.constant 0 : index
    %c0_14 = arith.constant 0 : index
    %18 = vector.load %arg6[%c0_12, %c0_13, %c0_14] : memref<1x12x256xf32, #tpu.memory_space<vmem>>, vector<1x12x256xf32>
    %19 = vector.shape_cast %18 : vector<1x12x256xf32> to vector<12x256xf32>
    %20 = arith.addf %19, %17 : vector<12x256xf32>
    %c0_15 = arith.constant 0 : index
    %c0_16 = arith.constant 0 : index
    %c0_17 = arith.constant 0 : index
    %21 = vector.load %arg6[%c0_15, %c0_16, %c0_17] : memref<1x12x256xf32, #tpu.memory_space<vmem>>, vector<1x12x256xf32>
    %22 = vector.shape_cast %21 : vector<1x12x256xf32> to vector<12x256xf32>
    %23 = vector.shape_cast %20 : vector<12x256xf32> to vector<1x12x256xf32>
    tpu.vector_store %arg6[%c0_15, %c0_16, %c0_17], %23 {strides = array<i32>} : memref<1x12x256xf32, #tpu.memory_space<vmem>>, vector<1x12x256xf32>,
    return
  }
  func.func @transform_0(%arg0: i32, %arg1: i32) -> (i32, i32, i32) {
    %c0_i32 = arith.constant 0 : i32
    %c0_i32_0 = arith.constant 0 : i32
    return %arg0, %c0_i32, %arg1 : i32, i32, i32
  }
  func.func @transform_1(%arg0: i32, %arg1: i32) -> (i32, i32, i32) {
    %c0_i32 = arith.constant 0 : i32
    %c0_i32_0 = arith.constant 0 : i32
    return %arg0, %arg1, %c0_i32 : i32, i32, i32
  }
  func.func @transform_2(%arg0: i32, %arg1: i32) -> (i32, i32) {
    %c0_i32 = arith.constant 0 : i32
    %c0_i32_0 = arith.constant 0 : i32
    %c0_i32_1 = arith.constant 0 : i32
    return %c0_i32, %c0_i32_0 : i32, i32
  }
  func.func @transform_3(%arg0: i32, %arg1: i32) -> (i32, i32) {
    %c0_i32 = arith.constant 0 : i32
    %c0_i32_0 = arith.constant 0 : i32
    %c0_i32_1 = arith.constant 0 : i32
    return %c0_i32, %c0_i32_0 : i32, i32
  }
  func.func @transform_4(%arg0: i32, %arg1: i32) -> (i32, i32, i32) {
    %c0_i32 = arith.constant 0 : i32
    %c0_i32_0 = arith.constant 0 : i32
    %c0_i32_1 = arith.constant 0 : i32
    return %arg0, %c0_i32, %c0_i32_0 : i32, i32, i32
  }
}

module attributes {stable_mosaic.version = 11 : i64} {
  func.func @_acf_output_kernel(%arg0: i32, %arg1: i32, %arg2: memref<1x12x256xf32, #tpu.memory_space<vmem>>, %arg3: memref<1x64x12xf32, #tpu.memory_space<vmem>>, %arg4: memref<1x64x256xf32, #tpu.memory_space<vmem>>, %arg5: memref<256x256xbf16, #tpu.memory_space<vmem>>, %arg6: memref<1x256xf32, #tpu.memory_space<vmem>>, %arg7: memref<1x64x256xf32, #tpu.memory_space<vmem>>, %arg8: memref<12x256xbf16, #tpu.memory_space<vmem>>) attributes {dimension_semantics = [#tpu.dimension_semantics<parallel>, #tpu.dimension_semantics<arbitrary>], iteration_bounds = array<i64: 2, 1>, scalar_prefetch = 0 : i64, scratch_operands = 1 : i64, tpu.core_type = #tpu.core_type<tc>, window_params = [{transform_indices = @transform_0, window_bounds = array<i64: 1, 12, 256>}, {transform_indices = @transform_1, window_bounds = array<i64: 1, 64, 12>}, {transform_indices = @transform_2, window_bounds = array<i64: 1, 64, 256>}, {pipeline_mode = #tpu.pipeline_mode<synchronous>, transform_indices = @transform_3, window_bounds = array<i64: 256, 256>}, {pipeline_mode = #tpu.pipeline_mode<synchronous>, transform_indices = @transform_4, window_bounds = array<i64: 1, 256>}, {transform_indices = @transform_5, window_bounds = array<i64: 1, 64, 256>}]} {
    %c0_i32 = arith.constant 0 : i32
    %0 = arith.cmpi eq, %arg1, %c0_i32 : i32
    %1 = arith.extui %0 : i1 to i32
    %c0_i32_0 = arith.constant 0 : i32
    %2 = arith.cmpi ne, %1, %c0_i32_0 : i32
    scf.if %2 {
      %c0_13 = arith.constant 0 : index
      %c0_14 = arith.constant 0 : index
      %c0_15 = arith.constant 0 : index
      %17 = vector.load %arg2[%c0_13, %c0_14, %c0_15] : memref<1x12x256xf32, #tpu.memory_space<vmem>>, vector<1x12x256xf32>
      %18 = vector.shape_cast %17 : vector<1x12x256xf32> to vector<12x256xf32>
      %cst_16 = arith.constant dense<0xFF800000> : vector<12xf32>
      %19 = vector.multi_reduction <maximumf>, %18, %cst_16 [1] : vector<12x256xf32> to vector<12xf32>
      %20 = vector.shape_cast %19 : vector<12xf32> to vector<12x1xf32>
      %21 = vector.broadcast %20 : vector<12x1xf32> to vector<12x256xf32>
      %22 = arith.subf %21, %18 : vector<12x256xf32>
      %cst_17 = arith.constant dense<0xFF800000> : vector<12xf32>
      %23 = vector.multi_reduction <maximumf>, %22, %cst_17 [1] : vector<12x256xf32> to vector<12xf32>
      %24 = vector.shape_cast %23 : vector<12xf32> to vector<12x1xf32>
      %25 = vector.broadcast %24 : vector<12x1xf32> to vector<12x256xf32>
      %26 = arith.subf %22, %25 : vector<12x256xf32>
      %27 = math.exp %26 : vector<12x256xf32>
      %cst_18 = arith.constant dense<0.000000e+00> : vector<12xf32>
      %28 = vector.multi_reduction <add>, %27, %cst_18 [1] : vector<12x256xf32> to vector<12xf32>
      %29 = vector.shape_cast %28 : vector<12xf32> to vector<12x1xf32>
      %30 = vector.broadcast %29 : vector<12x1xf32> to vector<12x256xf32>
      %31 = arith.divf %27, %30 : vector<12x256xf32>
      %32 = arith.truncf %31 : vector<12x256xf32> to vector<12x256xbf16>
      %c0_19 = arith.constant 0 : index
      %c0_20 = arith.constant 0 : index
      %33 = vector.load %arg5[%c0_19, %c0_20] : memref<256x256xbf16, #tpu.memory_space<vmem>>, vector<256x256xbf16>
      %cst_21 = arith.constant dense<0.000000e+00> : vector<12x256xf32>
      %34 = tpu.matmul %32, %33, %cst_21 {dimension_numbers = #tpu.dot_dimension_numbers<[1], [0], [0], [1], [0, 0, 1, 1], [], []>} : vector<12x256xbf16>, vector<256x256xbf16>, vector<12x256xf32> -> vector<12x256xf32>
      %35 = arith.truncf %34 : vector<12x256xf32> to vector<12x256xbf16>
      %c0_22 = arith.constant 0 : index
      %c0_23 = arith.constant 0 : index
      %36 = vector.load %arg8[%c0_22, %c0_23] : memref<12x256xbf16, #tpu.memory_space<vmem>>, vector<12x256xbf16>
      tpu.vector_store %arg8[%c0_22, %c0_23], %35 {strides = array<i32>} : memref<12x256xbf16, #tpu.memory_space<vmem>>, vector<12x256xbf16>,
    } else {
    }
    %c0 = arith.constant 0 : index
    %c0_1 = arith.constant 0 : index
    %c0_2 = arith.constant 0 : index
    %3 = vector.load %arg3[%c0, %c0_1, %c0_2] : memref<1x64x12xf32, #tpu.memory_space<vmem>>, vector<1x64x12xf32>
    %4 = vector.shape_cast %3 : vector<1x64x12xf32> to vector<64x12xf32>
    %5 = arith.truncf %4 : vector<64x12xf32> to vector<64x12xbf16>
    %c0_3 = arith.constant 0 : index
    %c0_4 = arith.constant 0 : index
    %6 = vector.load %arg8[%c0_3, %c0_4] : memref<12x256xbf16, #tpu.memory_space<vmem>>, vector<12x256xbf16>
    %cst = arith.constant dense<0.000000e+00> : vector<64x256xf32>
    %7 = tpu.matmul %5, %6, %cst {dimension_numbers = #tpu.dot_dimension_numbers<[1], [0], [0], [1], [0, 0, 1, 1], [], []>} : vector<64x12xbf16>, vector<12x256xbf16>, vector<64x256xf32> -> vector<64x256xf32>
    %c0_5 = arith.constant 0 : index
    %c0_6 = arith.constant 0 : index
    %8 = vector.load %arg6[%c0_5, %c0_6] : memref<1x256xf32, #tpu.memory_space<vmem>>, vector<1x256xf32>
    %9 = vector.broadcast %8 : vector<1x256xf32> to vector<64x256xf32>
    %10 = arith.addf %7, %9 : vector<64x256xf32>
    %c0_7 = arith.constant 0 : index
    %c0_8 = arith.constant 0 : index
    %c0_9 = arith.constant 0 : index
    %11 = vector.load %arg4[%c0_7, %c0_8, %c0_9] : memref<1x64x256xf32, #tpu.memory_space<vmem>>, vector<1x64x256xf32>
    %12 = vector.shape_cast %11 : vector<1x64x256xf32> to vector<64x256xf32>
    %13 = arith.addf %12, %10 : vector<64x256xf32>
    %c0_10 = arith.constant 0 : index
    %c0_11 = arith.constant 0 : index
    %c0_12 = arith.constant 0 : index
    %14 = vector.load %arg7[%c0_10, %c0_11, %c0_12] : memref<1x64x256xf32, #tpu.memory_space<vmem>>, vector<1x64x256xf32>
    %15 = vector.shape_cast %14 : vector<1x64x256xf32> to vector<64x256xf32>
    %16 = vector.shape_cast %13 : vector<64x256xf32> to vector<1x64x256xf32>
    tpu.vector_store %arg7[%c0_10, %c0_11, %c0_12], %16 {strides = array<i32>} : memref<1x64x256xf32, #tpu.memory_space<vmem>>, vector<1x64x256xf32>,
    return
  }
  func.func @transform_0(%arg0: i32, %arg1: i32) -> (i32, i32, i32) {
    %c0_i32 = arith.constant 0 : i32
    %c0_i32_0 = arith.constant 0 : i32
    %c0_i32_1 = arith.constant 0 : i32
    return %arg0, %c0_i32, %c0_i32_0 : i32, i32, i32
  }
  func.func @transform_1(%arg0: i32, %arg1: i32) -> (i32, i32, i32) {
    %c0_i32 = arith.constant 0 : i32
    %c0_i32_0 = arith.constant 0 : i32
    return %arg0, %arg1, %c0_i32 : i32, i32, i32
  }
  func.func @transform_2(%arg0: i32, %arg1: i32) -> (i32, i32, i32) {
    %c0_i32 = arith.constant 0 : i32
    %c0_i32_0 = arith.constant 0 : i32
    return %arg0, %arg1, %c0_i32 : i32, i32, i32
  }
  func.func @transform_3(%arg0: i32, %arg1: i32) -> (i32, i32) {
    %c0_i32 = arith.constant 0 : i32
    %c0_i32_0 = arith.constant 0 : i32
    %c0_i32_1 = arith.constant 0 : i32
    return %c0_i32, %c0_i32_0 : i32, i32
  }
  func.func @transform_4(%arg0: i32, %arg1: i32) -> (i32, i32) {
    %c0_i32 = arith.constant 0 : i32
    %c0_i32_0 = arith.constant 0 : i32
    %c0_i32_1 = arith.constant 0 : i32
    return %c0_i32, %c0_i32_0 : i32, i32
  }
  func.func @transform_5(%arg0: i32, %arg1: i32) -> (i32, i32, i32) {
    %c0_i32 = arith.constant 0 : i32
    %c0_i32_0 = arith.constant 0 : i32
    return %arg0, %arg1, %c0_i32 : i32, i32, i32
  }
}

</mosaic_0001>

<llo_original>
// kernel: depth_aware_fe.5
$region0: #{depth_aware_fe.5}
  #allocation0 [shape = 'u32[]', space=smem, size = 0x4, offset = 0x4, fixed_abs, tag = 'smem constant byte address 0x4 - core index']
  #allocation1 [shape = 'u32[144,128]{1,0:T(1,128)}', space=vmem, size = 0x12000, scoped, tag = 'internal scratch']
  %s0 = inlined_call_operand.vmem [shape: bf16[2,10,10,96], index: 0, kind: input, shape index: {}, may-alias: {0,1,2}]
  %s1 = inlined_call_operand.vmem [shape: bf16[2,10,10,96], index: 1, kind: input, shape index: {}, may-alias: {0,1,2}]
  %s2 = inlined_call_operand.vmem [shape: bf16[2,10,10,96], index: 2, kind: input, shape index: {}, may-alias: {0,1,2}]
  %s3 = inlined_call_operand.vmem [shape: bf16[9,96,12], index: 3, kind: input, shape index: {}]
  %s4 = inlined_call_operand.vmem [shape: f32[1,12], index: 4, kind: input, shape index: {}]
  %s5 = inlined_call_operand.vmem [shape: f32[2,8,8,12], index: 5, kind: output, shape index: {}]
  %s6 = sld [smem:[#allocation0]]
  $region53: #{depth_aware_fe.5} parent=0
    _
  %s8 = ssub.s32 1, %s6
  %s9 = scalar_select 0, %s8, %s6
  loop: start=0, step=1, limit=18
  $region2: #{depth_aware_fe.5} parent=0 // loop_pre_header
    _
  $region3: #{depth_aware_fe.5} parent=0 // loop_header
    %s11 = sphi 0, %s15
    %p12 = scmp.ge.s32.totalorder %s11, 18
    %s18 = sphi 0, %s30
    %s19 = sphi 0, %s26
    %s20 = sphi 0, %s18
    %s21 = sphi 0, %s19
    %s22 = sphi 0, %s20
    %s23 = sphi 0, %s21
    %s35 = sphi 0, %s37
    %s38 = sphi 0, %s35
    %s39 = sphi 0, %s38
    %s55 = sphi 0, %s39
    %s65 = sphi 0, %s67
    %s68 = sphi 0, %s65
    %s69 = sphi 0, %s68
    %s85 = sphi 0, %s69
    %s95 = sphi 0, %s97
    %s98 = sphi 0, %s95
    %s99 = sphi 0, %s98
    %s115 = sphi 0, %s99
    %s119 = sphi 0, %s119
    %s121 = sphi 0, %s119
    %s122 = sphi 0, %s121
    %s136 = sphi 0, %s122
    %s140 = sphi 0, %s140
    %s142 = sphi 0, %s140
    %s143 = sphi 0, %s142
    %s157 = sphi 0, %s143
    %s165 = sphi 0, %s167
    %s168 = sphi 0, %s165
    %s169 = sphi 0, %s168
    %s185 = sphi 0, %s169
  $region4: #{depth_aware_fe.5} parent=0 // loop_header_branch
    %14 = sbr.rel (%p12) target = $region8
  $region5: #{depth_aware_fe.5} parent=0 // loop_body
    %s16 = ssub.s32 %s11, 1
    %s17 = ssub.s32 %s11, 2
    %s24 = sadd.s32 1, %s19
    %p25 = scmp.ge.s32.totalorder %s24, 8
    %s26 = scalar_select %p25, 0, %s24
    %s27 = sadd.s32 1, %s18
    %s28 = scalar_select %p25, %s27, %s18
    %p29 = scmp.ge.s32.totalorder %s28, 2
    %s30 = scalar_select %p29, 0, %s28
    %s31 = ssub.s32 %s18, %s30
    %s32 = ssub.s32 %s19, %s26
    %s33 = sor.u32 %s31, %s32
    %p34 = scmp.eq.s32.totalorder %s33, 0
    %s36 = sadd.s32 %s35, 1
    %s37 = scalar_select %p34, %s35, %s36
    %p40 = pneg %p34
    %p41 = scmp.eq.s32.totalorder %s11, 15
    %p42 = por %p40, %p41
    %p43 = scmp.ne.s32.totalorder %s35, %s38
    %p44 = scmp.eq.s32.totalorder %s11, 0
    %p45 = por %p43, %p44
    %p46 = scmp.ne.s32.totalorder %s35, %s38
    %p47 = scmp.eq.s32.totalorder %s16, 15
    %p48 = por %p46, %p47
    %p49 = scmp.ne.s32.totalorder %s38, %s39
    %p50 = scmp.eq.s32.totalorder %s16, 0
    %p51 = por %p49, %p50
    %p52 = scmp.ne.s32.totalorder %s38, %s39
    %p53 = scmp.eq.s32.totalorder %s17, 15
    %p54 = por %p52, %p53
    %p56 = scmp.ne.s32.totalorder %s39, %s55
    %p57 = scmp.eq.s32.totalorder %s17, 0
    %p58 = por %p56, %p57
    %s59 = sadd.s32 %s19, 1
    %s60 = sadd.s32 %s26, 1
    %s61 = ssub.s32 %s18, %s30
    %s62 = ssub.s32 %s59, %s60
    %s63 = sor.u32 %s61, %s62
    %p64 = scmp.eq.s32.totalorder %s63, 0
    %s66 = sadd.s32 %s65, 1
    %s67 = scalar_select %p64, %s65, %s66
    %p70 = pneg %p64
    %p71 = scmp.eq.s32.totalorder %s11, 15
    %p72 = por %p70, %p71
    %p73 = scmp.ne.s32.totalorder %s65, %s68
    %p74 = scmp.eq.s32.totalorder %s11, 0
    %p75 = por %p73, %p74
    %p76 = scmp.ne.s32.totalorder %s65, %s68
    %p77 = scmp.eq.s32.totalorder %s16, 15
    %p78 = por %p76, %p77
    %p79 = scmp.ne.s32.totalorder %s68, %s69
    %p80 = scmp.eq.s32.totalorder %s16, 0
    %p81 = por %p79, %p80
    %p82 = scmp.ne.s32.totalorder %s68, %s69
    %p83 = scmp.eq.s32.totalorder %s17, 15
    %p84 = por %p82, %p83
    %p86 = scmp.ne.s32.totalorder %s69, %s85
    %p87 = scmp.eq.s32.totalorder %s17, 0
    %p88 = por %p86, %p87
    %s89 = sadd.s32 %s19, 2
    %s90 = sadd.s32 %s26, 2
    %s91 = ssub.s32 %s18, %s30
    %s92 = ssub.s32 %s89, %s90
    %s93 = sor.u32 %s91, %s92
    %p94 = scmp.eq.s32.totalorder %s93, 0
    %s96 = sadd.s32 %s95, 1
    %s97 = scalar_select %p94, %s95, %s96
    %p100 = pneg %p94
    %p101 = scmp.eq.s32.totalorder %s11, 15
    %p102 = por %p100, %p101
    %p103 = scmp.ne.s32.totalorder %s95, %s98
    %p104 = scmp.eq.s32.totalorder %s11, 0
    %p105 = por %p103, %p104
    %p106 = scmp.ne.s32.totalorder %s95, %s98
    %p107 = scmp.eq.s32.totalorder %s16, 15
    %p108 = por %p106, %p107
    %p109 = scmp.ne.s32.totalorder %s98, %s99
    %p110 = scmp.eq.s32.totalorder %s16, 0
    %p111 = por %p109, %p110
    %p112 = scmp.ne.s32.totalorder %s98, %s99
    %p113 = scmp.eq.s32.totalorder %s17, 15
    %p114 = por %p112, %p113
    %p116 = scmp.ne.s32.totalorder %s99, %s115
    %p117 = scmp.eq.s32.totalorder %s17, 0
    %p118 = por %p116, %p117
    %s120 = sadd.s32 %s119, 1
    %p123 = scmp.eq.s32.totalorder %s11, 15
    %p124 = scmp.ne.s32.totalorder %s119, %s121
    %p125 = scmp.eq.s32.totalorder %s11, 0
    %p126 = por %p124, %p125
    %p127 = scmp.ne.s32.totalorder %s119, %s121
    %p128 = scmp.eq.s32.totalorder %s16, 15
    %p129 = por %p127, %p128
    %p130 = scmp.ne.s32.totalorder %s121, %s122
    %p131 = scmp.eq.s32.totalorder %s16, 0
    %p132 = por %p130, %p131
    %p133 = scmp.ne.s32.totalorder %s121, %s122
    %p134 = scmp.eq.s32.totalorder %s17, 15
    %p135 = por %p133, %p134
    %p137 = scmp.ne.s32.totalorder %s122, %s136
    %p138 = scmp.eq.s32.totalorder %s17, 0
    %p139 = por %p137, %p138
    %s141 = sadd.s32 %s140, 1
    %p144 = scmp.eq.s32.totalorder %s11, 15
    %p145 = scmp.ne.s32.totalorder %s140, %s142
    %p146 = scmp.eq.s32.totalorder %s11, 0
    %p147 = por %p145, %p146
    %p148 = scmp.ne.s32.totalorder %s140, %s142
    %p149 = scmp.eq.s32.totalorder %s16, 15
    %p150 = por %p148, %p149
    %p151 = scmp.ne.s32.totalorder %s142, %s143
    %p152 = scmp.eq.s32.totalorder %s16, 0
    %p153 = por %p151, %p152
    %p154 = scmp.ne.s32.totalorder %s142, %s143
    %p155 = scmp.eq.s32.totalorder %s17, 15
    %p156 = por %p154, %p155
    %p158 = scmp.ne.s32.totalorder %s143, %s157
    %p159 = scmp.eq.s32.totalorder %s17, 0
    %p160 = por %p158, %p159
    %s161 = ssub.s32 %s18, %s30
    %s162 = ssub.s32 %s19, %s26
    %s163 = sor.u32 %s161, %s162
    %p164 = scmp.eq.s32.totalorder %s163, 0
    %s166 = sadd.s32 %s165, 1
    %s167 = scalar_select %p164, %s165, %s166
    %p170 = pneg %p164
    %p171 = scmp.eq.s32.totalorder %s11, 15
    %p172 = por %p170, %p171
    %p173 = scmp.ne.s32.totalorder %s165, %s168
    %p174 = scmp.eq.s32.totalorder %s11, 0
    %p175 = por %p173, %p174
    %p176 = scmp.ne.s32.totalorder %s165, %s168
    %p177 = scmp.eq.s32.totalorder %s16, 15
    %p178 = por %p176, %p177
    %p179 = scmp.ne.s32.totalorder %s168, %s169
    %p180 = scmp.eq.s32.totalorder %s16, 0
    %p181 = por %p179, %p180
    %p182 = scmp.ne.s32.totalorder %s168, %s169
    %p183 = scmp.eq.s32.totalorder %s17, 15
    %p184 = por %p182, %p183
    %p186 = scmp.ne.s32.totalorder %s169, %s185
    %p187 = scmp.eq.s32.totalorder %s17, 0
    %p188 = por %p186, %p187
    %p189 = scmp.le.s32.totalorder 1, %s11
    %p190 = scmp.lt.s32.totalorder %s11, 17
    %p191 = pnand %p189, %p190
    %p192 = pneg %p191
    // Predicated region
    $region9: #{depth_aware_fe.5} parent=5 // pred_check
      _
    $region10: #{depth_aware_fe.5} parent=5 // pred_check_branch
      %194 = sbr.rel (%p191) target = $region12
    $region11: #{depth_aware_fe.5} parent=5 // pred_region
      %s195 = ssub.s32 %s11, 1
      // Predicated region
      $region13: #{depth_aware_fe.5} parent=11 // pred_check
        %p196 = pneg %p132
      $region14: #{depth_aware_fe.5} parent=11 // pred_check_branch
        %198 = sbr.rel (%p196) target = $region16
      $region15: #{depth_aware_fe.5} parent=11 // pred_region
        _
      $region16: #{depth_aware_fe.5} parent=11 // pred_fallthru
        _
      // Predicated region
      $region17: #{depth_aware_fe.5} parent=11 // pred_check
        %p199 = pneg %p153
      $region18: #{depth_aware_fe.5} parent=11 // pred_check_branch
        %201 = sbr.rel (%p199) target = $region20
      $region19: #{depth_aware_fe.5} parent=11 // pred_region
        _
      $region20: #{depth_aware_fe.5} parent=11 // pred_fallthru
        _
    $region12: #{depth_aware_fe.5} parent=5 // pred_fallthru
      _
    %p202 = scmp.lt.s32.totalorder %s11, 16
    // Predicated region
    $region21: #{depth_aware_fe.5} parent=5 // pred_check
      %p203 = pneg %p202
    $region22: #{depth_aware_fe.5} parent=5 // pred_check_branch
      %205 = sbr.rel (%p203) target = $region24
    $region23: #{depth_aware_fe.5} parent=5 // pred_region
      // Predicated region
      $region25: #{depth_aware_fe.5} parent=23 // pred_check
        %p206 = pneg %p45
      $region26: #{depth_aware_fe.5} parent=23 // pred_check_branch
        %208 = sbr.rel (%p206) target = $region28
      $region27: #{depth_aware_fe.5} parent=23 // pred_region
        %p209 = scmp.lt.s32.totalorder %s18, 1
        %s210 = scalar_select %p209, %s18, 1
        %p211 = scmp.lt.s32.totalorder %s19, 9
        %s212 = scalar_select %p211, %s19, 9
        %s213 = smul.addr %s212, 2
        %s214 = smul.addr %s210, 20
        %s215 = sadd.s32 %s213, %s214
        %s216 = smul.addr %s215, 4
        %s217 = scalar_lea.vmem %s0, %s216
      $region28: #{depth_aware_fe.5} parent=23 // pred_fallthru
        _
      // Predicated region
      $region29: #{depth_aware_fe.5} parent=23 // pred_check
        %p218 = pneg %p75
      $region30: #{depth_aware_fe.5} parent=23 // pred_check_branch
        %220 = sbr.rel (%p218) target = $region32
      $region31: #{depth_aware_fe.5} parent=23 // pred_region
        %s221 = sadd.s32 %s19, 1
        %p222 = scmp.lt.s32.totalorder %s18, 1
        %s223 = scalar_select %p222, %s18, 1
        %p224 = scmp.lt.s32.totalorder %s221, 9
        %s225 = scalar_select %p224, %s221, 9
        %s226 = smul.addr %s225, 2
        %s227 = smul.addr %s223, 20
        %s228 = sadd.s32 %s226, %s227
        %s229 = smul.addr %s228, 4
        %s230 = scalar_lea.vmem %s1, %s229
        %s231 = sadd.s32 %s19, 1
      $region32: #{depth_aware_fe.5} parent=23 // pred_fallthru
        _
      // Predicated region
      $region33: #{depth_aware_fe.5} parent=23 // pred_check
        %p232 = pneg %p105
      $region34: #{depth_aware_fe.5} parent=23 // pred_check_branch
        %234 = sbr.rel (%p232) target = $region36
      $region35: #{depth_aware_fe.5} parent=23 // pred_region
        %s235 = sadd.s32 %s19, 2
        %p236 = scmp.lt.s32.totalorder %s18, 1
        %s237 = scalar_select %p236, %s18, 1
        %p238 = scmp.lt.s32.totalorder %s235, 9
        %s239 = scalar_select %p238, %s235, 9
        %s240 = smul.addr %s239, 2
        %s241 = smul.addr %s237, 20
        %s242 = sadd.s32 %s240, %s241
        %s243 = smul.addr %s242, 4
        %s244 = scalar_lea.vmem %s2, %s243
        %s245 = sadd.s32 %s19, 2
      $region36: #{depth_aware_fe.5} parent=23 // pred_fallthru
        _
    $region24: #{depth_aware_fe.5} parent=5 // pred_fallthru
      _
    %p246 = scmp.le.s32.totalorder 1, %s11
    %p247 = scmp.lt.s32.totalorder %s11, 17
    %p248 = pnand %p246, %p247
    %p249 = pneg %p248
    // Predicated region
    $region37: #{depth_aware_fe.5} parent=5 // pred_check
      _
    $region38: #{depth_aware_fe.5} parent=5 // pred_check_branch
      %251 = sbr.rel (%p248) target = $region40
    $region39: #{depth_aware_fe.5} parent=5 // pred_region
      %s252 = ssub.s32 %s11, 1
      %p253 = scmp.lt.s32.totalorder %s20, 1
      %s254 = scalar_select %p253, %s20, 1
      %p255 = scmp.lt.s32.totalorder %s21, 9
      %s256 = scalar_select %p255, %s21, 9
      %s257 = smul.addr %s256, 2
      %s258 = smul.addr %s254, 20
      %s259 = sadd.s32 %s257, %s258
      %s260 = smul.addr %s259, 4
      %s261 = scalar_lea.vmem %s0, %s260
      %p262 = pneg %p51
      %p263 = pneg %p48
      %s264 = sadd.s32 %s21, 1
      %p265 = scmp.lt.s32.totalorder %s20, 1
      %s266 = scalar_select %p265, %s20, 1
      %p267 = scmp.lt.s32.totalorder %s264, 9
      %s268 = scalar_select %p267, %s264, 9
      %s269 = smul.addr %s268, 2
      %s270 = smul.addr %s266, 20
      %s271 = sadd.s32 %s269, %s270
      %s272 = smul.addr %s271, 4
      %s273 = scalar_lea.vmem %s1, %s272
      %p274 = pneg %p81
      %p275 = pneg %p78
      %s276 = sadd.s32 %s21, 2
      %p277 = scmp.lt.s32.totalorder %s20, 1
      %s278 = scalar_select %p277, %s20, 1
      %p279 = scmp.lt.s32.totalorder %s276, 9
      %s280 = scalar_select %p279, %s276, 9
      %s281 = smul.addr %s280, 2
      %s282 = smul.addr %s278, 20
      %s283 = sadd.s32 %s281, %s282
      %s284 = smul.addr %s283, 4
      %s285 = scalar_lea.vmem %s2, %s284
      %p286 = pneg %p111
      %p287 = pneg %p108
      %p288 = pneg %p132
      %p289 = pneg %p129
      %p290 = pneg %p153
      %p291 = pneg %p150
      %p292 = pneg %p181
      %p293 = pneg %p178
      %p294 = scmp.lt.s32.totalorder %s20, 1
      %s295 = scalar_select %p294, %s20, 1
      %p296 = scmp.lt.s32.totalorder %s21, 7
      %s297 = scalar_select %p296, %s21, 7
      %s298 = smul.addr %s295, 8
      %s299 = sadd.s32 %s297, %s298
      %s300 = smul.addr %s299, 8
      %s301 = scalar_lea.vmem %s5, %s300
      %p302 = scmp.lt.s32.totalorder %s20, 1
      %s303 = scalar_select %p302, %s20, 1
      %p304 = scmp.lt.s32.totalorder %s21, 9
      %s305 = scalar_select %p304, %s21, 9
      %s306 = smul.addr %s305, 2
      %s307 = smul.addr %s303, 20
      %s308 = sadd.s32 %s306, %s307
      %s309 = smul.addr %s308, 4
      %s310 = scalar_lea.vmem %s0, %s309
      %s311 = sadd.s32 %s21, 1
      %p312 = scmp.lt.s32.totalorder %s20, 1
      %s313 = scalar_select %p312, %s20, 1
      %p314 = scmp.lt.s32.totalorder %s311, 9
      %s315 = scalar_select %p314, %s311, 9
      %s316 = smul.addr %s315, 2
      %s317 = smul.addr %s313, 20
      %s318 = sadd.s32 %s316, %s317
      %s319 = smul.addr %s318, 4
      %s320 = scalar_lea.vmem %s1, %s319
      %s321 = sadd.s32 %s21, 1
      %s322 = sadd.s32 %s21, 2
      %p323 = scmp.lt.s32.totalorder %s20, 1
      %s324 = scalar_select %p323, %s20, 1
      %p325 = scmp.lt.s32.totalorder %s322, 9
      %s326 = scalar_select %p325, %s322, 9
      %s327 = smul.addr %s326, 2
      %s328 = smul.addr %s324, 20
      %s329 = sadd.s32 %s327, %s328
      %s330 = smul.addr %s329, 4
      %s331 = scalar_lea.vmem %s2, %s330
      %s332 = sadd.s32 %s21, 2
      %p333 = scmp.lt.s32.totalorder %s20, 1
      %s334 = scalar_select %p333, %s20, 1
      %p335 = scmp.lt.s32.totalorder %s21, 7
      %s336 = scalar_select %p335, %s21, 7
      %s337 = smul.addr %s334, 8
      %s338 = sadd.s32 %s336, %s337
      %s339 = smul.addr %s338, 8
      %s340 = scalar_lea.vmem %s5, %s339
      %v342 = vld [vmem:[%s310] sm:$0xf]
      %v343 = vld [vmem:[%s310 + $0x4] sm:$0x1]
      %v344 = vld [vmem:[%s320] sm:$0xf]
      %v345 = vld [vmem:[%s320 + $0x4] sm:$0x1]
      %v346 = vld [vmem:[%s331] sm:$0xf]
      %v347 = vld [vmem:[%s331 + $0x4] sm:$0x1]
      %v348 = vld [vmem:[%s3] sm:$0xf]
      %v349 = vld [vmem:[%s3 + $0x4] sm:$0xf]
      %v350 = vld [vmem:[%s3 + $0x8] sm:$0xf]
      %v351 = vld [vmem:[%s3 + $0xc] sm:$0xf]
      %v352 = vld [vmem:[%s3 + $0x10] sm:$0xf]
      %v353 = vld [vmem:[%s3 + $0x14] sm:$0xf]
      %v354 = vld [vmem:[%s3 + $0x18] sm:$0xf]
      %v355 = vld [vmem:[%s3 + $0x1c] sm:$0xf]
      %v356 = vld [vmem:[%s3 + $0x20] sm:$0xf]
      %v357 = vld [vmem:[%s3 + $0x24] sm:$0xf]
      %v358 = vld [vmem:[%s3 + $0x28] sm:$0xf]
      %v359 = vld [vmem:[%s3 + $0x2c] sm:$0xf]
      %s360 = scalar_lea.vmem %s3, 48
      %v361 = vld [vmem:[%s360] sm:$0xf]
      %v362 = vld [vmem:[%s360 + $0x4] sm:$0xf]
      %v363 = vld [vmem:[%s360 + $0x8] sm:$0xf]
      %v364 = vld [vmem:[%s360 + $0xc] sm:$0xf]
      %v365 = vld [vmem:[%s360 + $0x10] sm:$0xf]
      %v366 = vld [vmem:[%s360 + $0x14] sm:$0xf]
      %v367 = vld [vmem:[%s360 + $0x18] sm:$0xf]
      %v368 = vld [vmem:[%s360 + $0x1c] sm:$0xf]
      %v369 = vld [vmem:[%s360 + $0x20] sm:$0xf]
      %v370 = vld [vmem:[%s360 + $0x24] sm:$0xf]
      %v371 = vld [vmem:[%s360 + $0x28] sm:$0xf]
      %v372 = vld [vmem:[%s360 + $0x2c] sm:$0xf]
      %v375 = vunpack.c.l.b16 %v342
      %v376 = vunpack.c.l.b16 %v343
      %v377 = vpack.c.b16 %v376, %v375
      %v379 = vshrl.u32 %v377, 16
      %v381 = vshll.u32 %v377, 16
      %v383 = vrot.slane %v381, 1
      %v384 = vor.u32 %v379, %v383
      %v397 = vunpack.c.l.b16 %v361
      %v398 = vunpack.c.l.b16 %v362
      %v399 = vunpack.c.l.b16 %v363
      %v400 = vunpack.c.l.b16 %v364
      %v401 = vunpack.c.l.b16 %v365
      %v402 = vunpack.c.l.b16 %v366
      %v403 = vunpack.c.l.b16 %v367
      %v404 = vunpack.c.l.b16 %v368
      %v405 = vunpack.c.l.b16 %v369
      %v406 = vunpack.c.l.b16 %v370
      %v407 = vunpack.c.l.b16 %v371
      %v408 = vunpack.c.l.b16 %v372
      %v409 = vpack.c.b16 %v398, %v397
      %v410 = vpack.c.b16 %v400, %v399
      %v411 = vpack.c.b16 %v402, %v401
      %v412 = vpack.c.b16 %v404, %v403
      %v413 = vpack.c.b16 %v406, %v405
      %v414 = vpack.c.b16 %v408, %v407
      %vm421 = vcmask 785408
      %v423 = vsel %vm421, %v384, 0
      %425 = vmatprep.subr.bf16.mxu0 0
      %426 = vmatpush1.bf16.msra.mxu0 %v409
      %427 = vmatprep.subr.bf16.mxu0 0
      %428 = vmatpush1.bf16.msra.mxu0 %v410
      %429 = vmatprep.subr.bf16.mxu0 0
      %430 = vmatpush1.bf16.msra.mxu0 %v411
      %431 = vmatprep.subr.bf16.mxu0 0
      %432 = vmatpush1.bf16.msra.mxu0 %v412
      %433 = vmatprep.subr.bf16.mxu0 0
      %434 = vmatpush1.bf16.msra.mxu0 %v413
      %435 = vmatprep.subr.bf16.mxu0 0
      %436 = vmatpush1.bf16.msra.mxu0 %v414
      %437 = vmatprep.subr.bf16.mxu0 0
      %438 = vmatpush1.bf16.msra.mxu0 0
      %439 = vmatprep.subr.bf16.mxu0 0
      %440 = vmatpush1.bf16.msra.mxu0 0
      %441 = vmatprep.subr.bf16.mxu0 0
      %442 = vmatpush1.bf16.msra.mxu0 0
      %443 = vmatprep.subr.bf16.mxu0 0
      %444 = vmatpush1.bf16.msra.mxu0 0
      %445 = vmatprep.subr.bf16.mxu0 0
      %446 = vmatpush1.bf16.msra.mxu0 0
      %447 = vmatprep.subr.bf16.mxu0 0
      %448 = vmatpush1.bf16.msra.mxu0 0
      %449 = vmatprep.subr.bf16.mxu0 0
      %450 = vmatpush1.bf16.msra.mxu0 0
      %451 = vmatprep.subr.bf16.mxu0 0
      %452 = vmatpush1.bf16.msra.mxu0 0
      %453 = vmatprep.subr.bf16.mxu0 0
      %454 = vmatpush1.bf16.msra.mxu0 0
      %455 = vmatprep.subr.bf16.mxu0 0
      %456 = vmatpush1.bf16.msra.mxu0 0
      %457 = vmatprep.mubr.bf16.mxu0 0
      %458 = vmatmul.mubr.bf16.gmra.mrb[0].mxu0 %v423
      %v459 = vpop.f32.mrb[0].mxu0
      %v460 = vadd.f32 0.0, %v459
      %v461 = vpop.f32.mrb[0].mxu0
      %v462 = vpop.f32.mrb[0].mxu0
      %v463 = vpop.f32.mrb[0].mxu0
      %464 = vdwg.mxu0
      %v477 = vunpack.c.l.b16 %v348
      %v478 = vunpack.c.l.b16 %v349
      %v479 = vunpack.c.l.b16 %v350
      %v480 = vunpack.c.l.b16 %v351
      %v481 = vunpack.c.l.b16 %v352
      %v482 = vunpack.c.l.b16 %v353
      %v483 = vunpack.c.l.b16 %v354
      %v484 = vunpack.c.l.b16 %v355
      %v485 = vunpack.c.l.b16 %v356
      %v486 = vunpack.c.l.b16 %v357
      %v487 = vunpack.c.l.b16 %v358
      %v488 = vunpack.c.l.b16 %v359
      %v489 = vpack.c.b16 %v478, %v477
      %v490 = vpack.c.b16 %v480, %v479
      %v491 = vpack.c.b16 %v482, %v481
      %v492 = vpack.c.b16 %v484, %v483
      %v493 = vpack.c.b16 %v486, %v485
      %v494 = vpack.c.b16 %v488, %v487
      %v502 = vsel %vm421, %v342, 0
      %504 = vmatprep.subr.bf16.mxu0 0
      %505 = vmatpush1.bf16.msra.mxu0 %v489
      %506 = vmatprep.subr.bf16.mxu0 0
      %507 = vmatpush1.bf16.msra.mxu0 %v490
      %508 = vmatprep.subr.bf16.mxu0 0
      %509 = vmatpush1.bf16.msra.mxu0 %v491
      %510 = vmatprep.subr.bf16.mxu0 0
      %511 = vmatpush1.bf16.msra.mxu0 %v492
      %512 = vmatprep.subr.bf16.mxu0 0
      %513 = vmatpush1.bf16.msra.mxu0 %v493
      %514 = vmatprep.subr.bf16.mxu0 0
      %515 = vmatpush1.bf16.msra.mxu0 %v494
      %516 = vmatprep.subr.bf16.mxu0 0
      %517 = vmatpush1.bf16.msra.mxu0 0
      %518 = vmatprep.subr.bf16.mxu0 0
      %519 = vmatpush1.bf16.msra.mxu0 0
      %520 = vmatprep.subr.bf16.mxu0 0
      %521 = vmatpush1.bf16.msra.mxu0 0
      %522 = vmatprep.subr.bf16.mxu0 0
      %523 = vmatpush1.bf16.msra.mxu0 0
      %524 = vmatprep.subr.bf16.mxu0 0
      %525 = vmatpush1.bf16.msra.mxu0 0
      %526 = vmatprep.subr.bf16.mxu0 0
      %527 = vmatpush1.bf16.msra.mxu0 0
      %528 = vmatprep.subr.bf16.mxu0 0
      %529 = vmatpush1.bf16.msra.mxu0 0
      %530 = vmatprep.subr.bf16.mxu0 0
      %531 = vmatpush1.bf16.msra.mxu0 0
      %532 = vmatprep.subr.bf16.mxu0 0
      %533 = vmatpush1.bf16.msra.mxu0 0
      %534 = vmatprep.subr.bf16.mxu0 0
      %535 = vmatpush1.bf16.msra.mxu0 0
      %536 = vmatprep.mubr.bf16.mxu0 0
      %537 = vmatmul.mubr.bf16.gmra.mrb[0].mxu0 %v502
      %v538 = vpop.f32.mrb[0].mxu0
      %v539 = vadd.f32 %v460, %v538
      %v540 = vpop.f32.mrb[0].mxu0
      %v541 = vpop.f32.mrb[0].mxu0
      %v542 = vpop.f32.mrb[0].mxu0
      %543 = vdwg.mxu0
      %s544 = scalar_lea.vmem %s3, 96
      %v545 = vld [vmem:[%s544] sm:$0xf]
      %v546 = vld [vmem:[%s544 + $0x4] sm:$0xf]
      %v547 = vld [vmem:[%s544 + $0x8] sm:$0xf]
      %v548 = vld [vmem:[%s544 + $0xc] sm:$0xf]
      %v549 = vld [vmem:[%s544 + $0x10] sm:$0xf]
      %v550 = vld [vmem:[%s544 + $0x14] sm:$0xf]
      %v551 = vld [vmem:[%s544 + $0x18] sm:$0xf]
      %v552 = vld [vmem:[%s544 + $0x1c] sm:$0xf]
      %v553 = vld [vmem:[%s544 + $0x20] sm:$0xf]
      %v554 = vld [vmem:[%s544 + $0x24] sm:$0xf]
      %v555 = vld [vmem:[%s544 + $0x28] sm:$0xf]
      %v556 = vld [vmem:[%s544 + $0x2c] sm:$0xf]
      %v557 = vrot.slane %v377, 1
      %v570 = vunpack.c.l.b16 %v545
      %v571 = vunpack.c.l.b16 %v546
      %v572 = vunpack.c.l.b16 %v547
      %v573 = vunpack.c.l.b16 %v548
      %v574 = vunpack.c.l.b16 %v549
      %v575 = vunpack.c.l.b16 %v550
      %v576 = vunpack.c.l.b16 %v551
      %v577 = vunpack.c.l.b16 %v552
      %v578 = vunpack.c.l.b16 %v553
      %v579 = vunpack.c.l.b16 %v554
      %v580 = vunpack.c.l.b16 %v555
      %v581 = vunpack.c.l.b16 %v556
      %v582 = vpack.c.b16 %v571, %v570
      %v583 = vpack.c.b16 %v573, %v572
      %v584 = vpack.c.b16 %v575, %v574
      %v585 = vpack.c.b16 %v577, %v576
      %v586 = vpack.c.b16 %v579, %v578
      %v587 = vpack.c.b16 %v581, %v580
      %v595 = vsel %vm421, %v557, 0
      %597 = vmatprep.subr.bf16.mxu0 0
      %598 = vmatpush1.bf16.msra.mxu0 %v582
      %599 = vmatprep.subr.bf16.mxu0 0
      %600 = vmatpush1.bf16.msra.mxu0 %v583
      %601 = vmatprep.subr.bf16.mxu0 0
      %602 = vmatpush1.bf16.msra.mxu0 %v584
      %603 = vmatprep.subr.bf16.mxu0 0
      %604 = vmatpush1.bf16.msra.mxu0 %v585
      %605 = vmatprep.subr.bf16.mxu0 0
      %606 = vmatpush1.bf16.msra.mxu0 %v586
      %607 = vmatprep.subr.bf16.mxu0 0
      %608 = vmatpush1.bf16.msra.mxu0 %v587
      %609 = vmatprep.subr.bf16.mxu0 0
      %610 = vmatpush1.bf16.msra.mxu0 0
      %611 = vmatprep.subr.bf16.mxu0 0
      %612 = vmatpush1.bf16.msra.mxu0 0
      %613 = vmatprep.subr.bf16.mxu0 0
      %614 = vmatpush1.bf16.msra.mxu0 0
      %615 = vmatprep.subr.bf16.mxu0 0
      %616 = vmatpush1.bf16.msra.mxu0 0
      %617 = vmatprep.subr.bf16.mxu0 0
      %618 = vmatpush1.bf16.msra.mxu0 0
      %619 = vmatprep.subr.bf16.mxu0 0
      %620 = vmatpush1.bf16.msra.mxu0 0
      %621 = vmatprep.subr.bf16.mxu0 0
      %622 = vmatpush1.bf16.msra.mxu0 0
      %623 = vmatprep.subr.bf16.mxu0 0
      %624 = vmatpush1.bf16.msra.mxu0 0
      %625 = vmatprep.subr.bf16.mxu0 0
      %626 = vmatpush1.bf16.msra.mxu0 0
      %627 = vmatprep.subr.bf16.mxu0 0
      %628 = vmatpush1.bf16.msra.mxu0 0
      %629 = vmatprep.mubr.bf16.mxu0 0
      %630 = vmatmul.mubr.bf16.gmra.mrb[0].mxu0 %v595
      %v631 = vpop.f32.mrb[0].mxu0
      %v632 = vadd.f32 0.0, %v631
      %v633 = vpop.f32.mrb[0].mxu0
      %v634 = vpop.f32.mrb[0].mxu0
      %v635 = vpop.f32.mrb[0].mxu0
      %636 = vdwg.mxu0
      %v637 = vadd.f32 %v539, %v632
      %s638 = scalar_lea.vmem %s3, 144
      %v639 = vld [vmem:[%s638] sm:$0xf]
      %v640 = vld [vmem:[%s638 + $0x4] sm:$0xf]
      %v641 = vld [vmem:[%s638 + $0x8] sm:$0xf]
      %v642 = vld [vmem:[%s638 + $0xc] sm:$0xf]
      %v643 = vld [vmem:[%s638 + $0x10] sm:$0xf]
      %v644 = vld [vmem:[%s638 + $0x14] sm:$0xf]
      %v645 = vld [vmem:[%s638 + $0x18] sm:$0xf]
      %v646 = vld [vmem:[%s638 + $0x1c] sm:$0xf]
      %v647 = vld [vmem:[%s638 + $0x20] sm:$0xf]
      %v648 = vld [vmem:[%s638 + $0x24] sm:$0xf]
      %v649 = vld [vmem:[%s638 + $0x28] sm:$0xf]
      %v650 = vld [vmem:[%s638 + $0x2c] sm:$0xf]
      %v663 = vunpack.c.l.b16 %v639
      %v664 = vunpack.c.l.b16 %v640
      %v665 = vunpack.c.l.b16 %v641
      %v666 = vunpack.c.l.b16 %v642
      %v667 = vunpack.c.l.b16 %v643
      %v668 = vunpack.c.l.b16 %v644
      %v669 = vunpack.c.l.b16 %v645
      %v670 = vunpack.c.l.b16 %v646
      %v671 = vunpack.c.l.b16 %v647
      %v672 = vunpack.c.l.b16 %v648
      %v673 = vunpack.c.l.b16 %v649
      %v674 = vunpack.c.l.b16 %v650
      %v675 = vpack.c.b16 %v664, %v663
      %v676 = vpack.c.b16 %v666, %v665
      %v677 = vpack.c.b16 %v668, %v667
      %v678 = vpack.c.b16 %v670, %v669
      %v679 = vpack.c.b16 %v672, %v671
      %v680 = vpack.c.b16 %v674, %v673
      %v688 = vsel %vm421, %v344, 0
      %690 = vmatprep.subr.bf16.mxu0 0
      %691 = vmatpush1.bf16.msra.mxu0 %v675
      %692 = vmatprep.subr.bf16.mxu0 0
      %693 = vmatpush1.bf16.msra.mxu0 %v676
      %694 = vmatprep.subr.bf16.mxu0 0
      %695 = vmatpush1.bf16.msra.mxu0 %v677
      %696 = vmatprep.subr.bf16.mxu0 0
      %697 = vmatpush1.bf16.msra.mxu0 %v678
      %698 = vmatprep.subr.bf16.mxu0 0
      %699 = vmatpush1.bf16.msra.mxu0 %v679
      %700 = vmatprep.subr.bf16.mxu0 0
      %701 = vmatpush1.bf16.msra.mxu0 %v680
      %702 = vmatprep.subr.bf16.mxu0 0
      %703 = vmatpush1.bf16.msra.mxu0 0
      %704 = vmatprep.subr.bf16.mxu0 0
      %705 = vmatpush1.bf16.msra.mxu0 0
      %706 = vmatprep.subr.bf16.mxu0 0
      %707 = vmatpush1.bf16.msra.mxu0 0
      %708 = vmatprep.subr.bf16.mxu0 0
      %709 = vmatpush1.bf16.msra.mxu0 0
      %710 = vmatprep.subr.bf16.mxu0 0
      %711 = vmatpush1.bf16.msra.mxu0 0
      %712 = vmatprep.subr.bf16.mxu0 0
      %713 = vmatpush1.bf16.msra.mxu0 0
      %714 = vmatprep.subr.bf16.mxu0 0
      %715 = vmatpush1.bf16.msra.mxu0 0
      %716 = vmatprep.subr.bf16.mxu0 0
      %717 = vmatpush1.bf16.msra.mxu0 0
      %718 = vmatprep.subr.bf16.mxu0 0
      %719 = vmatpush1.bf16.msra.mxu0 0
      %720 = vmatprep.subr.bf16.mxu0 0
      %721 = vmatpush1.bf16.msra.mxu0 0
      %722 = vmatprep.mubr.bf16.mxu0 0
      %723 = vmatmul.mubr.bf16.gmra.mrb[0].mxu0 %v688
      %v724 = vpop.f32.mrb[0].mxu0
      %v725 = vadd.f32 0.0, %v724
      %v726 = vpop.f32.mrb[0].mxu0
      %v727 = vpop.f32.mrb[0].mxu0
      %v728 = vpop.f32.mrb[0].mxu0
      %729 = vdwg.mxu0
      %v730 = vadd.f32 %v637, %v725
      %s731 = scalar_lea.vmem %s3, 192
      %v732 = vld [vmem:[%s731] sm:$0xf]
      %v733 = vld [vmem:[%s731 + $0x4] sm:$0xf]
      %v734 = vld [vmem:[%s731 + $0x8] sm:$0xf]
      %v735 = vld [vmem:[%s731 + $0xc] sm:$0xf]
      %v736 = vld [vmem:[%s731 + $0x10] sm:$0xf]
      %v737 = vld [vmem:[%s731 + $0x14] sm:$0xf]
      %v738 = vld [vmem:[%s731 + $0x18] sm:$0xf]
      %v739 = vld [vmem:[%s731 + $0x1c] sm:$0xf]
      %v740 = vld [vmem:[%s731 + $0x20] sm:$0xf]
      %v741 = vld [vmem:[%s731 + $0x24] sm:$0xf]
      %v742 = vld [vmem:[%s731 + $0x28] sm:$0xf]
      %v743 = vld [vmem:[%s731 + $0x2c] sm:$0xf]
      %v746 = vunpack.c.l.b16 %v344
      %v747 = vunpack.c.l.b16 %v345
      %v748 = vpack.c.b16 %v747, %v746
      %v750 = vshrl.u32 %v748, 16
      %v752 = vshll.u32 %v748, 16
      %v754 = vrot.slane %v752, 1
      %v755 = vor.u32 %v750, %v754
      %v768 = vunpack.c.l.b16 %v732
      %v769 = vunpack.c.l.b16 %v733
      %v770 = vunpack.c.l.b16 %v734
      %v771 = vunpack.c.l.b16 %v735
      %v772 = vunpack.c.l.b16 %v736
      %v773 = vunpack.c.l.b16 %v737
      %v774 = vunpack.c.l.b16 %v738
      %v775 = vunpack.c.l.b16 %v739
      %v776 = vunpack.c.l.b16 %v740
      %v777 = vunpack.c.l.b16 %v741
      %v778 = vunpack.c.l.b16 %v742
      %v779 = vunpack.c.l.b16 %v743
      %v780 = vpack.c.b16 %v769, %v768
      %v781 = vpack.c.b16 %v771, %v770
      %v782 = vpack.c.b16 %v773, %v772
      %v783 = vpack.c.b16 %v775, %v774
      %v784 = vpack.c.b16 %v777, %v776
      %v785 = vpack.c.b16 %v779, %v778
      %v793 = vsel %vm421, %v755, 0
      %795 = vmatprep.subr.bf16.mxu0 0
      %796 = vmatpush1.bf16.msra.mxu0 %v780
      %797 = vmatprep.subr.bf16.mxu0 0
      %798 = vmatpush1.bf16.msra.mxu0 %v781
      %799 = vmatprep.subr.bf16.mxu0 0
      %800 = vmatpush1.bf16.msra.mxu0 %v782
      %801 = vmatprep.subr.bf16.mxu0 0
      %802 = vmatpush1.bf16.msra.mxu0 %v783
      %803 = vmatprep.subr.bf16.mxu0 0
      %804 = vmatpush1.bf16.msra.mxu0 %v784
      %805 = vmatprep.subr.bf16.mxu0 0
      %806 = vmatpush1.bf16.msra.mxu0 %v785
      %807 = vmatprep.subr.bf16.mxu0 0
      %808 = vmatpush1.bf16.msra.mxu0 0
      %809 = vmatprep.subr.bf16.mxu0 0
      %810 = vmatpush1.bf16.msra.mxu0 0
      %811 = vmatprep.subr.bf16.mxu0 0
      %812 = vmatpush1.bf16.msra.mxu0 0
      %813 = vmatprep.subr.bf16.mxu0 0
      %814 = vmatpush1.bf16.msra.mxu0 0
      %815 = vmatprep.subr.bf16.mxu0 0
      %816 = vmatpush1.bf16.msra.mxu0 0
      %817 = vmatprep.subr.bf16.mxu0 0
      %818 = vmatpush1.bf16.msra.mxu0 0
      %819 = vmatprep.subr.bf16.mxu0 0
      %820 = vmatpush1.bf16.msra.mxu0 0
      %821 = vmatprep.subr.bf16.mxu0 0
      %822 = vmatpush1.bf16.msra.mxu0 0
      %823 = vmatprep.subr.bf16.mxu0 0
      %824 = vmatpush1.bf16.msra.mxu0 0
      %825 = vmatprep.subr.bf16.mxu0 0
      %826 = vmatpush1.bf16.msra.mxu0 0
      %827 = vmatprep.mubr.bf16.mxu0 0
      %828 = vmatmul.mubr.bf16.gmra.mrb[0].mxu0 %v793
      %v829 = vpop.f32.mrb[0].mxu0
      %v830 = vadd.f32 0.0, %v829
      %v831 = vpop.f32.mrb[0].mxu0
      %v832 = vpop.f32.mrb[0].mxu0
      %v833 = vpop.f32.mrb[0].mxu0
      %834 = vdwg.mxu0
      %v835 = vadd.f32 %v730, %v830
      %s836 = scalar_lea.vmem %s3, 240
      %v837 = vld [vmem:[%s836] sm:$0xf]
      %v838 = vld [vmem:[%s836 + $0x4] sm:$0xf]
      %v839 = vld [vmem:[%s836 + $0x8] sm:$0xf]
      %v840 = vld [vmem:[%s836 + $0xc] sm:$0xf]
      %v841 = vld [vmem:[%s836 + $0x10] sm:$0xf]
      %v842 = vld [vmem:[%s836 + $0x14] sm:$0xf]
      %v843 = vld [vmem:[%s836 + $0x18] sm:$0xf]
      %v844 = vld [vmem:[%s836 + $0x1c] sm:$0xf]
      %v845 = vld [vmem:[%s836 + $0x20] sm:$0xf]
      %v846 = vld [vmem:[%s836 + $0x24] sm:$0xf]
      %v847 = vld [vmem:[%s836 + $0x28] sm:$0xf]
      %v848 = vld [vmem:[%s836 + $0x2c] sm:$0xf]
      %v849 = vrot.slane %v748, 1
      %v862 = vunpack.c.l.b16 %v837
      %v863 = vunpack.c.l.b16 %v838
      %v864 = vunpack.c.l.b16 %v839
      %v865 = vunpack.c.l.b16 %v840
      %v866 = vunpack.c.l.b16 %v841
      %v867 = vunpack.c.l.b16 %v842
      %v868 = vunpack.c.l.b16 %v843
      %v869 = vunpack.c.l.b16 %v844
      %v870 = vunpack.c.l.b16 %v845
      %v871 = vunpack.c.l.b16 %v846
      %v872 = vunpack.c.l.b16 %v847
      %v873 = vunpack.c.l.b16 %v848
      %v874 = vpack.c.b16 %v863, %v862
      %v875 = vpack.c.b16 %v865, %v864
      %v876 = vpack.c.b16 %v867, %v866
      %v877 = vpack.c.b16 %v869, %v868
      %v878 = vpack.c.b16 %v871, %v870
      %v879 = vpack.c.b16 %v873, %v872
      %v887 = vsel %vm421, %v849, 0
      %889 = vmatprep.subr.bf16.mxu0 0
      %890 = vmatpush1.bf16.msra.mxu0 %v874
      %891 = vmatprep.subr.bf16.mxu0 0
      %892 = vmatpush1.bf16.msra.mxu0 %v875
      %893 = vmatprep.subr.bf16.mxu0 0
      %894 = vmatpush1.bf16.msra.mxu0 %v876
      %895 = vmatprep.subr.bf16.mxu0 0
      %896 = vmatpush1.bf16.msra.mxu0 %v877
      %897 = vmatprep.subr.bf16.mxu0 0
      %898 = vmatpush1.bf16.msra.mxu0 %v878
      %899 = vmatprep.subr.bf16.mxu0 0
      %900 = vmatpush1.bf16.msra.mxu0 %v879
      %901 = vmatprep.subr.bf16.mxu0 0
      %902 = vmatpush1.bf16.msra.mxu0 0
      %903 = vmatprep.subr.bf16.mxu0 0
      %904 = vmatpush1.bf16.msra.mxu0 0
      %905 = vmatprep.subr.bf16.mxu0 0
      %906 = vmatpush1.bf16.msra.mxu0 0
      %907 = vmatprep.subr.bf16.mxu0 0
      %908 = vmatpush1.bf16.msra.mxu0 0
      %909 = vmatprep.subr.bf16.mxu0 0
      %910 = vmatpush1.bf16.msra.mxu0 0
      %911 = vmatprep.subr.bf16.mxu0 0
      %912 = vmatpush1.bf16.msra.mxu0 0
      %913 = vmatprep.subr.bf16.mxu0 0
      %914 = vmatpush1.bf16.msra.mxu0 0
      %915 = vmatprep.subr.bf16.mxu0 0
      %916 = vmatpush1.bf16.msra.mxu0 0
      %917 = vmatprep.subr.bf16.mxu0 0
      %918 = vmatpush1.bf16.msra.mxu0 0
      %919 = vmatprep.subr.bf16.mxu0 0
      %920 = vmatpush1.bf16.msra.mxu0 0
      %921 = vmatprep.mubr.bf16.mxu0 0
      %922 = vmatmul.mubr.bf16.gmra.mrb[0].mxu0 %v887
      %v923 = vpop.f32.mrb[0].mxu0
      %v924 = vadd.f32 0.0, %v923
      %v925 = vpop.f32.mrb[0].mxu0
      %v926 = vpop.f32.mrb[0].mxu0
      %v927 = vpop.f32.mrb[0].mxu0
      %928 = vdwg.mxu0
      %v929 = vadd.f32 %v835, %v924
      %s930 = scalar_lea.vmem %s3, 288
      %v931 = vld [vmem:[%s930] sm:$0xf]
      %v932 = vld [vmem:[%s930 + $0x4] sm:$0xf]
      %v933 = vld [vmem:[%s930 + $0x8] sm:$0xf]
      %v934 = vld [vmem:[%s930 + $0xc] sm:$0xf]
      %v935 = vld [vmem:[%s930 + $0x10] sm:$0xf]
      %v936 = vld [vmem:[%s930 + $0x14] sm:$0xf]
      %v937 = vld [vmem:[%s930 + $0x18] sm:$0xf]
      %v938 = vld [vmem:[%s930 + $0x1c] sm:$0xf]
      %v939 = vld [vmem:[%s930 + $0x20] sm:$0xf]
      %v940 = vld [vmem:[%s930 + $0x24] sm:$0xf]
      %v941 = vld [vmem:[%s930 + $0x28] sm:$0xf]
      %v942 = vld [vmem:[%s930 + $0x2c] sm:$0xf]
      %v955 = vunpack.c.l.b16 %v931
      %v956 = vunpack.c.l.b16 %v932
      %v957 = vunpack.c.l.b16 %v933
      %v958 = vunpack.c.l.b16 %v934
      %v959 = vunpack.c.l.b16 %v935
      %v960 = vunpack.c.l.b16 %v936
      %v961 = vunpack.c.l.b16 %v937
      %v962 = vunpack.c.l.b16 %v938
      %v963 = vunpack.c.l.b16 %v939
      %v964 = vunpack.c.l.b16 %v940
      %v965 = vunpack.c.l.b16 %v941
      %v966 = vunpack.c.l.b16 %v942
      %v967 = vpack.c.b16 %v956, %v955
      %v968 = vpack.c.b16 %v958, %v957
      %v969 = vpack.c.b16 %v960, %v959
      %v970 = vpack.c.b16 %v962, %v961
      %v971 = vpack.c.b16 %v964, %v963
      %v972 = vpack.c.b16 %v966, %v965
      %v980 = vsel %vm421, %v346, 0
      %982 = vmatprep.subr.bf16.mxu0 0
      %983 = vmatpush1.bf16.msra.mxu0 %v967
      %984 = vmatprep.subr.bf16.mxu0 0
      %985 = vmatpush1.bf16.msra.mxu0 %v968
      %986 = vmatprep.subr.bf16.mxu0 0
      %987 = vmatpush1.bf16.msra.mxu0 %v969
      %988 = vmatprep.subr.bf16.mxu0 0
      %989 = vmatpush1.bf16.msra.mxu0 %v970
      %990 = vmatprep.subr.bf16.mxu0 0
      %991 = vmatpush1.bf16.msra.mxu0 %v971
      %992 = vmatprep.subr.bf16.mxu0 0
      %993 = vmatpush1.bf16.msra.mxu0 %v972
      %994 = vmatprep.subr.bf16.mxu0 0
      %995 = vmatpush1.bf16.msra.mxu0 0
      %996 = vmatprep.subr.bf16.mxu0 0
      %997 = vmatpush1.bf16.msra.mxu0 0
      %998 = vmatprep.subr.bf16.mxu0 0
      %999 = vmatpush1.bf16.msra.mxu0 0
      %1000 = vmatprep.subr.bf16.mxu0 0
      %1001 = vmatpush1.bf16.msra.mxu0 0
      %1002 = vmatprep.subr.bf16.mxu0 0
      %1003 = vmatpush1.bf16.msra.mxu0 0
      %1004 = vmatprep.subr.bf16.mxu0 0
      %1005 = vmatpush1.bf16.msra.mxu0 0
      %1006 = vmatprep.subr.bf16.mxu0 0
      %1007 = vmatpush1.bf16.msra.mxu0 0
      %1008 = vmatprep.subr.bf16.mxu0 0
      %1009 = vmatpush1.bf16.msra.mxu0 0
      %1010 = vmatprep.subr.bf16.mxu0 0
      %1011 = vmatpush1.bf16.msra.mxu0 0
      %1012 = vmatprep.subr.bf16.mxu0 0
      %1013 = vmatpush1.bf16.msra.mxu0 0
      %1014 = vmatprep.mubr.bf16.mxu0 0
      %1015 = vmatmul.mubr.bf16.gmra.mrb[0].mxu0 %v980
      %v1016 = vpop.f32.mrb[0].mxu0
      %v1017 = vadd.f32 0.0, %v1016
      %v1018 = vpop.f32.mrb[0].mxu0
      %v1019 = vpop.f32.mrb[0].mxu0
      %v1020 = vpop.f32.mrb[0].mxu0
      %1021 = vdwg.mxu0
      %v1022 = vadd.f32 %v929, %v1017
      %s1023 = scalar_lea.vmem %s3, 336
      %v1024 = vld [vmem:[%s1023] sm:$0xf]
      %v1025 = vld [vmem:[%s1023 + $0x4] sm:$0xf]
      %v1026 = vld [vmem:[%s1023 + $0x8] sm:$0xf]
      %v1027 = vld [vmem:[%s1023 + $0xc] sm:$0xf]
      %v1028 = vld [vmem:[%s1023 + $0x10] sm:$0xf]
      %v1029 = vld [vmem:[%s1023 + $0x14] sm:$0xf]
      %v1030 = vld [vmem:[%s1023 + $0x18] sm:$0xf]
      %v1031 = vld [vmem:[%s1023 + $0x1c] sm:$0xf]
      %v1032 = vld [vmem:[%s1023 + $0x20] sm:$0xf]
      %v1033 = vld [vmem:[%s1023 + $0x24] sm:$0xf]
      %v1034 = vld [vmem:[%s1023 + $0x28] sm:$0xf]
      %v1035 = vld [vmem:[%s1023 + $0x2c] sm:$0xf]
      %v1038 = vunpack.c.l.b16 %v346
      %v1039 = vunpack.c.l.b16 %v347
      %v1040 = vpack.c.b16 %v1039, %v1038
      %v1042 = vshrl.u32 %v1040, 16
      %v1044 = vshll.u32 %v1040, 16
      %v1046 = vrot.slane %v1044, 1
      %v1047 = vor.u32 %v1042, %v1046
      %v1060 = vunpack.c.l.b16 %v1024
      %v1061 = vunpack.c.l.b16 %v1025
      %v1062 = vunpack.c.l.b16 %v1026
      %v1063 = vunpack.c.l.b16 %v1027
      %v1064 = vunpack.c.l.b16 %v1028
      %v1065 = vunpack.c.l.b16 %v1029
      %v1066 = vunpack.c.l.b16 %v1030
      %v1067 = vunpack.c.l.b16 %v1031
      %v1068 = vunpack.c.l.b16 %v1032
      %v1069 = vunpack.c.l.b16 %v1033
      %v1070 = vunpack.c.l.b16 %v1034
      %v1071 = vunpack.c.l.b16 %v1035
      %v1072 = vpack.c.b16 %v1061, %v1060
      %v1073 = vpack.c.b16 %v1063, %v1062
      %v1074 = vpack.c.b16 %v1065, %v1064
      %v1075 = vpack.c.b16 %v1067, %v1066
      %v1076 = vpack.c.b16 %v1069, %v1068
      %v1077 = vpack.c.b16 %v1071, %v1070
      %v1085 = vsel %vm421, %v1047, 0
      %1087 = vmatprep.subr.bf16.mxu0 0
      %1088 = vmatpush1.bf16.msra.mxu0 %v1072
      %1089 = vmatprep.subr.bf16.mxu0 0
      %1090 = vmatpush1.bf16.msra.mxu0 %v1073
      %1091 = vmatprep.subr.bf16.mxu0 0
      %1092 = vmatpush1.bf16.msra.mxu0 %v1074
      %1093 = vmatprep.subr.bf16.mxu0 0
      %1094 = vmatpush1.bf16.msra.mxu0 %v1075
      %1095 = vmatprep.subr.bf16.mxu0 0
      %1096 = vmatpush1.bf16.msra.mxu0 %v1076
      %1097 = vmatprep.subr.bf16.mxu0 0
      %1098 = vmatpush1.bf16.msra.mxu0 %v1077
      %1099 = vmatprep.subr.bf16.mxu0 0
      %1100 = vmatpush1.bf16.msra.mxu0 0
      %1101 = vmatprep.subr.bf16.mxu0 0
      %1102 = vmatpush1.bf16.msra.mxu0 0
      %1103 = vmatprep.subr.bf16.mxu0 0
      %1104 = vmatpush1.bf16.msra.mxu0 0
      %1105 = vmatprep.subr.bf16.mxu0 0
      %1106 = vmatpush1.bf16.msra.mxu0 0
      %1107 = vmatprep.subr.bf16.mxu0 0
      %1108 = vmatpush1.bf16.msra.mxu0 0
      %1109 = vmatprep.subr.bf16.mxu0 0
      %1110 = vmatpush1.bf16.msra.mxu0 0
      %1111 = vmatprep.subr.bf16.mxu0 0
      %1112 = vmatpush1.bf16.msra.mxu0 0
      %1113 = vmatprep.subr.bf16.mxu0 0
      %1114 = vmatpush1.bf16.msra.mxu0 0
      %1115 = vmatprep.subr.bf16.mxu0 0
      %1116 = vmatpush1.bf16.msra.mxu0 0
      %1117 = vmatprep.subr.bf16.mxu0 0
      %1118 = vmatpush1.bf16.msra.mxu0 0
      %1119 = vmatprep.mubr.bf16.mxu0 0
      %1120 = vmatmul.mubr.bf16.gmra.mrb[0].mxu0 %v1085
      %v1121 = vpop.f32.mrb[0].mxu0
      %v1122 = vadd.f32 0.0, %v1121
      %v1123 = vpop.f32.mrb[0].mxu0
      %v1124 = vpop.f32.mrb[0].mxu0
      %v1125 = vpop.f32.mrb[0].mxu0
      %1126 = vdwg.mxu0
      %v1127 = vadd.f32 %v1022, %v1122
      %s1128 = scalar_lea.vmem %s3, 384
      %v1129 = vld [vmem:[%s1128] sm:$0xf]
      %v1130 = vld [vmem:[%s1128 + $0x4] sm:$0xf]
      %v1131 = vld [vmem:[%s1128 + $0x8] sm:$0xf]
      %v1132 = vld [vmem:[%s1128 + $0xc] sm:$0xf]
      %v1133 = vld [vmem:[%s1128 + $0x10] sm:$0xf]
      %v1134 = vld [vmem:[%s1128 + $0x14] sm:$0xf]
      %v1135 = vld [vmem:[%s1128 + $0x18] sm:$0xf]
      %v1136 = vld [vmem:[%s1128 + $0x1c] sm:$0xf]
      %v1137 = vld [vmem:[%s1128 + $0x20] sm:$0xf]
      %v1138 = vld [vmem:[%s1128 + $0x24] sm:$0xf]
      %v1139 = vld [vmem:[%s1128 + $0x28] sm:$0xf]
      %v1140 = vld [vmem:[%s1128 + $0x2c] sm:$0xf]
      %v1141 = vrot.slane %v1040, 1
      %v1154 = vunpack.c.l.b16 %v1129
      %v1155 = vunpack.c.l.b16 %v1130
      %v1156 = vunpack.c.l.b16 %v1131
      %v1157 = vunpack.c.l.b16 %v1132
      %v1158 = vunpack.c.l.b16 %v1133
      %v1159 = vunpack.c.l.b16 %v1134
      %v1160 = vunpack.c.l.b16 %v1135
      %v1161 = vunpack.c.l.b16 %v1136
      %v1162 = vunpack.c.l.b16 %v1137
      %v1163 = vunpack.c.l.b16 %v1138
      %v1164 = vunpack.c.l.b16 %v1139
      %v1165 = vunpack.c.l.b16 %v1140
      %v1166 = vpack.c.b16 %v1155, %v1154
      %v1167 = vpack.c.b16 %v1157, %v1156
      %v1168 = vpack.c.b16 %v1159, %v1158
      %v1169 = vpack.c.b16 %v1161, %v1160
      %v1170 = vpack.c.b16 %v1163, %v1162
      %v1171 = vpack.c.b16 %v1165, %v1164
      %v1179 = vsel %vm421, %v1141, 0
      %1181 = vmatprep.subr.bf16.mxu0 0
      %1182 = vmatpush1.bf16.msra.mxu0 %v1166
      %1183 = vmatprep.subr.bf16.mxu0 0
      %1184 = vmatpush1.bf16.msra.mxu0 %v1167
      %1185 = vmatprep.subr.bf16.mxu0 0
      %1186 = vmatpush1.bf16.msra.mxu0 %v1168
      %1187 = vmatprep.subr.bf16.mxu0 0
      %1188 = vmatpush1.bf16.msra.mxu0 %v1169
      %1189 = vmatprep.subr.bf16.mxu0 0
      %1190 = vmatpush1.bf16.msra.mxu0 %v1170
      %1191 = vmatprep.subr.bf16.mxu0 0
      %1192 = vmatpush1.bf16.msra.mxu0 %v1171
      %1193 = vmatprep.subr.bf16.mxu0 0
      %1194 = vmatpush1.bf16.msra.mxu0 0
      %1195 = vmatprep.subr.bf16.mxu0 0
      %1196 = vmatpush1.bf16.msra.mxu0 0
      %1197 = vmatprep.subr.bf16.mxu0 0
      %1198 = vmatpush1.bf16.msra.mxu0 0
      %1199 = vmatprep.subr.bf16.mxu0 0
      %1200 = vmatpush1.bf16.msra.mxu0 0
      %1201 = vmatprep.subr.bf16.mxu0 0
      %1202 = vmatpush1.bf16.msra.mxu0 0
      %1203 = vmatprep.subr.bf16.mxu0 0
      %1204 = vmatpush1.bf16.msra.mxu0 0
      %1205 = vmatprep.subr.bf16.mxu0 0
      %1206 = vmatpush1.bf16.msra.mxu0 0
      %1207 = vmatprep.subr.bf16.mxu0 0
      %1208 = vmatpush1.bf16.msra.mxu0 0
      %1209 = vmatprep.subr.bf16.mxu0 0
      %1210 = vmatpush1.bf16.msra.mxu0 0
      %1211 = vmatprep.subr.bf16.mxu0 0
      %1212 = vmatpush1.bf16.msra.mxu0 0
      %1213 = vmatprep.mubr.bf16.mxu0 0
      %1214 = vmatmul.mubr.bf16.gmra.mrb[0].mxu0 %v1179
      %v1215 = vpop.f32.mrb[0].mxu0
      %v1216 = vadd.f32 0.0, %v1215
      %v1217 = vpop.f32.mrb[0].mxu0
      %v1218 = vpop.f32.mrb[0].mxu0
      %v1219 = vpop.f32.mrb[0].mxu0
      %1220 = vdwg.mxu0
      %v1221 = vadd.f32 %v1127, %v1216
      %v1222 = vld [vmem:[%s4] sm:$0x1]
      %v1224 = vlaneseq
      %v1225 = vshrl.u32 %v1224, 7
      %v1226 = vsub.s32 0, %v1225
      %v1227 = vrot.slane %v1222, %v1226
      %v1229 = vadd.f32 %v1221, %v1227
      %vm1230 = vcmask 97280
      %1231 = vst.msk [vmem:[%s340] sm:$0xff] %vm1230, %v1229
      %p1232 = scmp.lt.s32.totalorder %s20, 1
      %s1233 = scalar_select %p1232, %s20, 1
      %p1234 = scmp.lt.s32.totalorder %s21, 7
      %s1235 = scalar_select %p1234, %s21, 7
      %s1236 = smul.addr %s1233, 8
      %s1237 = sadd.s32 %s1235, %s1236
      %s1238 = smul.addr %s1237, 8
      %s1239 = scalar_lea.vmem %s5, %s1238
      // Predicated region
      $region41: #{depth_aware_fe.5} parent=39 // pred_check
        %p1240 = pneg %p178
      $region42: #{depth_aware_fe.5} parent=39 // pred_check_branch
        %1242 = sbr.rel (%p1240) target = $region44
      $region43: #{depth_aware_fe.5} parent=39 // pred_region
        _
      $region44: #{depth_aware_fe.5} parent=39 // pred_fallthru
        _
    $region40: #{depth_aware_fe.5} parent=5 // pred_fallthru
      _
    %p1243 = scmp.le.s32.totalorder 2, %s11
    // Predicated region
    $region45: #{depth_aware_fe.5} parent=5 // pred_check
      %p1244 = pneg %p1243
    $region46: #{depth_aware_fe.5} parent=5 // pred_check_branch
      %1246 = sbr.rel (%p1244) target = $region48
    $region47: #{depth_aware_fe.5} parent=5 // pred_region
      %s1247 = ssub.s32 %s11, 2
      // Predicated region
      $region49: #{depth_aware_fe.5} parent=47 // pred_check
        %p1248 = pneg %p184
      $region50: #{depth_aware_fe.5} parent=47 // pred_check_branch
        %1250 = sbr.rel (%p1248) target = $region52
      $region51: #{depth_aware_fe.5} parent=47 // pred_region
        %p1251 = scmp.lt.s32.totalorder %s22, 1
        %s1252 = scalar_select %p1251, %s22, 1
        %p1253 = scmp.lt.s32.totalorder %s23, 7
        %s1254 = scalar_select %p1253, %s23, 7
        %s1255 = smul.addr %s1252, 8
        %s1256 = sadd.s32 %s1254, %s1255
        %s1257 = smul.addr %s1256, 8
        %s1258 = scalar_lea.vmem %s5, %s1257
      $region52: #{depth_aware_fe.5} parent=47 // pred_fallthru
        _
    $region48: #{depth_aware_fe.5} parent=5 // pred_fallthru
      _
  $region6: #{depth_aware_fe.5} parent=0 // loop_footer
    %s15 = sadd.s32 1, %s11
  $region7: #{depth_aware_fe.5} parent=0 // loop_footer_branch
    %10 = sbr.rel target = $region3
  $region8: #{depth_aware_fe.5} parent=0 // loop_exit
    _

// kernel: depth_aware_fe.4
$region0: #{depth_aware_fe.4}
  #allocation0 [shape = 'u32[]', space=smem, size = 0x4, offset = 0x4, fixed_abs, tag = 'smem constant byte address 0x4 - core index']
  #allocation1 [shape = 'u32[144,128]{1,0:T(1,128)}', space=vmem, size = 0x12000, scoped, tag = 'internal scratch']
  %s0 = inlined_call_operand.vmem [shape: bf16[2,18,18,256], index: 0, kind: input, shape index: {}, may-alias: {0,1,2}]
  %s1 = inlined_call_operand.vmem [shape: bf16[2,18,18,256], index: 1, kind: input, shape index: {}, may-alias: {0,1,2}]
  %s2 = inlined_call_operand.vmem [shape: bf16[2,18,18,256], index: 2, kind: input, shape index: {}, may-alias: {0,1,2}]
  %s3 = inlined_call_operand.vmem [shape: bf16[9,256,128], index: 3, kind: input, shape index: {}]
  %s4 = inlined_call_operand.vmem [shape: f32[1,128], index: 4, kind: input, shape index: {}]
  %s5 = inlined_call_operand.vmem [shape: bf16[128,96], index: 5, kind: input, shape index: {}]
  %s6 = inlined_call_operand.vmem [shape: f32[1,96], index: 6, kind: input, shape index: {}]
  %s7 = inlined_call_operand.vmem [shape: f32[2,16,16,96], index: 7, kind: output, shape index: {}]
  %s8 = sld [smem:[#allocation0]]
  $region61: #{depth_aware_fe.4} parent=0
    _
  %s10 = ssub.s32 1, %s8
  %s11 = scalar_select 0, %s10, %s8
  loop: start=0, step=1, limit=34
  $region2: #{depth_aware_fe.4} parent=0 // loop_pre_header
    _
  $region3: #{depth_aware_fe.4} parent=0 // loop_header
    %s13 = sphi 0, %s17
    %p14 = scmp.ge.s32.totalorder %s13, 34
    %s20 = sphi 0, %s32
    %s21 = sphi 0, %s28
    %s22 = sphi 0, %s20
    %s23 = sphi 0, %s21
    %s24 = sphi 0, %s22
    %s25 = sphi 0, %s23
    %s37 = sphi 0, %s39
    %s40 = sphi 0, %s37
    %s41 = sphi 0, %s40
    %s57 = sphi 0, %s41
    %s67 = sphi 0, %s69
    %s70 = sphi 0, %s67
    %s71 = sphi 0, %s70
    %s87 = sphi 0, %s71
    %s97 = sphi 0, %s99
    %s100 = sphi 0, %s97
    %s101 = sphi 0, %s100
    %s117 = sphi 0, %s101
    %s121 = sphi 0, %s121
    %s123 = sphi 0, %s121
    %s124 = sphi 0, %s123
    %s138 = sphi 0, %s124
    %s142 = sphi 0, %s142
    %s144 = sphi 0, %s142
    %s145 = sphi 0, %s144
    %s159 = sphi 0, %s145
    %s163 = sphi 0, %s163
    %s165 = sphi 0, %s163
    %s166 = sphi 0, %s165
    %s180 = sphi 0, %s166
    %s184 = sphi 0, %s184
    %s186 = sphi 0, %s184
    %s187 = sphi 0, %s186
    %s201 = sphi 0, %s187
    %s209 = sphi 0, %s211
    %s212 = sphi 0, %s209
    %s213 = sphi 0, %s212
    %s229 = sphi 0, %s213
  $region4: #{depth_aware_fe.4} parent=0 // loop_header_branch
    %16 = sbr.rel (%p14) target = $region8
  $region5: #{depth_aware_fe.4} parent=0 // loop_body
    %s18 = ssub.s32 %s13, 1
    %s19 = ssub.s32 %s13, 2
    %s26 = sadd.s32 1, %s21
    %p27 = scmp.ge.s32.totalorder %s26, 16
    %s28 = scalar_select %p27, 0, %s26
    %s29 = sadd.s32 1, %s20
    %s30 = scalar_select %p27, %s29, %s20
    %p31 = scmp.ge.s32.totalorder %s30, 2
    %s32 = scalar_select %p31, 0, %s30
    %s33 = ssub.s32 %s20, %s32
    %s34 = ssub.s32 %s21, %s28
    %s35 = sor.u32 %s33, %s34
    %p36 = scmp.eq.s32.totalorder %s35, 0
    %s38 = sadd.s32 %s37, 1
    %s39 = scalar_select %p36, %s37, %s38
    %p42 = pneg %p36
    %p43 = scmp.eq.s32.totalorder %s13, 31
    %p44 = por %p42, %p43
    %p45 = scmp.ne.s32.totalorder %s37, %s40
    %p46 = scmp.eq.s32.totalorder %s13, 0
    %p47 = por %p45, %p46
    %p48 = scmp.ne.s32.totalorder %s37, %s40
    %p49 = scmp.eq.s32.totalorder %s18, 31
    %p50 = por %p48, %p49
    %p51 = scmp.ne.s32.totalorder %s40, %s41
    %p52 = scmp.eq.s32.totalorder %s18, 0
    %p53 = por %p51, %p52
    %p54 = scmp.ne.s32.totalorder %s40, %s41
    %p55 = scmp.eq.s32.totalorder %s19, 31
    %p56 = por %p54, %p55
    %p58 = scmp.ne.s32.totalorder %s41, %s57
    %p59 = scmp.eq.s32.totalorder %s19, 0
    %p60 = por %p58, %p59
    %s61 = sadd.s32 %s21, 1
    %s62 = sadd.s32 %s28, 1
    %s63 = ssub.s32 %s20, %s32
    %s64 = ssub.s32 %s61, %s62
    %s65 = sor.u32 %s63, %s64
    %p66 = scmp.eq.s32.totalorder %s65, 0
    %s68 = sadd.s32 %s67, 1
    %s69 = scalar_select %p66, %s67, %s68
    %p72 = pneg %p66
    %p73 = scmp.eq.s32.totalorder %s13, 31
    %p74 = por %p72, %p73
    %p75 = scmp.ne.s32.totalorder %s67, %s70
    %p76 = scmp.eq.s32.totalorder %s13, 0
    %p77 = por %p75, %p76
    %p78 = scmp.ne.s32.totalorder %s67, %s70
    %p79 = scmp.eq.s32.totalorder %s18, 31
    %p80 = por %p78, %p79
    %p81 = scmp.ne.s32.totalorder %s70, %s71
    %p82 = scmp.eq.s32.totalorder %s18, 0
    %p83 = por %p81, %p82
    %p84 = scmp.ne.s32.totalorder %s70, %s71
    %p85 = scmp.eq.s32.totalorder %s19, 31
    %p86 = por %p84, %p85
    %p88 = scmp.ne.s32.totalorder %s71, %s87
    %p89 = scmp.eq.s32.totalorder %s19, 0
    %p90 = por %p88, %p89
    %s91 = sadd.s32 %s21, 2
    %s92 = sadd.s32 %s28, 2
    %s93 = ssub.s32 %s20, %s32
    %s94 = ssub.s32 %s91, %s92
    %s95 = sor.u32 %s93, %s94
    %p96 = scmp.eq.s32.totalorder %s95, 0
    %s98 = sadd.s32 %s97, 1
    %s99 = scalar_select %p96, %s97, %s98
    %p102 = pneg %p96
    %p103 = scmp.eq.s32.totalorder %s13, 31
    %p104 = por %p102, %p103
    %p105 = scmp.ne.s32.totalorder %s97, %s100
    %p106 = scmp.eq.s32.totalorder %s13, 0
    %p107 = por %p105, %p106
    %p108 = scmp.ne.s32.totalorder %s97, %s100
    %p109 = scmp.eq.s32.totalorder %s18, 31
    %p110 = por %p108, %p109
    %p111 = scmp.ne.s32.totalorder %s100, %s101
    %p112 = scmp.eq.s32.totalorder %s18, 0
    %p113 = por %p111, %p112
    %p114 = scmp.ne.s32.totalorder %s100, %s101
    %p115 = scmp.eq.s32.totalorder %s19, 31
    %p116 = por %p114, %p115
    %p118 = scmp.ne.s32.totalorder %s101, %s117
    %p119 = scmp.eq.s32.totalorder %s19, 0
    %p120 = por %p118, %p119
    %s122 = sadd.s32 %s121, 1
    %p125 = scmp.eq.s32.totalorder %s13, 31
    %p126 = scmp.ne.s32.totalorder %s121, %s123
    %p127 = scmp.eq.s32.totalorder %s13, 0
    %p128 = por %p126, %p127
    %p129 = scmp.ne.s32.totalorder %s121, %s123
    %p130 = scmp.eq.s32.totalorder %s18, 31
    %p131 = por %p129, %p130
    %p132 = scmp.ne.s32.totalorder %s123, %s124
    %p133 = scmp.eq.s32.totalorder %s18, 0
    %p134 = por %p132, %p133
    %p135 = scmp.ne.s32.totalorder %s123, %s124
    %p136 = scmp.eq.s32.totalorder %s19, 31
    %p137 = por %p135, %p136
    %p139 = scmp.ne.s32.totalorder %s124, %s138
    %p140 = scmp.eq.s32.totalorder %s19, 0
    %p141 = por %p139, %p140
    %s143 = sadd.s32 %s142, 1
    %p146 = scmp.eq.s32.totalorder %s13, 31
    %p147 = scmp.ne.s32.totalorder %s142, %s144
    %p148 = scmp.eq.s32.totalorder %s13, 0
    %p149 = por %p147, %p148
    %p150 = scmp.ne.s32.totalorder %s142, %s144
    %p151 = scmp.eq.s32.totalorder %s18, 31
    %p152 = por %p150, %p151
    %p153 = scmp.ne.s32.totalorder %s144, %s145
    %p154 = scmp.eq.s32.totalorder %s18, 0
    %p155 = por %p153, %p154
    %p156 = scmp.ne.s32.totalorder %s144, %s145
    %p157 = scmp.eq.s32.totalorder %s19, 31
    %p158 = por %p156, %p157
    %p160 = scmp.ne.s32.totalorder %s145, %s159
    %p161 = scmp.eq.s32.totalorder %s19, 0
    %p162 = por %p160, %p161
    %s164 = sadd.s32 %s163, 1
    %p167 = scmp.eq.s32.totalorder %s13, 31
    %p168 = scmp.ne.s32.totalorder %s163, %s165
    %p169 = scmp.eq.s32.totalorder %s13, 0
    %p170 = por %p168, %p169
    %p171 = scmp.ne.s32.totalorder %s163, %s165
    %p172 = scmp.eq.s32.totalorder %s18, 31
    %p173 = por %p171, %p172
    %p174 = scmp.ne.s32.totalorder %s165, %s166
    %p175 = scmp.eq.s32.totalorder %s18, 0
    %p176 = por %p174, %p175
    %p177 = scmp.ne.s32.totalorder %s165, %s166
    %p178 = scmp.eq.s32.totalorder %s19, 31
    %p179 = por %p177, %p178
    %p181 = scmp.ne.s32.totalorder %s166, %s180
    %p182 = scmp.eq.s32.totalorder %s19, 0
    %p183 = por %p181, %p182
    %s185 = sadd.s32 %s184, 1
    %p188 = scmp.eq.s32.totalorder %s13, 31
    %p189 = scmp.ne.s32.totalorder %s184, %s186
    %p190 = scmp.eq.s32.totalorder %s13, 0
    %p191 = por %p189, %p190
    %p192 = scmp.ne.s32.totalorder %s184, %s186
    %p193 = scmp.eq.s32.totalorder %s18, 31
    %p194 = por %p192, %p193
    %p195 = scmp.ne.s32.totalorder %s186, %s187
    %p196 = scmp.eq.s32.totalorder %s18, 0
    %p197 = por %p195, %p196
    %p198 = scmp.ne.s32.totalorder %s186, %s187
    %p199 = scmp.eq.s32.totalorder %s19, 31
    %p200 = por %p198, %p199
    %p202 = scmp.ne.s32.totalorder %s187, %s201
    %p203 = scmp.eq.s32.totalorder %s19, 0
    %p204 = por %p202, %p203
    %s205 = ssub.s32 %s20, %s32
    %s206 = ssub.s32 %s21, %s28
    %s207 = sor.u32 %s205, %s206
    %p208 = scmp.eq.s32.totalorder %s207, 0
    %s210 = sadd.s32 %s209, 1
    %s211 = scalar_select %p208, %s209, %s210
    %p214 = pneg %p208
    %p215 = scmp.eq.s32.totalorder %s13, 31
    %p216 = por %p214, %p215
    %p217 = scmp.ne.s32.totalorder %s209, %s212
    %p218 = scmp.eq.s32.totalorder %s13, 0
    %p219 = por %p217, %p218
    %p220 = scmp.ne.s32.totalorder %s209, %s212
    %p221 = scmp.eq.s32.totalorder %s18, 31
    %p222 = por %p220, %p221
    %p223 = scmp.ne.s32.totalorder %s212, %s213
    %p224 = scmp.eq.s32.totalorder %s18, 0
    %p225 = por %p223, %p224
    %p226 = scmp.ne.s32.totalorder %s212, %s213
    %p227 = scmp.eq.s32.totalorder %s19, 31
    %p228 = por %p226, %p227
    %p230 = scmp.ne.s32.totalorder %s213, %s229
    %p231 = scmp.eq.s32.totalorder %s19, 0
    %p232 = por %p230, %p231
    %p233 = scmp.le.s32.totalorder 1, %s13
    %p234 = scmp.lt.s32.totalorder %s13, 33
    %p235 = pnand %p233, %p234
    %p236 = pneg %p235
    // Predicated region
    $region9: #{depth_aware_fe.4} parent=5 // pred_check
      _
    $region10: #{depth_aware_fe.4} parent=5 // pred_check_branch
      %238 = sbr.rel (%p235) target = $region12
    $region11: #{depth_aware_fe.4} parent=5 // pred_region
      %s239 = ssub.s32 %s13, 1
      // Predicated region
      $region13: #{depth_aware_fe.4} parent=11 // pred_check
        %p240 = pneg %p134
      $region14: #{depth_aware_fe.4} parent=11 // pred_check_branch
        %242 = sbr.rel (%p240) target = $region16
      $region15: #{depth_aware_fe.4} parent=11 // pred_region
        _
      $region16: #{depth_aware_fe.4} parent=11 // pred_fallthru
        _
      // Predicated region
      $region17: #{depth_aware_fe.4} parent=11 // pred_check
        %p243 = pneg %p155
      $region18: #{depth_aware_fe.4} parent=11 // pred_check_branch
        %245 = sbr.rel (%p243) target = $region20
      $region19: #{depth_aware_fe.4} parent=11 // pred_region
        _
      $region20: #{depth_aware_fe.4} parent=11 // pred_fallthru
        _
      // Predicated region
      $region21: #{depth_aware_fe.4} parent=11 // pred_check
        %p246 = pneg %p176
      $region22: #{depth_aware_fe.4} parent=11 // pred_check_branch
        %248 = sbr.rel (%p246) target = $region24
      $region23: #{depth_aware_fe.4} parent=11 // pred_region
        _
      $region24: #{depth_aware_fe.4} parent=11 // pred_fallthru
        _
      // Predicated region
      $region25: #{depth_aware_fe.4} parent=11 // pred_check
        %p249 = pneg %p197
      $region26: #{depth_aware_fe.4} parent=11 // pred_check_branch
        %251 = sbr.rel (%p249) target = $region28
      $region27: #{depth_aware_fe.4} parent=11 // pred_region
        _
      $region28: #{depth_aware_fe.4} parent=11 // pred_fallthru
        _
    $region12: #{depth_aware_fe.4} parent=5 // pred_fallthru
      _
    %p252 = scmp.lt.s32.totalorder %s13, 32
    // Predicated region
    $region29: #{depth_aware_fe.4} parent=5 // pred_check
      %p253 = pneg %p252
    $region30: #{depth_aware_fe.4} parent=5 // pred_check_branch
      %255 = sbr.rel (%p253) target = $region32
    $region31: #{depth_aware_fe.4} parent=5 // pred_region
      // Predicated region
      $region33: #{depth_aware_fe.4} parent=31 // pred_check
        %p256 = pneg %p47
      $region34: #{depth_aware_fe.4} parent=31 // pred_check_branch
        %258 = sbr.rel (%p256) target = $region36
      $region35: #{depth_aware_fe.4} parent=31 // pred_region
        %p259 = scmp.lt.s32.totalorder %s20, 1
        %s260 = scalar_select %p259, %s20, 1
        %p261 = scmp.lt.s32.totalorder %s21, 17
        %s262 = scalar_select %p261, %s21, 17
        %s263 = smul.addr %s262, 6
        %s264 = smul.addr %s260, 108
        %s265 = sadd.s32 %s263, %s264
        %s266 = smul.addr %s265, 4
        %s267 = scalar_lea.vmem %s0, %s266
      $region36: #{depth_aware_fe.4} parent=31 // pred_fallthru
        _
      // Predicated region
      $region37: #{depth_aware_fe.4} parent=31 // pred_check
        %p268 = pneg %p77
      $region38: #{depth_aware_fe.4} parent=31 // pred_check_branch
        %270 = sbr.rel (%p268) target = $region40
      $region39: #{depth_aware_fe.4} parent=31 // pred_region
        %s271 = sadd.s32 %s21, 1
        %p272 = scmp.lt.s32.totalorder %s20, 1
        %s273 = scalar_select %p272, %s20, 1
        %p274 = scmp.lt.s32.totalorder %s271, 17
        %s275 = scalar_select %p274, %s271, 17
        %s276 = smul.addr %s275, 6
        %s277 = smul.addr %s273, 108
        %s278 = sadd.s32 %s276, %s277
        %s279 = smul.addr %s278, 4
        %s280 = scalar_lea.vmem %s1, %s279
        %s281 = sadd.s32 %s21, 1
      $region40: #{depth_aware_fe.4} parent=31 // pred_fallthru
        _
      // Predicated region
      $region41: #{depth_aware_fe.4} parent=31 // pred_check
        %p282 = pneg %p107
      $region42: #{depth_aware_fe.4} parent=31 // pred_check_branch
        %284 = sbr.rel (%p282) target = $region44
      $region43: #{depth_aware_fe.4} parent=31 // pred_region
        %s285 = sadd.s32 %s21, 2
        %p286 = scmp.lt.s32.totalorder %s20, 1
        %s287 = scalar_select %p286, %s20, 1
        %p288 = scmp.lt.s32.totalorder %s285, 17
        %s289 = scalar_select %p288, %s285, 17
        %s290 = smul.addr %s289, 6
        %s291 = smul.addr %s287, 108
        %s292 = sadd.s32 %s290, %s291
        %s293 = smul.addr %s292, 4
        %s294 = scalar_lea.vmem %s2, %s293
        %s295 = sadd.s32 %s21, 2
      $region44: #{depth_aware_fe.4} parent=31 // pred_fallthru
        _
    $region32: #{depth_aware_fe.4} parent=5 // pred_fallthru
      _
    %p296 = scmp.le.s32.totalorder 1, %s13
    %p297 = scmp.lt.s32.totalorder %s13, 33
    %p298 = pnand %p296, %p297
    %p299 = pneg %p298
    // Predicated region
    $region45: #{depth_aware_fe.4} parent=5 // pred_check
      _
    $region46: #{depth_aware_fe.4} parent=5 // pred_check_branch
      %301 = sbr.rel (%p298) target = $region48
    $region47: #{depth_aware_fe.4} parent=5 // pred_region
      %s302 = ssub.s32 %s13, 1
      %p303 = scmp.lt.s32.totalorder %s22, 1
      %s304 = scalar_select %p303, %s22, 1
      %p305 = scmp.lt.s32.totalorder %s23, 17
      %s306 = scalar_select %p305, %s23, 17
      %s307 = smul.addr %s306, 6
      %s308 = smul.addr %s304, 108
      %s309 = sadd.s32 %s307, %s308
      %s310 = smul.addr %s309, 4
      %s311 = scalar_lea.vmem %s0, %s310
      %p312 = pneg %p53
      %p313 = pneg %p50
      %s314 = sadd.s32 %s23, 1
      %p315 = scmp.lt.s32.totalorder %s22, 1
      %s316 = scalar_select %p315, %s22, 1
      %p317 = scmp.lt.s32.totalorder %s314, 17
      %s318 = scalar_select %p317, %s314, 17
      %s319 = smul.addr %s318, 6
      %s320 = smul.addr %s316, 108
      %s321 = sadd.s32 %s319, %s320
      %s322 = smul.addr %s321, 4
      %s323 = scalar_lea.vmem %s1, %s322
      %p324 = pneg %p83
      %p325 = pneg %p80
      %s326 = sadd.s32 %s23, 2
      %p327 = scmp.lt.s32.totalorder %s22, 1
      %s328 = scalar_select %p327, %s22, 1
      %p329 = scmp.lt.s32.totalorder %s326, 17
      %s330 = scalar_select %p329, %s326, 17
      %s331 = smul.addr %s330, 6
      %s332 = smul.addr %s328, 108
      %s333 = sadd.s32 %s331, %s332
      %s334 = smul.addr %s333, 4
      %s335 = scalar_lea.vmem %s2, %s334
      %p336 = pneg %p113
      %p337 = pneg %p110
      %p338 = pneg %p134
      %p339 = pneg %p131
      %p340 = pneg %p155
      %p341 = pneg %p152
      %p342 = pneg %p176
      %p343 = pneg %p173
      %p344 = pneg %p197
      %p345 = pneg %p194
      %p346 = pneg %p225
      %p347 = pneg %p222
      %p348 = scmp.lt.s32.totalorder %s22, 1
      %s349 = scalar_select %p348, %s22, 1
      %p350 = scmp.lt.s32.totalorder %s23, 15
      %s351 = scalar_select %p350, %s23, 15
      %s352 = smul.addr %s351, 2
      %s353 = smul.addr %s349, 32
      %s354 = sadd.s32 %s352, %s353
      %s355 = smul.addr %s354, 8
      %s356 = scalar_lea.vmem %s7, %s355
      %p357 = scmp.lt.s32.totalorder %s22, 1
      %s358 = scalar_select %p357, %s22, 1
      %p359 = scmp.lt.s32.totalorder %s23, 17
      %s360 = scalar_select %p359, %s23, 17
      %s361 = smul.addr %s360, 6
      %s362 = smul.addr %s358, 108
      %s363 = sadd.s32 %s361, %s362
      %s364 = smul.addr %s363, 4
      %s365 = scalar_lea.vmem %s0, %s364
      %s366 = sadd.s32 %s23, 1
      %p367 = scmp.lt.s32.totalorder %s22, 1
      %s368 = scalar_select %p367, %s22, 1
      %p369 = scmp.lt.s32.totalorder %s366, 17
      %s370 = scalar_select %p369, %s366, 17
      %s371 = smul.addr %s370, 6
      %s372 = smul.addr %s368, 108
      %s373 = sadd.s32 %s371, %s372
      %s374 = smul.addr %s373, 4
      %s375 = scalar_lea.vmem %s1, %s374
      %s376 = sadd.s32 %s23, 1
      %s377 = sadd.s32 %s23, 2
      %p378 = scmp.lt.s32.totalorder %s22, 1
      %s379 = scalar_select %p378, %s22, 1
      %p380 = scmp.lt.s32.totalorder %s377, 17
      %s381 = scalar_select %p380, %s377, 17
      %s382 = smul.addr %s381, 6
      %s383 = smul.addr %s379, 108
      %s384 = sadd.s32 %s382, %s383
      %s385 = smul.addr %s384, 4
      %s386 = scalar_lea.vmem %s2, %s385
      %s387 = sadd.s32 %s23, 2
      %p388 = scmp.lt.s32.totalorder %s22, 1
      %s389 = scalar_select %p388, %s22, 1
      %p390 = scmp.lt.s32.totalorder %s23, 15
      %s391 = scalar_select %p390, %s23, 15
      %s392 = smul.addr %s391, 2
      %s393 = smul.addr %s389, 32
      %s394 = sadd.s32 %s392, %s393
      %s395 = smul.addr %s394, 8
      %s396 = scalar_lea.vmem %s7, %s395
      %v398 = vld [vmem:[%s365] sm:$0xff]
      %v399 = vld [vmem:[%s365 + $0x8] sm:$0xff]
      %v400 = vld [vmem:[%s365 + $0x10] sm:$0x11]
      %v401 = vld [vmem:[%s375] sm:$0xff]
      %v402 = vld [vmem:[%s375 + $0x8] sm:$0xff]
      %v403 = vld [vmem:[%s375 + $0x10] sm:$0x11]
      %v404 = vld [vmem:[%s386] sm:$0xff]
      %v405 = vld [vmem:[%s386 + $0x8] sm:$0xff]
      %v406 = vld [vmem:[%s386 + $0x10] sm:$0x11]
      %v407 = vld [vmem:[%s3] sm:$0xf]
      %v408 = vld [vmem:[%s3 + $0x4] sm:$0xf]
      %v409 = vld [vmem:[%s3 + $0x8] sm:$0xf]
      %v410 = vld [vmem:[%s3 + $0xc] sm:$0xf]
      %v411 = vld [vmem:[%s3 + $0x10] sm:$0xf]
      %v412 = vld [vmem:[%s3 + $0x14] sm:$0xf]
      %v413 = vld [vmem:[%s3 + $0x18] sm:$0xf]
      %v414 = vld [vmem:[%s3 + $0x1c] sm:$0xf]
      %v415 = vld [vmem:[%s3 + $0x20] sm:$0xf]
      %v416 = vld [vmem:[%s3 + $0x24] sm:$0xf]
      %v417 = vld [vmem:[%s3 + $0x28] sm:$0xf]
      %v418 = vld [vmem:[%s3 + $0x2c] sm:$0xf]
      %v419 = vld [vmem:[%s3 + $0x30] sm:$0xf]
      %v420 = vld [vmem:[%s3 + $0x34] sm:$0xf]
      %v421 = vld [vmem:[%s3 + $0x38] sm:$0xf]
      %v422 = vld [vmem:[%s3 + $0x3c] sm:$0xf]
      %v423 = vld [vmem:[%s3 + $0x40] sm:$0xf]
      %v424 = vld [vmem:[%s3 + $0x44] sm:$0xf]
      %v425 = vld [vmem:[%s3 + $0x48] sm:$0xf]
      %v426 = vld [vmem:[%s3 + $0x4c] sm:$0xf]
      %v427 = vld [vmem:[%s3 + $0x50] sm:$0xf]
      %v428 = vld [vmem:[%s3 + $0x54] sm:$0xf]
      %v429 = vld [vmem:[%s3 + $0x58] sm:$0xf]
      %v430 = vld [vmem:[%s3 + $0x5c] sm:$0xf]
      %v431 = vld [vmem:[%s3 + $0x60] sm:$0xf]
      %v432 = vld [vmem:[%s3 + $0x64] sm:$0xf]
      %v433 = vld [vmem:[%s3 + $0x68] sm:$0xf]
      %v434 = vld [vmem:[%s3 + $0x6c] sm:$0xf]
      %v435 = vld [vmem:[%s3 + $0x70] sm:$0xf]
      %v436 = vld [vmem:[%s3 + $0x74] sm:$0xf]
      %v437 = vld [vmem:[%s3 + $0x78] sm:$0xf]
      %v438 = vld [vmem:[%s3 + $0x7c] sm:$0xf]
      %s439 = scalar_lea.vmem %s3, 128
      %v440 = vld [vmem:[%s439] sm:$0xf]
      %v441 = vld [vmem:[%s439 + $0x4] sm:$0xf]
      %v442 = vld [vmem:[%s439 + $0x8] sm:$0xf]
      %v443 = vld [vmem:[%s439 + $0xc] sm:$0xf]
      %v444 = vld [vmem:[%s439 + $0x10] sm:$0xf]
      %v445 = vld [vmem:[%s439 + $0x14] sm:$0xf]
      %v446 = vld [vmem:[%s439 + $0x18] sm:$0xf]
      %v447 = vld [vmem:[%s439 + $0x1c] sm:$0xf]
      %v448 = vld [vmem:[%s439 + $0x20] sm:$0xf]
      %v449 = vld [vmem:[%s439 + $0x24] sm:$0xf]
      %v450 = vld [vmem:[%s439 + $0x28] sm:$0xf]
      %v451 = vld [vmem:[%s439 + $0x2c] sm:$0xf]
      %v452 = vld [vmem:[%s439 + $0x30] sm:$0xf]
      %v453 = vld [vmem:[%s439 + $0x34] sm:$0xf]
      %v454 = vld [vmem:[%s439 + $0x38] sm:$0xf]
      %v455 = vld [vmem:[%s439 + $0x3c] sm:$0xf]
      %v456 = vld [vmem:[%s439 + $0x40] sm:$0xf]
      %v457 = vld [vmem:[%s439 + $0x44] sm:$0xf]
      %v458 = vld [vmem:[%s439 + $0x48] sm:$0xf]
      %v459 = vld [vmem:[%s439 + $0x4c] sm:$0xf]
      %v460 = vld [vmem:[%s439 + $0x50] sm:$0xf]
      %v461 = vld [vmem:[%s439 + $0x54] sm:$0xf]
      %v462 = vld [vmem:[%s439 + $0x58] sm:$0xf]
      %v463 = vld [vmem:[%s439 + $0x5c] sm:$0xf]
      %v464 = vld [vmem:[%s439 + $0x60] sm:$0xf]
      %v465 = vld [vmem:[%s439 + $0x64] sm:$0xf]
      %v466 = vld [vmem:[%s439 + $0x68] sm:$0xf]
      %v467 = vld [vmem:[%s439 + $0x6c] sm:$0xf]
      %v468 = vld [vmem:[%s439 + $0x70] sm:$0xf]
      %v469 = vld [vmem:[%s439 + $0x74] sm:$0xf]
      %v470 = vld [vmem:[%s439 + $0x78] sm:$0xf]
      %v471 = vld [vmem:[%s439 + $0x7c] sm:$0xf]
      %v475 = vunpack.c.l.b16 %v398
      %v476 = vunpack.c.h.b16 %v398
      %v477 = vunpack.c.l.b16 %v399
      %v478 = vunpack.c.h.b16 %v399
      %v479 = vunpack.c.l.b16 %v400
      %v480 = vunpack.c.h.b16 %v400
      %v481 = vpack.c.b16 %v477, %v475
      %v482 = vpack.c.b16 %v478, %v476
      %v483 = vpack.c.b16 %v479, %v479
      %v484 = vpack.c.b16 %v480, %v480
      %vm485 = vsmask.f32 7424
      %v487 = vshrl.u32 %v481, 16
      %v489 = vshll.u32 %v481, 16
      %v491 = vrot.slane %v489, 1
      %v492 = vor.u32 %v487, %v491
      %v494 = vshll.u32 %v483, 16
      %v496 = vrot.slane %v494, 1
      %v497 = vsel %vm485, %v492, %v496
      %v499 = vshrl.u32 %v482, 16
      %v501 = vshll.u32 %v482, 16
      %v503 = vrot.slane %v501, 1
      %v504 = vor.u32 %v499, %v503
      %v506 = vshll.u32 %v484, 16
      %v508 = vrot.slane %v506, 1
      %v509 = vsel %vm485, %v504, %v508
      %v544 = vunpack.c.l.b16 %v440
      %v545 = vunpack.c.l.b16 %v441
      %v546 = vunpack.c.l.b16 %v442
      %v547 = vunpack.c.l.b16 %v443
      %v548 = vunpack.c.l.b16 %v444
      %v549 = vunpack.c.l.b16 %v445
      %v550 = vunpack.c.l.b16 %v446
      %v551 = vunpack.c.l.b16 %v447
      %v552 = vunpack.c.l.b16 %v448
      %v553 = vunpack.c.l.b16 %v449
      %v554 = vunpack.c.l.b16 %v450
      %v555 = vunpack.c.l.b16 %v451
      %v556 = vunpack.c.l.b16 %v452
      %v557 = vunpack.c.l.b16 %v453
      %v558 = vunpack.c.l.b16 %v454
      %v559 = vunpack.c.l.b16 %v455
      %v560 = vunpack.c.l.b16 %v456
      %v561 = vunpack.c.l.b16 %v457
      %v562 = vunpack.c.l.b16 %v458
      %v563 = vunpack.c.l.b16 %v459
      %v564 = vunpack.c.l.b16 %v460
      %v565 = vunpack.c.l.b16 %v461
      %v566 = vunpack.c.l.b16 %v462
      %v567 = vunpack.c.l.b16 %v463
      %v568 = vunpack.c.l.b16 %v464
      %v569 = vunpack.c.l.b16 %v465
      %v570 = vunpack.c.l.b16 %v466
      %v571 = vunpack.c.l.b16 %v467
      %v572 = vunpack.c.l.b16 %v468
      %v573 = vunpack.c.l.b16 %v469
      %v574 = vunpack.c.l.b16 %v470
      %v575 = vunpack.c.l.b16 %v471
      %v576 = vpack.c.b16 %v545, %v544
      %v577 = vpack.c.b16 %v547, %v546
      %v578 = vpack.c.b16 %v549, %v548
      %v579 = vpack.c.b16 %v551, %v550
      %v580 = vpack.c.b16 %v553, %v552
      %v581 = vpack.c.b16 %v555, %v554
      %v582 = vpack.c.b16 %v557, %v556
      %v583 = vpack.c.b16 %v559, %v558
      %v584 = vpack.c.b16 %v561, %v560
      %v585 = vpack.c.b16 %v563, %v562
      %v586 = vpack.c.b16 %v565, %v564
      %v587 = vpack.c.b16 %v567, %v566
      %v588 = vpack.c.b16 %v569, %v568
      %v589 = vpack.c.b16 %v571, %v570
      %v590 = vpack.c.b16 %v573, %v572
      %v591 = vpack.c.b16 %v575, %v574
      %608 = vmatprep.subr.bf16.mxu0 0
      %609 = vmatpush1.bf16.msra.mxu0 %v576
      %610 = vmatprep.subr.bf16.mxu0 0
      %611 = vmatpush1.bf16.msra.mxu0 %v577
      %612 = vmatprep.subr.bf16.mxu0 0
      %613 = vmatpush1.bf16.msra.mxu0 %v578
      %614 = vmatprep.subr.bf16.mxu0 0
      %615 = vmatpush1.bf16.msra.mxu0 %v579
      %616 = vmatprep.subr.bf16.mxu0 0
      %617 = vmatpush1.bf16.msra.mxu0 %v580
      %618 = vmatprep.subr.bf16.mxu0 0
      %619 = vmatpush1.bf16.msra.mxu0 %v581
      %620 = vmatprep.subr.bf16.mxu0 0
      %621 = vmatpush1.bf16.msra.mxu0 %v582
      %622 = vmatprep.subr.bf16.mxu0 0
      %623 = vmatpush1.bf16.msra.mxu0 %v583
      %624 = vmatprep.subr.bf16.mxu0 0
      %625 = vmatpush1.bf16.msra.mxu0 %v584
      %626 = vmatprep.subr.bf16.mxu0 0
      %627 = vmatpush1.bf16.msra.mxu0 %v585
      %628 = vmatprep.subr.bf16.mxu0 0
      %629 = vmatpush1.bf16.msra.mxu0 %v586
      %630 = vmatprep.subr.bf16.mxu0 0
      %631 = vmatpush1.bf16.msra.mxu0 %v587
      %632 = vmatprep.subr.bf16.mxu0 0
      %633 = vmatpush1.bf16.msra.mxu0 %v588
      %634 = vmatprep.subr.bf16.mxu0 0
      %635 = vmatpush1.bf16.msra.mxu0 %v589
      %636 = vmatprep.subr.bf16.mxu0 0
      %637 = vmatpush1.bf16.msra.mxu0 %v590
      %638 = vmatprep.subr.bf16.mxu0 0
      %639 = vmatpush1.bf16.msra.mxu0 %v591
      %640 = vmatprep.mubr.bf16.mxu0 %v509
      %641 = vmatmul.mubr.bf16.gmra.mrb[0].mxu0 %v497
      %v642 = vpop.f32.mrb[0].mxu0
      %v643 = vadd.f32 0.0, %v642
      %v644 = vpop.f32.mrb[0].mxu0
      %v645 = vpop.f32.mrb[0].mxu0
      %v646 = vadd.f32 0.0, %v645
      %v647 = vpop.f32.mrb[0].mxu0
      %648 = vdwg.mxu0
      %v683 = vunpack.c.l.b16 %v407
      %v684 = vunpack.c.l.b16 %v408
      %v685 = vunpack.c.l.b16 %v409
      %v686 = vunpack.c.l.b16 %v410
      %v687 = vunpack.c.l.b16 %v411
      %v688 = vunpack.c.l.b16 %v412
      %v689 = vunpack.c.l.b16 %v413
      %v690 = vunpack.c.l.b16 %v414
      %v691 = vunpack.c.l.b16 %v415
      %v692 = vunpack.c.l.b16 %v416
      %v693 = vunpack.c.l.b16 %v417
      %v694 = vunpack.c.l.b16 %v418
      %v695 = vunpack.c.l.b16 %v419
      %v696 = vunpack.c.l.b16 %v420
      %v697 = vunpack.c.l.b16 %v421
      %v698 = vunpack.c.l.b16 %v422
      %v699 = vunpack.c.l.b16 %v423
      %v700 = vunpack.c.l.b16 %v424
      %v701 = vunpack.c.l.b16 %v425
      %v702 = vunpack.c.l.b16 %v426
      %v703 = vunpack.c.l.b16 %v427
      %v704 = vunpack.c.l.b16 %v428
      %v705 = vunpack.c.l.b16 %v429
      %v706 = vunpack.c.l.b16 %v430
      %v707 = vunpack.c.l.b16 %v431
      %v708 = vunpack.c.l.b16 %v432
      %v709 = vunpack.c.l.b16 %v433
      %v710 = vunpack.c.l.b16 %v434
      %v711 = vunpack.c.l.b16 %v435
      %v712 = vunpack.c.l.b16 %v436
      %v713 = vunpack.c.l.b16 %v437
      %v714 = vunpack.c.l.b16 %v438
      %v715 = vpack.c.b16 %v684, %v683
      %v716 = vpack.c.b16 %v686, %v685
      %v717 = vpack.c.b16 %v688, %v687
      %v718 = vpack.c.b16 %v690, %v689
      %v719 = vpack.c.b16 %v692, %v691
      %v720 = vpack.c.b16 %v694, %v693
      %v721 = vpack.c.b16 %v696, %v695
      %v722 = vpack.c.b16 %v698, %v697
      %v723 = vpack.c.b16 %v700, %v699
      %v724 = vpack.c.b16 %v702, %v701
      %v725 = vpack.c.b16 %v704, %v703
      %v726 = vpack.c.b16 %v706, %v705
      %v727 = vpack.c.b16 %v708, %v707
      %v728 = vpack.c.b16 %v710, %v709
      %v729 = vpack.c.b16 %v712, %v711
      %v730 = vpack.c.b16 %v714, %v713
      %747 = vmatprep.subr.bf16.mxu0 0
      %748 = vmatpush1.bf16.msra.mxu0 %v715
      %749 = vmatprep.subr.bf16.mxu0 0
      %750 = vmatpush1.bf16.msra.mxu0 %v716
      %751 = vmatprep.subr.bf16.mxu0 0
      %752 = vmatpush1.bf16.msra.mxu0 %v717
      %753 = vmatprep.subr.bf16.mxu0 0
      %754 = vmatpush1.bf16.msra.mxu0 %v718
      %755 = vmatprep.subr.bf16.mxu0 0
      %756 = vmatpush1.bf16.msra.mxu0 %v719
      %757 = vmatprep.subr.bf16.mxu0 0
      %758 = vmatpush1.bf16.msra.mxu0 %v720
      %759 = vmatprep.subr.bf16.mxu0 0
      %760 = vmatpush1.bf16.msra.mxu0 %v721
      %761 = vmatprep.subr.bf16.mxu0 0
      %762 = vmatpush1.bf16.msra.mxu0 %v722
      %763 = vmatprep.subr.bf16.mxu0 0
      %764 = vmatpush1.bf16.msra.mxu0 %v723
      %765 = vmatprep.subr.bf16.mxu0 0
      %766 = vmatpush1.bf16.msra.mxu0 %v724
      %767 = vmatprep.subr.bf16.mxu0 0
      %768 = vmatpush1.bf16.msra.mxu0 %v725
      %769 = vmatprep.subr.bf16.mxu0 0
      %770 = vmatpush1.bf16.msra.mxu0 %v726
      %771 = vmatprep.subr.bf16.mxu0 0
      %772 = vmatpush1.bf16.msra.mxu0 %v727
      %773 = vmatprep.subr.bf16.mxu0 0
      %774 = vmatpush1.bf16.msra.mxu0 %v728
      %775 = vmatprep.subr.bf16.mxu0 0
      %776 = vmatpush1.bf16.msra.mxu0 %v729
      %777 = vmatprep.subr.bf16.mxu0 0
      %778 = vmatpush1.bf16.msra.mxu0 %v730
      %779 = vmatprep.mubr.bf16.mxu0 %v482
      %780 = vmatmul.mubr.bf16.gmra.mrb[0].mxu0 %v481
      %v781 = vpop.f32.mrb[0].mxu0
      %v782 = vadd.f32 %v643, %v781
      %v783 = vpop.f32.mrb[0].mxu0
      %v784 = vpop.f32.mrb[0].mxu0
      %v785 = vadd.f32 %v646, %v784
      %v786 = vpop.f32.mrb[0].mxu0
      %787 = vdwg.mxu0
      %s788 = scalar_lea.vmem %s3, 256
      %v789 = vld [vmem:[%s788] sm:$0xf]
      %v790 = vld [vmem:[%s788 + $0x4] sm:$0xf]
      %v791 = vld [vmem:[%s788 + $0x8] sm:$0xf]
      %v792 = vld [vmem:[%s788 + $0xc] sm:$0xf]
      %v793 = vld [vmem:[%s788 + $0x10] sm:$0xf]
      %v794 = vld [vmem:[%s788 + $0x14] sm:$0xf]
      %v795 = vld [vmem:[%s788 + $0x18] sm:$0xf]
      %v796 = vld [vmem:[%s788 + $0x1c] sm:$0xf]
      %v797 = vld [vmem:[%s788 + $0x20] sm:$0xf]
      %v798 = vld [vmem:[%s788 + $0x24] sm:$0xf]
      %v799 = vld [vmem:[%s788 + $0x28] sm:$0xf]
      %v800 = vld [vmem:[%s788 + $0x2c] sm:$0xf]
      %v801 = vld [vmem:[%s788 + $0x30] sm:$0xf]
      %v802 = vld [vmem:[%s788 + $0x34] sm:$0xf]
      %v803 = vld [vmem:[%s788 + $0x38] sm:$0xf]
      %v804 = vld [vmem:[%s788 + $0x3c] sm:$0xf]
      %v805 = vld [vmem:[%s788 + $0x40] sm:$0xf]
      %v806 = vld [vmem:[%s788 + $0x44] sm:$0xf]
      %v807 = vld [vmem:[%s788 + $0x48] sm:$0xf]
      %v808 = vld [vmem:[%s788 + $0x4c] sm:$0xf]
      %v809 = vld [vmem:[%s788 + $0x50] sm:$0xf]
      %v810 = vld [vmem:[%s788 + $0x54] sm:$0xf]
      %v811 = vld [vmem:[%s788 + $0x58] sm:$0xf]
      %v812 = vld [vmem:[%s788 + $0x5c] sm:$0xf]
      %v813 = vld [vmem:[%s788 + $0x60] sm:$0xf]
      %v814 = vld [vmem:[%s788 + $0x64] sm:$0xf]
      %v815 = vld [vmem:[%s788 + $0x68] sm:$0xf]
      %v816 = vld [vmem:[%s788 + $0x6c] sm:$0xf]
      %v817 = vld [vmem:[%s788 + $0x70] sm:$0xf]
      %v818 = vld [vmem:[%s788 + $0x74] sm:$0xf]
      %v819 = vld [vmem:[%s788 + $0x78] sm:$0xf]
      %v820 = vld [vmem:[%s788 + $0x7c] sm:$0xf]
      %vm821 = vcmask 1046528
      %v822 = vrot.slane %v481, 1
      %v823 = vrot.slane %v483, 1
      %v824 = vsel %vm821, %v822, %v823
      %v825 = vrot.slane %v482, 1
      %v826 = vrot.slane %v484, 1
      %v827 = vsel %vm821, %v825, %v826
      %v862 = vunpack.c.l.b16 %v789
      %v863 = vunpack.c.l.b16 %v790
      %v864 = vunpack.c.l.b16 %v791
      %v865 = vunpack.c.l.b16 %v792
      %v866 = vunpack.c.l.b16 %v793
      %v867 = vunpack.c.l.b16 %v794
      %v868 = vunpack.c.l.b16 %v795
      %v869 = vunpack.c.l.b16 %v796
      %v870 = vunpack.c.l.b16 %v797
      %v871 = vunpack.c.l.b16 %v798
      %v872 = vunpack.c.l.b16 %v799
      %v873 = vunpack.c.l.b16 %v800
      %v874 = vunpack.c.l.b16 %v801
      %v875 = vunpack.c.l.b16 %v802
      %v876 = vunpack.c.l.b16 %v803
      %v877 = vunpack.c.l.b16 %v804
      %v878 = vunpack.c.l.b16 %v805
      %v879 = vunpack.c.l.b16 %v806
      %v880 = vunpack.c.l.b16 %v807
      %v881 = vunpack.c.l.b16 %v808
      %v882 = vunpack.c.l.b16 %v809
      %v883 = vunpack.c.l.b16 %v810
      %v884 = vunpack.c.l.b16 %v811
      %v885 = vunpack.c.l.b16 %v812
      %v886 = vunpack.c.l.b16 %v813
      %v887 = vunpack.c.l.b16 %v814
      %v888 = vunpack.c.l.b16 %v815
      %v889 = vunpack.c.l.b16 %v816
      %v890 = vunpack.c.l.b16 %v817
      %v891 = vunpack.c.l.b16 %v818
      %v892 = vunpack.c.l.b16 %v819
      %v893 = vunpack.c.l.b16 %v820
      %v894 = vpack.c.b16 %v863, %v862
      %v895 = vpack.c.b16 %v865, %v864
      %v896 = vpack.c.b16 %v867, %v866
      %v897 = vpack.c.b16 %v869, %v868
      %v898 = vpack.c.b16 %v871, %v870
      %v899 = vpack.c.b16 %v873, %v872
      %v900 = vpack.c.b16 %v875, %v874
      %v901 = vpack.c.b16 %v877, %v876
      %v902 = vpack.c.b16 %v879, %v878
      %v903 = vpack.c.b16 %v881, %v880
      %v904 = vpack.c.b16 %v883, %v882
      %v905 = vpack.c.b16 %v885, %v884
      %v906 = vpack.c.b16 %v887, %v886
      %v907 = vpack.c.b16 %v889, %v888
      %v908 = vpack.c.b16 %v891, %v890
      %v909 = vpack.c.b16 %v893, %v892
      %926 = vmatprep.subr.bf16.mxu0 0
      %927 = vmatpush1.bf16.msra.mxu0 %v894
      %928 = vmatprep.subr.bf16.mxu0 0
      %929 = vmatpush1.bf16.msra.mxu0 %v895
      %930 = vmatprep.subr.bf16.mxu0 0
      %931 = vmatpush1.bf16.msra.mxu0 %v896
      %932 = vmatprep.subr.bf16.mxu0 0
      %933 = vmatpush1.bf16.msra.mxu0 %v897
      %934 = vmatprep.subr.bf16.mxu0 0
      %935 = vmatpush1.bf16.msra.mxu0 %v898
      %936 = vmatprep.subr.bf16.mxu0 0
      %937 = vmatpush1.bf16.msra.mxu0 %v899
      %938 = vmatprep.subr.bf16.mxu0 0
      %939 = vmatpush1.bf16.msra.mxu0 %v900
      %940 = vmatprep.subr.bf16.mxu0 0
      %941 = vmatpush1.bf16.msra.mxu0 %v901
      %942 = vmatprep.subr.bf16.mxu0 0
      %943 = vmatpush1.bf16.msra.mxu0 %v902
      %944 = vmatprep.subr.bf16.mxu0 0
      %945 = vmatpush1.bf16.msra.mxu0 %v903
      %946 = vmatprep.subr.bf16.mxu0 0
      %947 = vmatpush1.bf16.msra.mxu0 %v904
      %948 = vmatprep.subr.bf16.mxu0 0
      %949 = vmatpush1.bf16.msra.mxu0 %v905
      %950 = vmatprep.subr.bf16.mxu0 0
      %951 = vmatpush1.bf16.msra.mxu0 %v906
      %952 = vmatprep.subr.bf16.mxu0 0
      %953 = vmatpush1.bf16.msra.mxu0 %v907
      %954 = vmatprep.subr.bf16.mxu0 0
      %955 = vmatpush1.bf16.msra.mxu0 %v908
      %956 = vmatprep.subr.bf16.mxu0 0
      %957 = vmatpush1.bf16.msra.mxu0 %v909
      %958 = vmatprep.mubr.bf16.mxu0 %v827
      %959 = vmatmul.mubr.bf16.gmra.mrb[0].mxu0 %v824
      %v960 = vpop.f32.mrb[0].mxu0
      %v961 = vadd.f32 0.0, %v960
      %v962 = vpop.f32.mrb[0].mxu0
      %v963 = vpop.f32.mrb[0].mxu0
      %v964 = vadd.f32 0.0, %v963
      %v965 = vpop.f32.mrb[0].mxu0
      %966 = vdwg.mxu0
      %v967 = vadd.f32 %v782, %v961
      %v968 = vadd.f32 %v785, %v964
      %s969 = scalar_lea.vmem %s3, 384
      %v970 = vld [vmem:[%s969] sm:$0xf]
      %v971 = vld [vmem:[%s969 + $0x4] sm:$0xf]
      %v972 = vld [vmem:[%s969 + $0x8] sm:$0xf]
      %v973 = vld [vmem:[%s969 + $0xc] sm:$0xf]
      %v974 = vld [vmem:[%s969 + $0x10] sm:$0xf]
      %v975 = vld [vmem:[%s969 + $0x14] sm:$0xf]
      %v976 = vld [vmem:[%s969 + $0x18] sm:$0xf]
      %v977 = vld [vmem:[%s969 + $0x1c] sm:$0xf]
      %v978 = vld [vmem:[%s969 + $0x20] sm:$0xf]
      %v979 = vld [vmem:[%s969 + $0x24] sm:$0xf]
      %v980 = vld [vmem:[%s969 + $0x28] sm:$0xf]
      %v981 = vld [vmem:[%s969 + $0x2c] sm:$0xf]
      %v982 = vld [vmem:[%s969 + $0x30] sm:$0xf]
      %v983 = vld [vmem:[%s969 + $0x34] sm:$0xf]
      %v984 = vld [vmem:[%s969 + $0x38] sm:$0xf]
      %v985 = vld [vmem:[%s969 + $0x3c] sm:$0xf]
      %v986 = vld [vmem:[%s969 + $0x40] sm:$0xf]
      %v987 = vld [vmem:[%s969 + $0x44] sm:$0xf]
      %v988 = vld [vmem:[%s969 + $0x48] sm:$0xf]
      %v989 = vld [vmem:[%s969 + $0x4c] sm:$0xf]
      %v990 = vld [vmem:[%s969 + $0x50] sm:$0xf]
      %v991 = vld [vmem:[%s969 + $0x54] sm:$0xf]
      %v992 = vld [vmem:[%s969 + $0x58] sm:$0xf]
      %v993 = vld [vmem:[%s969 + $0x5c] sm:$0xf]
      %v994 = vld [vmem:[%s969 + $0x60] sm:$0xf]
      %v995 = vld [vmem:[%s969 + $0x64] sm:$0xf]
      %v996 = vld [vmem:[%s969 + $0x68] sm:$0xf]
      %v997 = vld [vmem:[%s969 + $0x6c] sm:$0xf]
      %v998 = vld [vmem:[%s969 + $0x70] sm:$0xf]
      %v999 = vld [vmem:[%s969 + $0x74] sm:$0xf]
      %v1000 = vld [vmem:[%s969 + $0x78] sm:$0xf]
      %v1001 = vld [vmem:[%s969 + $0x7c] sm:$0xf]
      %v1004 = vunpack.c.l.b16 %v401
      %v1005 = vunpack.c.h.b16 %v401
      %v1006 = vunpack.c.l.b16 %v402
      %v1007 = vunpack.c.h.b16 %v402
      %v1008 = vpack.c.b16 %v1006, %v1004
      %v1009 = vpack.c.b16 %v1007, %v1005
      %v1044 = vunpack.c.l.b16 %v970
      %v1045 = vunpack.c.l.b16 %v971
      %v1046 = vunpack.c.l.b16 %v972
      %v1047 = vunpack.c.l.b16 %v973
      %v1048 = vunpack.c.l.b16 %v974
      %v1049 = vunpack.c.l.b16 %v975
      %v1050 = vunpack.c.l.b16 %v976
      %v1051 = vunpack.c.l.b16 %v977
      %v1052 = vunpack.c.l.b16 %v978
      %v1053 = vunpack.c.l.b16 %v979
      %v1054 = vunpack.c.l.b16 %v980
      %v1055 = vunpack.c.l.b16 %v981
      %v1056 = vunpack.c.l.b16 %v982
      %v1057 = vunpack.c.l.b16 %v983
      %v1058 = vunpack.c.l.b16 %v984
      %v1059 = vunpack.c.l.b16 %v985
      %v1060 = vunpack.c.l.b16 %v986
      %v1061 = vunpack.c.l.b16 %v987
      %v1062 = vunpack.c.l.b16 %v988
      %v1063 = vunpack.c.l.b16 %v989
      %v1064 = vunpack.c.l.b16 %v990
      %v1065 = vunpack.c.l.b16 %v991
      %v1066 = vunpack.c.l.b16 %v992
      %v1067 = vunpack.c.l.b16 %v993
      %v1068 = vunpack.c.l.b16 %v994
      %v1069 = vunpack.c.l.b16 %v995
      %v1070 = vunpack.c.l.b16 %v996
      %v1071 = vunpack.c.l.b16 %v997
      %v1072 = vunpack.c.l.b16 %v998
      %v1073 = vunpack.c.l.b16 %v999
      %v1074 = vunpack.c.l.b16 %v1000
      %v1075 = vunpack.c.l.b16 %v1001
      %v1076 = vpack.c.b16 %v1045, %v1044
      %v1077 = vpack.c.b16 %v1047, %v1046
      %v1078 = vpack.c.b16 %v1049, %v1048
      %v1079 = vpack.c.b16 %v1051, %v1050
      %v1080 = vpack.c.b16 %v1053, %v1052
      %v1081 = vpack.c.b16 %v1055, %v1054
      %v1082 = vpack.c.b16 %v1057, %v1056
      %v1083 = vpack.c.b16 %v1059, %v1058
      %v1084 = vpack.c.b16 %v1061, %v1060
      %v1085 = vpack.c.b16 %v1063, %v1062
      %v1086 = vpack.c.b16 %v1065, %v1064
      %v1087 = vpack.c.b16 %v1067, %v1066
      %v1088 = vpack.c.b16 %v1069, %v1068
      %v1089 = vpack.c.b16 %v1071, %v1070
      %v1090 = vpack.c.b16 %v1073, %v1072
      %v1091 = vpack.c.b16 %v1075, %v1074
      %1108 = vmatprep.subr.bf16.mxu0 0
      %1109 = vmatpush1.bf16.msra.mxu0 %v1076
      %1110 = vmatprep.subr.bf16.mxu0 0
      %1111 = vmatpush1.bf16.msra.mxu0 %v1077
      %1112 = vmatprep.subr.bf16.mxu0 0
      %1113 = vmatpush1.bf16.msra.mxu0 %v1078
      %1114 = vmatprep.subr.bf16.mxu0 0
      %1115 = vmatpush1.bf16.msra.mxu0 %v1079
      %1116 = vmatprep.subr.bf16.mxu0 0
      %1117 = vmatpush1.bf16.msra.mxu0 %v1080
      %1118 = vmatprep.subr.bf16.mxu0 0
      %1119 = vmatpush1.bf16.msra.mxu0 %v1081
      %1120 = vmatprep.subr.bf16.mxu0 0
      %1121 = vmatpush1.bf16.msra.mxu0 %v1082
      %1122 = vmatprep.subr.bf16.mxu0 0
      %1123 = vmatpush1.bf16.msra.mxu0 %v1083
      %1124 = vmatprep.subr.bf16.mxu0 0
      %1125 = vmatpush1.bf16.msra.mxu0 %v1084
      %1126 = vmatprep.subr.bf16.mxu0 0
      %1127 = vmatpush1.bf16.msra.mxu0 %v1085
      %1128 = vmatprep.subr.bf16.mxu0 0
      %1129 = vmatpush1.bf16.msra.mxu0 %v1086
      %1130 = vmatprep.subr.bf16.mxu0 0
      %1131 = vmatpush1.bf16.msra.mxu0 %v1087
      %1132 = vmatprep.subr.bf16.mxu0 0
      %1133 = vmatpush1.bf16.msra.mxu0 %v1088
      %1134 = vmatprep.subr.bf16.mxu0 0
      %1135 = vmatpush1.bf16.msra.mxu0 %v1089
      %1136 = vmatprep.subr.bf16.mxu0 0
      %1137 = vmatpush1.bf16.msra.mxu0 %v1090
      %1138 = vmatprep.subr.bf16.mxu0 0
      %1139 = vmatpush1.bf16.msra.mxu0 %v1091
      %1140 = vmatprep.mubr.bf16.mxu0 %v1009
      %1141 = vmatmul.mubr.bf16.gmra.mrb[0].mxu0 %v1008
      %v1142 = vpop.f32.mrb[0].mxu0
      %v1143 = vadd.f32 0.0, %v1142
      %v1144 = vpop.f32.mrb[0].mxu0
      %v1145 = vpop.f32.mrb[0].mxu0
      %v1146 = vadd.f32 0.0, %v1145
      %v1147 = vpop.f32.mrb[0].mxu0
      %1148 = vdwg.mxu0
      %v1149 = vadd.f32 %v967, %v1143
      %v1150 = vadd.f32 %v968, %v1146
      %s1151 = scalar_lea.vmem %s3, 512
      %v1152 = vld [vmem:[%s1151] sm:$0xf]
      %v1153 = vld [vmem:[%s1151 + $0x4] sm:$0xf]
      %v1154 = vld [vmem:[%s1151 + $0x8] sm:$0xf]
      %v1155 = vld [vmem:[%s1151 + $0xc] sm:$0xf]
      %v1156 = vld [vmem:[%s1151 + $0x10] sm:$0xf]
      %v1157 = vld [vmem:[%s1151 + $0x14] sm:$0xf]
      %v1158 = vld [vmem:[%s1151 + $0x18] sm:$0xf]
      %v1159 = vld [vmem:[%s1151 + $0x1c] sm:$0xf]
      %v1160 = vld [vmem:[%s1151 + $0x20] sm:$0xf]
      %v1161 = vld [vmem:[%s1151 + $0x24] sm:$0xf]
      %v1162 = vld [vmem:[%s1151 + $0x28] sm:$0xf]
      %v1163 = vld [vmem:[%s1151 + $0x2c] sm:$0xf]
      %v1164 = vld [vmem:[%s1151 + $0x30] sm:$0xf]
      %v1165 = vld [vmem:[%s1151 + $0x34] sm:$0xf]
      %v1166 = vld [vmem:[%s1151 + $0x38] sm:$0xf]
      %v1167 = vld [vmem:[%s1151 + $0x3c] sm:$0xf]
      %v1168 = vld [vmem:[%s1151 + $0x40] sm:$0xf]
      %v1169 = vld [vmem:[%s1151 + $0x44] sm:$0xf]
      %v1170 = vld [vmem:[%s1151 + $0x48] sm:$0xf]
      %v1171 = vld [vmem:[%s1151 + $0x4c] sm:$0xf]
      %v1172 = vld [vmem:[%s1151 + $0x50] sm:$0xf]
      %v1173 = vld [vmem:[%s1151 + $0x54] sm:$0xf]
      %v1174 = vld [vmem:[%s1151 + $0x58] sm:$0xf]
      %v1175 = vld [vmem:[%s1151 + $0x5c] sm:$0xf]
      %v1176 = vld [vmem:[%s1151 + $0x60] sm:$0xf]
      %v1177 = vld [vmem:[%s1151 + $0x64] sm:$0xf]
      %v1178 = vld [vmem:[%s1151 + $0x68] sm:$0xf]
      %v1179 = vld [vmem:[%s1151 + $0x6c] sm:$0xf]
      %v1180 = vld [vmem:[%s1151 + $0x70] sm:$0xf]
      %v1181 = vld [vmem:[%s1151 + $0x74] sm:$0xf]
      %v1182 = vld [vmem:[%s1151 + $0x78] sm:$0xf]
      %v1183 = vld [vmem:[%s1151 + $0x7c] sm:$0xf]
      %v1185 = vunpack.c.l.b16 %v403
      %v1186 = vunpack.c.h.b16 %v403
      %v1187 = vpack.c.b16 %v1185, %v1185
      %v1188 = vpack.c.b16 %v1186, %v1186
      %v1190 = vshrl.u32 %v1008, 16
      %v1192 = vshll.u32 %v1008, 16
      %v1194 = vrot.slane %v1192, 1
      %v1195 = vor.u32 %v1190, %v1194
      %v1197 = vshll.u32 %v1187, 16
      %v1199 = vrot.slane %v1197, 1
      %v1200 = vsel %vm485, %v1195, %v1199
      %v1202 = vshrl.u32 %v1009, 16
      %v1204 = vshll.u32 %v1009, 16
      %v1206 = vrot.slane %v1204, 1
      %v1207 = vor.u32 %v1202, %v1206
      %v1209 = vshll.u32 %v1188, 16
      %v1211 = vrot.slane %v1209, 1
      %v1212 = vsel %vm485, %v1207, %v1211
      %v1247 = vunpack.c.l.b16 %v1152
      %v1248 = vunpack.c.l.b16 %v1153
      %v1249 = vunpack.c.l.b16 %v1154
      %v1250 = vunpack.c.l.b16 %v1155
      %v1251 = vunpack.c.l.b16 %v1156
      %v1252 = vunpack.c.l.b16 %v1157
      %v1253 = vunpack.c.l.b16 %v1158
      %v1254 = vunpack.c.l.b16 %v1159
      %v1255 = vunpack.c.l.b16 %v1160
      %v1256 = vunpack.c.l.b16 %v1161
      %v1257 = vunpack.c.l.b16 %v1162
      %v1258 = vunpack.c.l.b16 %v1163
      %v1259 = vunpack.c.l.b16 %v1164
      %v1260 = vunpack.c.l.b16 %v1165
      %v1261 = vunpack.c.l.b16 %v1166
      %v1262 = vunpack.c.l.b16 %v1167
      %v1263 = vunpack.c.l.b16 %v1168
      %v1264 = vunpack.c.l.b16 %v1169
      %v1265 = vunpack.c.l.b16 %v1170
      %v1266 = vunpack.c.l.b16 %v1171
      %v1267 = vunpack.c.l.b16 %v1172
      %v1268 = vunpack.c.l.b16 %v1173
      %v1269 = vunpack.c.l.b16 %v1174
      %v1270 = vunpack.c.l.b16 %v1175
      %v1271 = vunpack.c.l.b16 %v1176
      %v1272 = vunpack.c.l.b16 %v1177
      %v1273 = vunpack.c.l.b16 %v1178
      %v1274 = vunpack.c.l.b16 %v1179
      %v1275 = vunpack.c.l.b16 %v1180
      %v1276 = vunpack.c.l.b16 %v1181
      %v1277 = vunpack.c.l.b16 %v1182
      %v1278 = vunpack.c.l.b16 %v1183
      %v1279 = vpack.c.b16 %v1248, %v1247
      %v1280 = vpack.c.b16 %v1250, %v1249
      %v1281 = vpack.c.b16 %v1252, %v1251
      %v1282 = vpack.c.b16 %v1254, %v1253
      %v1283 = vpack.c.b16 %v1256, %v1255
      %v1284 = vpack.c.b16 %v1258, %v1257
      %v1285 = vpack.c.b16 %v1260, %v1259
      %v1286 = vpack.c.b16 %v1262, %v1261
      %v1287 = vpack.c.b16 %v1264, %v1263
      %v1288 = vpack.c.b16 %v1266, %v1265
      %v1289 = vpack.c.b16 %v1268, %v1267
      %v1290 = vpack.c.b16 %v1270, %v1269
      %v1291 = vpack.c.b16 %v1272, %v1271
      %v1292 = vpack.c.b16 %v1274, %v1273
      %v1293 = vpack.c.b16 %v1276, %v1275
      %v1294 = vpack.c.b16 %v1278, %v1277
      %1311 = vmatprep.subr.bf16.mxu0 0
      %1312 = vmatpush1.bf16.msra.mxu0 %v1279
      %1313 = vmatprep.subr.bf16.mxu0 0
      %1314 = vmatpush1.bf16.msra.mxu0 %v1280
      %1315 = vmatprep.subr.bf16.mxu0 0
      %1316 = vmatpush1.bf16.msra.mxu0 %v1281
      %1317 = vmatprep.subr.bf16.mxu0 0
      %1318 = vmatpush1.bf16.msra.mxu0 %v1282
      %1319 = vmatprep.subr.bf16.mxu0 0
      %1320 = vmatpush1.bf16.msra.mxu0 %v1283
      %1321 = vmatprep.subr.bf16.mxu0 0
      %1322 = vmatpush1.bf16.msra.mxu0 %v1284
      %1323 = vmatprep.subr.bf16.mxu0 0
      %1324 = vmatpush1.bf16.msra.mxu0 %v1285
      %1325 = vmatprep.subr.bf16.mxu0 0
      %1326 = vmatpush1.bf16.msra.mxu0 %v1286
      %1327 = vmatprep.subr.bf16.mxu0 0
      %1328 = vmatpush1.bf16.msra.mxu0 %v1287
      %1329 = vmatprep.subr.bf16.mxu0 0
      %1330 = vmatpush1.bf16.msra.mxu0 %v1288
      %1331 = vmatprep.subr.bf16.mxu0 0
      %1332 = vmatpush1.bf16.msra.mxu0 %v1289
      %1333 = vmatprep.subr.bf16.mxu0 0
      %1334 = vmatpush1.bf16.msra.mxu0 %v1290
      %1335 = vmatprep.subr.bf16.mxu0 0
      %1336 = vmatpush1.bf16.msra.mxu0 %v1291
      %1337 = vmatprep.subr.bf16.mxu0 0
      %1338 = vmatpush1.bf16.msra.mxu0 %v1292
      %1339 = vmatprep.subr.bf16.mxu0 0
      %1340 = vmatpush1.bf16.msra.mxu0 %v1293
      %1341 = vmatprep.subr.bf16.mxu0 0
      %1342 = vmatpush1.bf16.msra.mxu0 %v1294
      %1343 = vmatprep.mubr.bf16.mxu0 %v1212
      %1344 = vmatmul.mubr.bf16.gmra.mrb[0].mxu0 %v1200
      %v1345 = vpop.f32.mrb[0].mxu0
      %v1346 = vadd.f32 0.0, %v1345
      %v1347 = vpop.f32.mrb[0].mxu0
      %v1348 = vpop.f32.mrb[0].mxu0
      %v1349 = vadd.f32 0.0, %v1348
      %v1350 = vpop.f32.mrb[0].mxu0
      %1351 = vdwg.mxu0
      %v1352 = vadd.f32 %v1149, %v1346
      %v1353 = vadd.f32 %v1150, %v1349
      %s1354 = scalar_lea.vmem %s3, 640
      %v1355 = vld [vmem:[%s1354] sm:$0xf]
      %v1356 = vld [vmem:[%s1354 + $0x4] sm:$0xf]
      %v1357 = vld [vmem:[%s1354 + $0x8] sm:$0xf]
      %v1358 = vld [vmem:[%s1354 + $0xc] sm:$0xf]
      %v1359 = vld [vmem:[%s1354 + $0x10] sm:$0xf]
      %v1360 = vld [vmem:[%s1354 + $0x14] sm:$0xf]
      %v1361 = vld [vmem:[%s1354 + $0x18] sm:$0xf]
      %v1362 = vld [vmem:[%s1354 + $0x1c] sm:$0xf]
      %v1363 = vld [vmem:[%s1354 + $0x20] sm:$0xf]
      %v1364 = vld [vmem:[%s1354 + $0x24] sm:$0xf]
      %v1365 = vld [vmem:[%s1354 + $0x28] sm:$0xf]
      %v1366 = vld [vmem:[%s1354 + $0x2c] sm:$0xf]
      %v1367 = vld [vmem:[%s1354 + $0x30] sm:$0xf]
      %v1368 = vld [vmem:[%s1354 + $0x34] sm:$0xf]
      %v1369 = vld [vmem:[%s1354 + $0x38] sm:$0xf]
      %v1370 = vld [vmem:[%s1354 + $0x3c] sm:$0xf]
      %v1371 = vld [vmem:[%s1354 + $0x40] sm:$0xf]
      %v1372 = vld [vmem:[%s1354 + $0x44] sm:$0xf]
      %v1373 = vld [vmem:[%s1354 + $0x48] sm:$0xf]
      %v1374 = vld [vmem:[%s1354 + $0x4c] sm:$0xf]
      %v1375 = vld [vmem:[%s1354 + $0x50] sm:$0xf]
      %v1376 = vld [vmem:[%s1354 + $0x54] sm:$0xf]
      %v1377 = vld [vmem:[%s1354 + $0x58] sm:$0xf]
      %v1378 = vld [vmem:[%s1354 + $0x5c] sm:$0xf]
      %v1379 = vld [vmem:[%s1354 + $0x60] sm:$0xf]
      %v1380 = vld [vmem:[%s1354 + $0x64] sm:$0xf]
      %v1381 = vld [vmem:[%s1354 + $0x68] sm:$0xf]
      %v1382 = vld [vmem:[%s1354 + $0x6c] sm:$0xf]
      %v1383 = vld [vmem:[%s1354 + $0x70] sm:$0xf]
      %v1384 = vld [vmem:[%s1354 + $0x74] sm:$0xf]
      %v1385 = vld [vmem:[%s1354 + $0x78] sm:$0xf]
      %v1386 = vld [vmem:[%s1354 + $0x7c] sm:$0xf]
      %v1387 = vrot.slane %v1008, 1
      %v1388 = vrot.slane %v1187, 1
      %v1389 = vsel %vm821, %v1387, %v1388
      %v1390 = vrot.slane %v1009, 1
      %v1391 = vrot.slane %v1188, 1
      %v1392 = vsel %vm821, %v1390, %v1391
      %v1427 = vunpack.c.l.b16 %v1355
      %v1428 = vunpack.c.l.b16 %v1356
      %v1429 = vunpack.c.l.b16 %v1357
      %v1430 = vunpack.c.l.b16 %v1358
      %v1431 = vunpack.c.l.b16 %v1359
      %v1432 = vunpack.c.l.b16 %v1360
      %v1433 = vunpack.c.l.b16 %v1361
      %v1434 = vunpack.c.l.b16 %v1362
      %v1435 = vunpack.c.l.b16 %v1363
      %v1436 = vunpack.c.l.b16 %v1364
      %v1437 = vunpack.c.l.b16 %v1365
      %v1438 = vunpack.c.l.b16 %v1366
      %v1439 = vunpack.c.l.b16 %v1367
      %v1440 = vunpack.c.l.b16 %v1368
      %v1441 = vunpack.c.l.b16 %v1369
      %v1442 = vunpack.c.l.b16 %v1370
      %v1443 = vunpack.c.l.b16 %v1371
      %v1444 = vunpack.c.l.b16 %v1372
      %v1445 = vunpack.c.l.b16 %v1373
      %v1446 = vunpack.c.l.b16 %v1374
      %v1447 = vunpack.c.l.b16 %v1375
      %v1448 = vunpack.c.l.b16 %v1376
      %v1449 = vunpack.c.l.b16 %v1377
      %v1450 = vunpack.c.l.b16 %v1378
      %v1451 = vunpack.c.l.b16 %v1379
      %v1452 = vunpack.c.l.b16 %v1380
      %v1453 = vunpack.c.l.b16 %v1381
      %v1454 = vunpack.c.l.b16 %v1382
      %v1455 = vunpack.c.l.b16 %v1383
      %v1456 = vunpack.c.l.b16 %v1384
      %v1457 = vunpack.c.l.b16 %v1385
      %v1458 = vunpack.c.l.b16 %v1386
      %v1459 = vpack.c.b16 %v1428, %v1427
      %v1460 = vpack.c.b16 %v1430, %v1429
      %v1461 = vpack.c.b16 %v1432, %v1431
      %v1462 = vpack.c.b16 %v1434, %v1433
      %v1463 = vpack.c.b16 %v1436, %v1435
      %v1464 = vpack.c.b16 %v1438, %v1437
      %v1465 = vpack.c.b16 %v1440, %v1439
      %v1466 = vpack.c.b16 %v1442, %v1441
      %v1467 = vpack.c.b16 %v1444, %v1443
      %v1468 = vpack.c.b16 %v1446, %v1445
      %v1469 = vpack.c.b16 %v1448, %v1447
      %v1470 = vpack.c.b16 %v1450, %v1449
      %v1471 = vpack.c.b16 %v1452, %v1451
      %v1472 = vpack.c.b16 %v1454, %v1453
      %v1473 = vpack.c.b16 %v1456, %v1455
      %v1474 = vpack.c.b16 %v1458, %v1457
      %1491 = vmatprep.subr.bf16.mxu0 0
      %1492 = vmatpush1.bf16.msra.mxu0 %v1459
      %1493 = vmatprep.subr.bf16.mxu0 0
      %1494 = vmatpush1.bf16.msra.mxu0 %v1460
      %1495 = vmatprep.subr.bf16.mxu0 0
      %1496 = vmatpush1.bf16.msra.mxu0 %v1461
      %1497 = vmatprep.subr.bf16.mxu0 0
      %1498 = vmatpush1.bf16.msra.mxu0 %v1462
      %1499 = vmatprep.subr.bf16.mxu0 0
      %1500 = vmatpush1.bf16.msra.mxu0 %v1463
      %1501 = vmatprep.subr.bf16.mxu0 0
      %1502 = vmatpush1.bf16.msra.mxu0 %v1464
      %1503 = vmatprep.subr.bf16.mxu0 0
      %1504 = vmatpush1.bf16.msra.mxu0 %v1465
      %1505 = vmatprep.subr.bf16.mxu0 0
      %1506 = vmatpush1.bf16.msra.mxu0 %v1466
      %1507 = vmatprep.subr.bf16.mxu0 0
      %1508 = vmatpush1.bf16.msra.mxu0 %v1467
      %1509 = vmatprep.subr.bf16.mxu0 0
      %1510 = vmatpush1.bf16.msra.mxu0 %v1468
      %1511 = vmatprep.subr.bf16.mxu0 0
      %1512 = vmatpush1.bf16.msra.mxu0 %v1469
      %1513 = vmatprep.subr.bf16.mxu0 0
      %1514 = vmatpush1.bf16.msra.mxu0 %v1470
      %1515 = vmatprep.subr.bf16.mxu0 0
      %1516 = vmatpush1.bf16.msra.mxu0 %v1471
      %1517 = vmatprep.subr.bf16.mxu0 0
      %1518 = vmatpush1.bf16.msra.mxu0 %v1472
      %1519 = vmatprep.subr.bf16.mxu0 0
      %1520 = vmatpush1.bf16.msra.mxu0 %v1473
      %1521 = vmatprep.subr.bf16.mxu0 0
      %1522 = vmatpush1.bf16.msra.mxu0 %v1474
      %1523 = vmatprep.mubr.bf16.mxu0 %v1392
      %1524 = vmatmul.mubr.bf16.gmra.mrb[0].mxu0 %v1389
      %v1525 = vpop.f32.mrb[0].mxu0
      %v1526 = vadd.f32 0.0, %v1525
      %v1527 = vpop.f32.mrb[0].mxu0
      %v1528 = vpop.f32.mrb[0].mxu0
      %v1529 = vadd.f32 0.0, %v1528
      %v1530 = vpop.f32.mrb[0].mxu0
      %1531 = vdwg.mxu0
      %v1532 = vadd.f32 %v1352, %v1526
      %v1533 = vadd.f32 %v1353, %v1529
      %s1534 = scalar_lea.vmem %s3, 768
      %v1535 = vld [vmem:[%s1534] sm:$0xf]
      %v1536 = vld [vmem:[%s1534 + $0x4] sm:$0xf]
      %v1537 = vld [vmem:[%s1534 + $0x8] sm:$0xf]
      %v1538 = vld [vmem:[%s1534 + $0xc] sm:$0xf]
      %v1539 = vld [vmem:[%s1534 + $0x10] sm:$0xf]
      %v1540 = vld [vmem:[%s1534 + $0x14] sm:$0xf]
      %v1541 = vld [vmem:[%s1534 + $0x18] sm:$0xf]
      %v1542 = vld [vmem:[%s1534 + $0x1c] sm:$0xf]
      %v1543 = vld [vmem:[%s1534 + $0x20] sm:$0xf]
      %v1544 = vld [vmem:[%s1534 + $0x24] sm:$0xf]
      %v1545 = vld [vmem:[%s1534 + $0x28] sm:$0xf]
      %v1546 = vld [vmem:[%s1534 + $0x2c] sm:$0xf]
      %v1547 = vld [vmem:[%s1534 + $0x30] sm:$0xf]
      %v1548 = vld [vmem:[%s1534 + $0x34] sm:$0xf]
      %v1549 = vld [vmem:[%s1534 + $0x38] sm:$0xf]
      %v1550 = vld [vmem:[%s1534 + $0x3c] sm:$0xf]
      %v1551 = vld [vmem:[%s1534 + $0x40] sm:$0xf]
      %v1552 = vld [vmem:[%s1534 + $0x44] sm:$0xf]
      %v1553 = vld [vmem:[%s1534 + $0x48] sm:$0xf]
      %v1554 = vld [vmem:[%s1534 + $0x4c] sm:$0xf]
      %v1555 = vld [vmem:[%s1534 + $0x50] sm:$0xf]
      %v1556 = vld [vmem:[%s1534 + $0x54] sm:$0xf]
      %v1557 = vld [vmem:[%s1534 + $0x58] sm:$0xf]
      %v1558 = vld [vmem:[%s1534 + $0x5c] sm:$0xf]
      %v1559 = vld [vmem:[%s1534 + $0x60] sm:$0xf]
      %v1560 = vld [vmem:[%s1534 + $0x64] sm:$0xf]
      %v1561 = vld [vmem:[%s1534 + $0x68] sm:$0xf]
      %v1562 = vld [vmem:[%s1534 + $0x6c] sm:$0xf]
      %v1563 = vld [vmem:[%s1534 + $0x70] sm:$0xf]
      %v1564 = vld [vmem:[%s1534 + $0x74] sm:$0xf]
      %v1565 = vld [vmem:[%s1534 + $0x78] sm:$0xf]
      %v1566 = vld [vmem:[%s1534 + $0x7c] sm:$0xf]
      %v1569 = vunpack.c.l.b16 %v404
      %v1570 = vunpack.c.h.b16 %v404
      %v1571 = vunpack.c.l.b16 %v405
      %v1572 = vunpack.c.h.b16 %v405
      %v1573 = vpack.c.b16 %v1571, %v1569
      %v1574 = vpack.c.b16 %v1572, %v1570
      %v1609 = vunpack.c.l.b16 %v1535
      %v1610 = vunpack.c.l.b16 %v1536
      %v1611 = vunpack.c.l.b16 %v1537
      %v1612 = vunpack.c.l.b16 %v1538
      %v1613 = vunpack.c.l.b16 %v1539
      %v1614 = vunpack.c.l.b16 %v1540
      %v1615 = vunpack.c.l.b16 %v1541
      %v1616 = vunpack.c.l.b16 %v1542
      %v1617 = vunpack.c.l.b16 %v1543
      %v1618 = vunpack.c.l.b16 %v1544
      %v1619 = vunpack.c.l.b16 %v1545
      %v1620 = vunpack.c.l.b16 %v1546
      %v1621 = vunpack.c.l.b16 %v1547
      %v1622 = vunpack.c.l.b16 %v1548
      %v1623 = vunpack.c.l.b16 %v1549
      %v1624 = vunpack.c.l.b16 %v1550
      %v1625 = vunpack.c.l.b16 %v1551
      %v1626 = vunpack.c.l.b16 %v1552
      %v1627 = vunpack.c.l.b16 %v1553
      %v1628 = vunpack.c.l.b16 %v1554
      %v1629 = vunpack.c.l.b16 %v1555
      %v1630 = vunpack.c.l.b16 %v1556
      %v1631 = vunpack.c.l.b16 %v1557
      %v1632 = vunpack.c.l.b16 %v1558
      %v1633 = vunpack.c.l.b16 %v1559
      %v1634 = vunpack.c.l.b16 %v1560
      %v1635 = vunpack.c.l.b16 %v1561
      %v1636 = vunpack.c.l.b16 %v1562
      %v1637 = vunpack.c.l.b16 %v1563
      %v1638 = vunpack.c.l.b16 %v1564
      %v1639 = vunpack.c.l.b16 %v1565
      %v1640 = vunpack.c.l.b16 %v1566
      %v1641 = vpack.c.b16 %v1610, %v1609
      %v1642 = vpack.c.b16 %v1612, %v1611
      %v1643 = vpack.c.b16 %v1614, %v1613
      %v1644 = vpack.c.b16 %v1616, %v1615
      %v1645 = vpack.c.b16 %v1618, %v1617
      %v1646 = vpack.c.b16 %v1620, %v1619
      %v1647 = vpack.c.b16 %v1622, %v1621
      %v1648 = vpack.c.b16 %v1624, %v1623
      %v1649 = vpack.c.b16 %v1626, %v1625
      %v1650 = vpack.c.b16 %v1628, %v1627
      %v1651 = vpack.c.b16 %v1630, %v1629
      %v1652 = vpack.c.b16 %v1632, %v1631
      %v1653 = vpack.c.b16 %v1634, %v1633
      %v1654 = vpack.c.b16 %v1636, %v1635
      %v1655 = vpack.c.b16 %v1638, %v1637
      %v1656 = vpack.c.b16 %v1640, %v1639
      %1673 = vmatprep.subr.bf16.mxu0 0
      %1674 = vmatpush1.bf16.msra.mxu0 %v1641
      %1675 = vmatprep.subr.bf16.mxu0 0
      %1676 = vmatpush1.bf16.msra.mxu0 %v1642
      %1677 = vmatprep.subr.bf16.mxu0 0
      %1678 = vmatpush1.bf16.msra.mxu0 %v1643
      %1679 = vmatprep.subr.bf16.mxu0 0
      %1680 = vmatpush1.bf16.msra.mxu0 %v1644
      %1681 = vmatprep.subr.bf16.mxu0 0
      %1682 = vmatpush1.bf16.msra.mxu0 %v1645
      %1683 = vmatprep.subr.bf16.mxu0 0
      %1684 = vmatpush1.bf16.msra.mxu0 %v1646
      %1685 = vmatprep.subr.bf16.mxu0 0
      %1686 = vmatpush1.bf16.msra.mxu0 %v1647
      %1687 = vmatprep.subr.bf16.mxu0 0
      %1688 = vmatpush1.bf16.msra.mxu0 %v1648
      %1689 = vmatprep.subr.bf16.mxu0 0
      %1690 = vmatpush1.bf16.msra.mxu0 %v1649
      %1691 = vmatprep.subr.bf16.mxu0 0
      %1692 = vmatpush1.bf16.msra.mxu0 %v1650
      %1693 = vmatprep.subr.bf16.mxu0 0
      %1694 = vmatpush1.bf16.msra.mxu0 %v1651
      %1695 = vmatprep.subr.bf16.mxu0 0
      %1696 = vmatpush1.bf16.msra.mxu0 %v1652
      %1697 = vmatprep.subr.bf16.mxu0 0
      %1698 = vmatpush1.bf16.msra.mxu0 %v1653
      %1699 = vmatprep.subr.bf16.mxu0 0
      %1700 = vmatpush1.bf16.msra.mxu0 %v1654
      %1701 = vmatprep.subr.bf16.mxu0 0
      %1702 = vmatpush1.bf16.msra.mxu0 %v1655
      %1703 = vmatprep.subr.bf16.mxu0 0
      %1704 = vmatpush1.bf16.msra.mxu0 %v1656
      %1705 = vmatprep.mubr.bf16.mxu0 %v1574
      %1706 = vmatmul.mubr.bf16.gmra.mrb[0].mxu0 %v1573
      %v1707 = vpop.f32.mrb[0].mxu0
      %v1708 = vadd.f32 0.0, %v1707
      %v1709 = vpop.f32.mrb[0].mxu0
      %v1710 = vpop.f32.mrb[0].mxu0
      %v1711 = vadd.f32 0.0, %v1710
      %v1712 = vpop.f32.mrb[0].mxu0
      %1713 = vdwg.mxu0
      %v1714 = vadd.f32 %v1532, %v1708
      %v1715 = vadd.f32 %v1533, %v1711
      %s1716 = scalar_lea.vmem %s3, 896
      %v1717 = vld [vmem:[%s1716] sm:$0xf]
      %v1718 = vld [vmem:[%s1716 + $0x4] sm:$0xf]
      %v1719 = vld [vmem:[%s1716 + $0x8] sm:$0xf]
      %v1720 = vld [vmem:[%s1716 + $0xc] sm:$0xf]
      %v1721 = vld [vmem:[%s1716 + $0x10] sm:$0xf]
      %v1722 = vld [vmem:[%s1716 + $0x14] sm:$0xf]
      %v1723 = vld [vmem:[%s1716 + $0x18] sm:$0xf]
      %v1724 = vld [vmem:[%s1716 + $0x1c] sm:$0xf]
      %v1725 = vld [vmem:[%s1716 + $0x20] sm:$0xf]
      %v1726 = vld [vmem:[%s1716 + $0x24] sm:$0xf]
      %v1727 = vld [vmem:[%s1716 + $0x28] sm:$0xf]
      %v1728 = vld [vmem:[%s1716 + $0x2c] sm:$0xf]
      %v1729 = vld [vmem:[%s1716 + $0x30] sm:$0xf]
      %v1730 = vld [vmem:[%s1716 + $0x34] sm:$0xf]
      %v1731 = vld [vmem:[%s1716 + $0x38] sm:$0xf]
      %v1732 = vld [vmem:[%s1716 + $0x3c] sm:$0xf]
      %v1733 = vld [vmem:[%s1716 + $0x40] sm:$0xf]
      %v1734 = vld [vmem:[%s1716 + $0x44] sm:$0xf]
      %v1735 = vld [vmem:[%s1716 + $0x48] sm:$0xf]
      %v1736 = vld [vmem:[%s1716 + $0x4c] sm:$0xf]
      %v1737 = vld [vmem:[%s1716 + $0x50] sm:$0xf]
      %v1738 = vld [vmem:[%s1716 + $0x54] sm:$0xf]
      %v1739 = vld [vmem:[%s1716 + $0x58] sm:$0xf]
      %v1740 = vld [vmem:[%s1716 + $0x5c] sm:$0xf]
      %v1741 = vld [vmem:[%s1716 + $0x60] sm:$0xf]
      %v1742 = vld [vmem:[%s1716 + $0x64] sm:$0xf]
      %v1743 = vld [vmem:[%s1716 + $0x68] sm:$0xf]
      %v1744 = vld [vmem:[%s1716 + $0x6c] sm:$0xf]
      %v1745 = vld [vmem:[%s1716 + $0x70] sm:$0xf]
      %v1746 = vld [vmem:[%s1716 + $0x74] sm:$0xf]
      %v1747 = vld [vmem:[%s1716 + $0x78] sm:$0xf]
      %v1748 = vld [vmem:[%s1716 + $0x7c] sm:$0xf]
      %v1750 = vunpack.c.l.b16 %v406
      %v1751 = vunpack.c.h.b16 %v406
      %v1752 = vpack.c.b16 %v1750, %v1750
      %v1753 = vpack.c.b16 %v1751, %v1751
      %v1755 = vshrl.u32 %v1573, 16
      %v1757 = vshll.u32 %v1573, 16
      %v1759 = vrot.slane %v1757, 1
      %v1760 = vor.u32 %v1755, %v1759
      %v1762 = vshll.u32 %v1752, 16
      %v1764 = vrot.slane %v1762, 1
      %v1765 = vsel %vm485, %v1760, %v1764
      %v1767 = vshrl.u32 %v1574, 16
      %v1769 = vshll.u32 %v1574, 16
      %v1771 = vrot.slane %v1769, 1
      %v1772 = vor.u32 %v1767, %v1771
      %v1774 = vshll.u32 %v1753, 16
      %v1776 = vrot.slane %v1774, 1
      %v1777 = vsel %vm485, %v1772, %v1776
      %v1812 = vunpack.c.l.b16 %v1717
      %v1813 = vunpack.c.l.b16 %v1718
      %v1814 = vunpack.c.l.b16 %v1719
      %v1815 = vunpack.c.l.b16 %v1720
      %v1816 = vunpack.c.l.b16 %v1721
      %v1817 = vunpack.c.l.b16 %v1722
      %v1818 = vunpack.c.l.b16 %v1723
      %v1819 = vunpack.c.l.b16 %v1724
      %v1820 = vunpack.c.l.b16 %v1725
      %v1821 = vunpack.c.l.b16 %v1726
      %v1822 = vunpack.c.l.b16 %v1727
      %v1823 = vunpack.c.l.b16 %v1728
      %v1824 = vunpack.c.l.b16 %v1729
      %v1825 = vunpack.c.l.b16 %v1730
      %v1826 = vunpack.c.l.b16 %v1731
      %v1827 = vunpack.c.l.b16 %v1732
      %v1828 = vunpack.c.l.b16 %v1733
      %v1829 = vunpack.c.l.b16 %v1734
      %v1830 = vunpack.c.l.b16 %v1735
      %v1831 = vunpack.c.l.b16 %v1736
      %v1832 = vunpack.c.l.b16 %v1737
      %v1833 = vunpack.c.l.b16 %v1738
      %v1834 = vunpack.c.l.b16 %v1739
      %v1835 = vunpack.c.l.b16 %v1740
      %v1836 = vunpack.c.l.b16 %v1741
      %v1837 = vunpack.c.l.b16 %v1742
      %v1838 = vunpack.c.l.b16 %v1743
      %v1839 = vunpack.c.l.b16 %v1744
      %v1840 = vunpack.c.l.b16 %v1745
      %v1841 = vunpack.c.l.b16 %v1746
      %v1842 = vunpack.c.l.b16 %v1747
      %v1843 = vunpack.c.l.b16 %v1748
      %v1844 = vpack.c.b16 %v1813, %v1812
      %v1845 = vpack.c.b16 %v1815, %v1814
      %v1846 = vpack.c.b16 %v1817, %v1816
      %v1847 = vpack.c.b16 %v1819, %v1818
      %v1848 = vpack.c.b16 %v1821, %v1820
      %v1849 = vpack.c.b16 %v1823, %v1822
      %v1850 = vpack.c.b16 %v1825, %v1824
      %v1851 = vpack.c.b16 %v1827, %v1826
      %v1852 = vpack.c.b16 %v1829, %v1828
      %v1853 = vpack.c.b16 %v1831, %v1830
      %v1854 = vpack.c.b16 %v1833, %v1832
      %v1855 = vpack.c.b16 %v1835, %v1834
      %v1856 = vpack.c.b16 %v1837, %v1836
      %v1857 = vpack.c.b16 %v1839, %v1838
      %v1858 = vpack.c.b16 %v1841, %v1840
      %v1859 = vpack.c.b16 %v1843, %v1842
      %1876 = vmatprep.subr.bf16.mxu0 0
      %1877 = vmatpush1.bf16.msra.mxu0 %v1844
      %1878 = vmatprep.subr.bf16.mxu0 0
      %1879 = vmatpush1.bf16.msra.mxu0 %v1845
      %1880 = vmatprep.subr.bf16.mxu0 0
      %1881 = vmatpush1.bf16.msra.mxu0 %v1846
      %1882 = vmatprep.subr.bf16.mxu0 0
      %1883 = vmatpush1.bf16.msra.mxu0 %v1847
      %1884 = vmatprep.subr.bf16.mxu0 0
      %1885 = vmatpush1.bf16.msra.mxu0 %v1848
      %1886 = vmatprep.subr.bf16.mxu0 0
      %1887 = vmatpush1.bf16.msra.mxu0 %v1849
      %1888 = vmatprep.subr.bf16.mxu0 0
      %1889 = vmatpush1.bf16.msra.mxu0 %v1850
      %1890 = vmatprep.subr.bf16.mxu0 0
      %1891 = vmatpush1.bf16.msra.mxu0 %v1851
      %1892 = vmatprep.subr.bf16.mxu0 0
      %1893 = vmatpush1.bf16.msra.mxu0 %v1852
      %1894 = vmatprep.subr.bf16.mxu0 0
      %1895 = vmatpush1.bf16.msra.mxu0 %v1853
      %1896 = vmatprep.subr.bf16.mxu0 0
      %1897 = vmatpush1.bf16.msra.mxu0 %v1854
      %1898 = vmatprep.subr.bf16.mxu0 0
      %1899 = vmatpush1.bf16.msra.mxu0 %v1855
      %1900 = vmatprep.subr.bf16.mxu0 0
      %1901 = vmatpush1.bf16.msra.mxu0 %v1856
      %1902 = vmatprep.subr.bf16.mxu0 0
      %1903 = vmatpush1.bf16.msra.mxu0 %v1857
      %1904 = vmatprep.subr.bf16.mxu0 0
      %1905 = vmatpush1.bf16.msra.mxu0 %v1858
      %1906 = vmatprep.subr.bf16.mxu0 0
      %1907 = vmatpush1.bf16.msra.mxu0 %v1859
      %1908 = vmatprep.mubr.bf16.mxu0 %v1777
      %1909 = vmatmul.mubr.bf16.gmra.mrb[0].mxu0 %v1765
      %v1910 = vpop.f32.mrb[0].mxu0
      %v1911 = vadd.f32 0.0, %v1910
      %v1912 = vpop.f32.mrb[0].mxu0
      %v1913 = vpop.f32.mrb[0].mxu0
      %v1914 = vadd.f32 0.0, %v1913
      %v1915 = vpop.f32.mrb[0].mxu0
      %1916 = vdwg.mxu0
      %v1917 = vadd.f32 %v1714, %v1911
      %v1918 = vadd.f32 %v1715, %v1914
      %s1919 = scalar_lea.vmem %s3, 1024
      %v1920 = vld [vmem:[%s1919] sm:$0xf]
      %v1921 = vld [vmem:[%s1919 + $0x4] sm:$0xf]
      %v1922 = vld [vmem:[%s1919 + $0x8] sm:$0xf]
      %v1923 = vld [vmem:[%s1919 + $0xc] sm:$0xf]
      %v1924 = vld [vmem:[%s1919 + $0x10] sm:$0xf]
      %v1925 = vld [vmem:[%s1919 + $0x14] sm:$0xf]
      %v1926 = vld [vmem:[%s1919 + $0x18] sm:$0xf]
      %v1927 = vld [vmem:[%s1919 + $0x1c] sm:$0xf]
      %v1928 = vld [vmem:[%s1919 + $0x20] sm:$0xf]
      %v1929 = vld [vmem:[%s1919 + $0x24] sm:$0xf]
      %v1930 = vld [vmem:[%s1919 + $0x28] sm:$0xf]
      %v1931 = vld [vmem:[%s1919 + $0x2c] sm:$0xf]
      %v1932 = vld [vmem:[%s1919 + $0x30] sm:$0xf]
      %v1933 = vld [vmem:[%s1919 + $0x34] sm:$0xf]
      %v1934 = vld [vmem:[%s1919 + $0x38] sm:$0xf]
      %v1935 = vld [vmem:[%s1919 + $0x3c] sm:$0xf]
      %v1936 = vld [vmem:[%s1919 + $0x40] sm:$0xf]
      %v1937 = vld [vmem:[%s1919 + $0x44] sm:$0xf]
      %v1938 = vld [vmem:[%s1919 + $0x48] sm:$0xf]
      %v1939 = vld [vmem:[%s1919 + $0x4c] sm:$0xf]
      %v1940 = vld [vmem:[%s1919 + $0x50] sm:$0xf]
      %v1941 = vld [vmem:[%s1919 + $0x54] sm:$0xf]
      %v1942 = vld [vmem:[%s1919 + $0x58] sm:$0xf]
      %v1943 = vld [vmem:[%s1919 + $0x5c] sm:$0xf]
      %v1944 = vld [vmem:[%s1919 + $0x60] sm:$0xf]
      %v1945 = vld [vmem:[%s1919 + $0x64] sm:$0xf]
      %v1946 = vld [vmem:[%s1919 + $0x68] sm:$0xf]
      %v1947 = vld [vmem:[%s1919 + $0x6c] sm:$0xf]
      %v1948 = vld [vmem:[%s1919 + $0x70] sm:$0xf]
      %v1949 = vld [vmem:[%s1919 + $0x74] sm:$0xf]
      %v1950 = vld [vmem:[%s1919 + $0x78] sm:$0xf]
      %v1951 = vld [vmem:[%s1919 + $0x7c] sm:$0xf]
      %v1952 = vrot.slane %v1573, 1
      %v1953 = vrot.slane %v1752, 1
      %v1954 = vsel %vm821, %v1952, %v1953
      %v1955 = vrot.slane %v1574, 1
      %v1956 = vrot.slane %v1753, 1
      %v1957 = vsel %vm821, %v1955, %v1956
      %v1992 = vunpack.c.l.b16 %v1920
      %v1993 = vunpack.c.l.b16 %v1921
      %v1994 = vunpack.c.l.b16 %v1922
      %v1995 = vunpack.c.l.b16 %v1923
      %v1996 = vunpack.c.l.b16 %v1924
      %v1997 = vunpack.c.l.b16 %v1925
      %v1998 = vunpack.c.l.b16 %v1926
      %v1999 = vunpack.c.l.b16 %v1927
      %v2000 = vunpack.c.l.b16 %v1928
      %v2001 = vunpack.c.l.b16 %v1929
      %v2002 = vunpack.c.l.b16 %v1930
      %v2003 = vunpack.c.l.b16 %v1931
      %v2004 = vunpack.c.l.b16 %v1932
      %v2005 = vunpack.c.l.b16 %v1933
      %v2006 = vunpack.c.l.b16 %v1934
      %v2007 = vunpack.c.l.b16 %v1935
      %v2008 = vunpack.c.l.b16 %v1936
      %v2009 = vunpack.c.l.b16 %v1937
      %v2010 = vunpack.c.l.b16 %v1938
      %v2011 = vunpack.c.l.b16 %v1939
      %v2012 = vunpack.c.l.b16 %v1940
      %v2013 = vunpack.c.l.b16 %v1941
      %v2014 = vunpack.c.l.b16 %v1942
      %v2015 = vunpack.c.l.b16 %v1943
      %v2016 = vunpack.c.l.b16 %v1944
      %v2017 = vunpack.c.l.b16 %v1945
      %v2018 = vunpack.c.l.b16 %v1946
      %v2019 = vunpack.c.l.b16 %v1947
      %v2020 = vunpack.c.l.b16 %v1948
      %v2021 = vunpack.c.l.b16 %v1949
      %v2022 = vunpack.c.l.b16 %v1950
      %v2023 = vunpack.c.l.b16 %v1951
      %v2024 = vpack.c.b16 %v1993, %v1992
      %v2025 = vpack.c.b16 %v1995, %v1994
      %v2026 = vpack.c.b16 %v1997, %v1996
      %v2027 = vpack.c.b16 %v1999, %v1998
      %v2028 = vpack.c.b16 %v2001, %v2000
      %v2029 = vpack.c.b16 %v2003, %v2002
      %v2030 = vpack.c.b16 %v2005, %v2004
      %v2031 = vpack.c.b16 %v2007, %v2006
      %v2032 = vpack.c.b16 %v2009, %v2008
      %v2033 = vpack.c.b16 %v2011, %v2010
      %v2034 = vpack.c.b16 %v2013, %v2012
      %v2035 = vpack.c.b16 %v2015, %v2014
      %v2036 = vpack.c.b16 %v2017, %v2016
      %v2037 = vpack.c.b16 %v2019, %v2018
      %v2038 = vpack.c.b16 %v2021, %v2020
      %v2039 = vpack.c.b16 %v2023, %v2022
      %2056 = vmatprep.subr.bf16.mxu0 0
      %2057 = vmatpush1.bf16.msra.mxu0 %v2024
      %2058 = vmatprep.subr.bf16.mxu0 0
      %2059 = vmatpush1.bf16.msra.mxu0 %v2025
      %2060 = vmatprep.subr.bf16.mxu0 0
      %2061 = vmatpush1.bf16.msra.mxu0 %v2026
      %2062 = vmatprep.subr.bf16.mxu0 0
      %2063 = vmatpush1.bf16.msra.mxu0 %v2027
      %2064 = vmatprep.subr.bf16.mxu0 0
      %2065 = vmatpush1.bf16.msra.mxu0 %v2028
      %2066 = vmatprep.subr.bf16.mxu0 0
      %2067 = vmatpush1.bf16.msra.mxu0 %v2029
      %2068 = vmatprep.subr.bf16.mxu0 0
      %2069 = vmatpush1.bf16.msra.mxu0 %v2030
      %2070 = vmatprep.subr.bf16.mxu0 0
      %2071 = vmatpush1.bf16.msra.mxu0 %v2031
      %2072 = vmatprep.subr.bf16.mxu0 0
      %2073 = vmatpush1.bf16.msra.mxu0 %v2032
      %2074 = vmatprep.subr.bf16.mxu0 0
      %2075 = vmatpush1.bf16.msra.mxu0 %v2033
      %2076 = vmatprep.subr.bf16.mxu0 0
      %2077 = vmatpush1.bf16.msra.mxu0 %v2034
      %2078 = vmatprep.subr.bf16.mxu0 0
      %2079 = vmatpush1.bf16.msra.mxu0 %v2035
      %2080 = vmatprep.subr.bf16.mxu0 0
      %2081 = vmatpush1.bf16.msra.mxu0 %v2036
      %2082 = vmatprep.subr.bf16.mxu0 0
      %2083 = vmatpush1.bf16.msra.mxu0 %v2037
      %2084 = vmatprep.subr.bf16.mxu0 0
      %2085 = vmatpush1.bf16.msra.mxu0 %v2038
      %2086 = vmatprep.subr.bf16.mxu0 0
      %2087 = vmatpush1.bf16.msra.mxu0 %v2039
      %2088 = vmatprep.mubr.bf16.mxu0 %v1957
      %2089 = vmatmul.mubr.bf16.gmra.mrb[0].mxu0 %v1954
      %v2090 = vpop.f32.mrb[0].mxu0
      %v2091 = vadd.f32 0.0, %v2090
      %v2092 = vpop.f32.mrb[0].mxu0
      %v2093 = vpop.f32.mrb[0].mxu0
      %v2094 = vadd.f32 0.0, %v2093
      %v2095 = vpop.f32.mrb[0].mxu0
      %2096 = vdwg.mxu0
      %v2097 = vadd.f32 %v1917, %v2091
      %v2098 = vadd.f32 %v1918, %v2094
      %v2099 = vld [vmem:[%s4] sm:$0x1]
      %v2101 = vlaneseq
      %v2102 = vshrl.u32 %v2101, 7
      %v2103 = vsub.s32 0, %v2102
      %v2104 = vrot.slane %v2099, %v2103
      %v2106 = vadd.f32 %v2097, %v2104
      %v2107 = vadd.f32 %v2098, %v2104
      %v2108 = vmax.f32 %v2106, 0.0
      %v2109 = vmax.f32 %v2107, 0.0
      %v2110 = vpack.c.bf16 %v2109, %v2108
      %v2111 = vld [vmem:[%s5] sm:$0xf]
      %v2112 = vld [vmem:[%s5 + $0x4] sm:$0xf]
      %v2113 = vld [vmem:[%s5 + $0x8] sm:$0xf]
      %v2114 = vld [vmem:[%s5 + $0xc] sm:$0xf]
      %v2115 = vld [vmem:[%s5 + $0x10] sm:$0xf]
      %v2116 = vld [vmem:[%s5 + $0x14] sm:$0xf]
      %v2117 = vld [vmem:[%s5 + $0x18] sm:$0xf]
      %v2118 = vld [vmem:[%s5 + $0x1c] sm:$0xf]
      %v2119 = vld [vmem:[%s5 + $0x20] sm:$0xf]
      %v2120 = vld [vmem:[%s5 + $0x24] sm:$0xf]
      %v2121 = vld [vmem:[%s5 + $0x28] sm:$0xf]
      %v2122 = vld [vmem:[%s5 + $0x2c] sm:$0xf]
      %v2123 = vld [vmem:[%s5 + $0x30] sm:$0xf]
      %v2124 = vld [vmem:[%s5 + $0x34] sm:$0xf]
      %v2125 = vld [vmem:[%s5 + $0x38] sm:$0xf]
      %v2126 = vld [vmem:[%s5 + $0x3c] sm:$0xf]
      %v2127 = vld [vmem:[%s6] sm:$0x1]
      %v2129 = vlaneseq
      %v2130 = vshrl.u32 %v2129, 7
      %v2131 = vsub.s32 0, %v2130
      %v2132 = vrot.slane %v2127, %v2131
      %v2150 = vunpack.c.l.b16 %v2111
      %v2151 = vunpack.c.l.b16 %v2112
      %v2152 = vunpack.c.l.b16 %v2113
      %v2153 = vunpack.c.l.b16 %v2114
      %v2154 = vunpack.c.l.b16 %v2115
      %v2155 = vunpack.c.l.b16 %v2116
      %v2156 = vunpack.c.l.b16 %v2117
      %v2157 = vunpack.c.l.b16 %v2118
      %v2158 = vunpack.c.l.b16 %v2119
      %v2159 = vunpack.c.l.b16 %v2120
      %v2160 = vunpack.c.l.b16 %v2121
      %v2161 = vunpack.c.l.b16 %v2122
      %v2162 = vunpack.c.l.b16 %v2123
      %v2163 = vunpack.c.l.b16 %v2124
      %v2164 = vunpack.c.l.b16 %v2125
      %v2165 = vunpack.c.l.b16 %v2126
      %v2166 = vpack.c.b16 %v2151, %v2150
      %v2167 = vpack.c.b16 %v2153, %v2152
      %v2168 = vpack.c.b16 %v2155, %v2154
      %v2169 = vpack.c.b16 %v2157, %v2156
      %v2170 = vpack.c.b16 %v2159, %v2158
      %v2171 = vpack.c.b16 %v2161, %v2160
      %v2172 = vpack.c.b16 %v2163, %v2162
      %v2173 = vpack.c.b16 %v2165, %v2164
      %2182 = vmatprep.subr.bf16.mxu0 0
      %2183 = vmatpush1.bf16.msra.mxu0 %v2166
      %2184 = vmatprep.subr.bf16.mxu0 0
      %2185 = vmatpush1.bf16.msra.mxu0 %v2167
      %2186 = vmatprep.subr.bf16.mxu0 0
      %2187 = vmatpush1.bf16.msra.mxu0 %v2168
      %2188 = vmatprep.subr.bf16.mxu0 0
      %2189 = vmatpush1.bf16.msra.mxu0 %v2169
      %2190 = vmatprep.subr.bf16.mxu0 0
      %2191 = vmatpush1.bf16.msra.mxu0 %v2170
      %2192 = vmatprep.subr.bf16.mxu0 0
      %2193 = vmatpush1.bf16.msra.mxu0 %v2171
      %2194 = vmatprep.subr.bf16.mxu0 0
      %2195 = vmatpush1.bf16.msra.mxu0 %v2172
      %2196 = vmatprep.subr.bf16.mxu0 0
      %2197 = vmatpush1.bf16.msra.mxu0 %v2173
      %2198 = vmatprep.subr.bf16.mxu0 0
      %2199 = vmatpush1.bf16.msra.mxu0 0
      %2200 = vmatprep.subr.bf16.mxu0 0
      %2201 = vmatpush1.bf16.msra.mxu0 0
      %2202 = vmatprep.subr.bf16.mxu0 0
      %2203 = vmatpush1.bf16.msra.mxu0 0
      %2204 = vmatprep.subr.bf16.mxu0 0
      %2205 = vmatpush1.bf16.msra.mxu0 0
      %2206 = vmatprep.subr.bf16.mxu0 0
      %2207 = vmatpush1.bf16.msra.mxu0 0
      %2208 = vmatprep.subr.bf16.mxu0 0
      %2209 = vmatpush1.bf16.msra.mxu0 0
      %2210 = vmatprep.subr.bf16.mxu0 0
      %2211 = vmatpush1.bf16.msra.mxu0 0
      %2212 = vmatprep.subr.bf16.mxu0 0
      %2213 = vmatpush1.bf16.msra.mxu0 0
      %2214 = vmatprep.mubr.bf16.mxu0 0
      %2215 = vmatmul.mubr.bf16.gmra.mrb[0].mxu0 %v2110
      %v2216 = vpop.f32.mrb[0].mxu0
      %v2217 = vadd.f32 %v2132, %v2216
      %v2218 = vpop.f32.mrb[0].mxu0
      %v2219 = vpop.f32.mrb[0].mxu0
      %v2220 = vadd.f32 %v2132, %v2219
      %v2221 = vpop.f32.mrb[0].mxu0
      %2222 = vdwg.mxu0
      %vm2223 = vcmask 785408
      %2224 = vst.msk [vmem:[%s396] sm:$0xff] %vm2223, %v2217
      %2225 = vst.msk [vmem:[%s396 + $0x8] sm:$0xff] %vm2223, %v2220
      %p2226 = scmp.lt.s32.totalorder %s22, 1
      %s2227 = scalar_select %p2226, %s22, 1
      %p2228 = scmp.lt.s32.totalorder %s23, 15
      %s2229 = scalar_select %p2228, %s23, 15
      %s2230 = smul.addr %s2229, 2
      %s2231 = smul.addr %s2227, 32
      %s2232 = sadd.s32 %s2230, %s2231
      %s2233 = smul.addr %s2232, 8
      %s2234 = scalar_lea.vmem %s7, %s2233
      // Predicated region
      $region49: #{depth_aware_fe.4} parent=47 // pred_check
        %p2235 = pneg %p222
      $region50: #{depth_aware_fe.4} parent=47 // pred_check_branch
        %2237 = sbr.rel (%p2235) target = $region52
      $region51: #{depth_aware_fe.4} parent=47 // pred_region
        _
      $region52: #{depth_aware_fe.4} parent=47 // pred_fallthru
        _
    $region48: #{depth_aware_fe.4} parent=5 // pred_fallthru
      _
    %p2238 = scmp.le.s32.totalorder 2, %s13
    // Predicated region
    $region53: #{depth_aware_fe.4} parent=5 // pred_check
      %p2239 = pneg %p2238
    $region54: #{depth_aware_fe.4} parent=5 // pred_check_branch
      %2241 = sbr.rel (%p2239) target = $region56
    $region55: #{depth_aware_fe.4} parent=5 // pred_region
      %s2242 = ssub.s32 %s13, 2
      // Predicated region
      $region57: #{depth_aware_fe.4} parent=55 // pred_check
        %p2243 = pneg %p228
      $region58: #{depth_aware_fe.4} parent=55 // pred_check_branch
        %2245 = sbr.rel (%p2243) target = $region60
      $region59: #{depth_aware_fe.4} parent=55 // pred_region
        %p2246 = scmp.lt.s32.totalorder %s24, 1
        %s2247 = scalar_select %p2246, %s24, 1
        %p2248 = scmp.lt.s32.totalorder %s25, 15
        %s2249 = scalar_select %p2248, %s25, 15
        %s2250 = smul.addr %s2249, 2
        %s2251 = smul.addr %s2247, 32
        %s2252 = sadd.s32 %s2250, %s2251
        %s2253 = smul.addr %s2252, 8
        %s2254 = scalar_lea.vmem %s7, %s2253
      $region60: #{depth_aware_fe.4} parent=55 // pred_fallthru
        _
    $region56: #{depth_aware_fe.4} parent=5 // pred_fallthru
      _
  $region6: #{depth_aware_fe.4} parent=0 // loop_footer
    %s17 = sadd.s32 1, %s13
  $region7: #{depth_aware_fe.4} parent=0 // loop_footer_branch
    %12 = sbr.rel target = $region3
  $region8: #{depth_aware_fe.4} parent=0 // loop_exit
    _

// kernel: depth_aware_fe.6
$region0: #{depth_aware_fe.6}
  #allocation0 [shape = 'u32[]', space=smem, size = 0x4, offset = 0x4, fixed_abs, tag = 'smem constant byte address 0x4 - core index']
  #allocation1 [shape = 'u32[144,128]{1,0:T(1,128)}', space=vmem, size = 0x12000, scoped, tag = 'internal scratch']
  %s0 = inlined_call_operand.vmem [shape: f32[2,12,64], index: 0, kind: input, shape index: {}]
  %s1 = inlined_call_operand.vmem [shape: f32[2,64,256], index: 1, kind: input, shape index: {}]
  %s2 = inlined_call_operand.vmem [shape: bf16[256,256], index: 2, kind: input, shape index: {}]
  %s3 = inlined_call_operand.vmem [shape: f32[1,256], index: 3, kind: input, shape index: {}]
  %s4 = inlined_call_operand.vmem [shape: f32[2,12,256], index: 4, kind: output, shape index: {}]
  %s5 = sld [smem:[#allocation0]]
  $region53: #{depth_aware_fe.6} parent=0
    _
  %s7 = ssub.s32 1, %s5
  %s8 = scalar_select 0, %s7, %s5
  loop: start=0, step=1, limit=4
  $region2: #{depth_aware_fe.6} parent=0 // loop_pre_header
    _
  $region3: #{depth_aware_fe.6} parent=0 // loop_header
    %s10 = sphi 0, %s14
    %p11 = scmp.ge.s32.totalorder %s10, 4
    %s17 = sphi 0, %s29
    %s18 = sphi 0, %s25
    %s19 = sphi 0, %s17
    %s20 = sphi 0, %s18
    %s21 = sphi 0, %s19
    %s22 = sphi 0, %s20
    %s34 = sphi 0, %s36
    %s37 = sphi 0, %s34
    %s38 = sphi 0, %s37
    %s54 = sphi 0, %s38
    %s62 = sphi 0, %s64
    %s65 = sphi 0, %s62
    %s66 = sphi 0, %s65
    %s82 = sphi 0, %s66
    %s86 = sphi 0, %s86
    %s88 = sphi 0, %s86
    %s89 = sphi 0, %s88
    %s103 = sphi 0, %s89
    %s107 = sphi 0, %s107
    %s109 = sphi 0, %s107
    %s110 = sphi 0, %s109
    %s124 = sphi 0, %s110
    %s130 = sphi 0, %s132
    %s133 = sphi 0, %s130
    %s134 = sphi 0, %s133
    %s150 = sphi 0, %s134
  $region4: #{depth_aware_fe.6} parent=0 // loop_header_branch
    %13 = sbr.rel (%p11) target = $region8
  $region5: #{depth_aware_fe.6} parent=0 // loop_body
    %s15 = ssub.s32 %s10, 1
    %s16 = ssub.s32 %s10, 2
    %s23 = sadd.s32 1, %s18
    %p24 = scmp.ge.s32.totalorder %s23, 1
    %s25 = scalar_select %p24, 0, %s23
    %s26 = sadd.s32 1, %s17
    %s27 = scalar_select %p24, %s26, %s17
    %p28 = scmp.ge.s32.totalorder %s27, 2
    %s29 = scalar_select %p28, 0, %s27
    %s30 = ssub.s32 %s17, %s29
    %s31 = ssub.s32 %s18, %s25
    %s32 = sor.u32 %s30, %s31
    %p33 = scmp.eq.s32.totalorder %s32, 0
    %s35 = sadd.s32 %s34, 1
    %s36 = scalar_select %p33, %s34, %s35
    %p39 = pneg %p33
    %p40 = scmp.eq.s32.totalorder %s10, 1
    %p41 = por %p39, %p40
    %p42 = scmp.ne.s32.totalorder %s34, %s37
    %p43 = scmp.eq.s32.totalorder %s10, 0
    %p44 = por %p42, %p43
    %p45 = scmp.ne.s32.totalorder %s34, %s37
    %p46 = scmp.eq.s32.totalorder %s15, 1
    %p47 = por %p45, %p46
    %p48 = scmp.ne.s32.totalorder %s37, %s38
    %p49 = scmp.eq.s32.totalorder %s15, 0
    %p50 = por %p48, %p49
    %p51 = scmp.ne.s32.totalorder %s37, %s38
    %p52 = scmp.eq.s32.totalorder %s16, 1
    %p53 = por %p51, %p52
    %p55 = scmp.ne.s32.totalorder %s38, %s54
    %p56 = scmp.eq.s32.totalorder %s16, 0
    %p57 = por %p55, %p56
    %s58 = ssub.s32 %s17, %s29
    %s59 = ssub.s32 %s18, %s25
    %s60 = sor.u32 %s58, %s59
    %p61 = scmp.eq.s32.totalorder %s60, 0
    %s63 = sadd.s32 %s62, 1
    %s64 = scalar_select %p61, %s62, %s63
    %p67 = pneg %p61
    %p68 = scmp.eq.s32.totalorder %s10, 1
    %p69 = por %p67, %p68
    %p70 = scmp.ne.s32.totalorder %s62, %s65
    %p71 = scmp.eq.s32.totalorder %s10, 0
    %p72 = por %p70, %p71
    %p73 = scmp.ne.s32.totalorder %s62, %s65
    %p74 = scmp.eq.s32.totalorder %s15, 1
    %p75 = por %p73, %p74
    %p76 = scmp.ne.s32.totalorder %s65, %s66
    %p77 = scmp.eq.s32.totalorder %s15, 0
    %p78 = por %p76, %p77
    %p79 = scmp.ne.s32.totalorder %s65, %s66
    %p80 = scmp.eq.s32.totalorder %s16, 1
    %p81 = por %p79, %p80
    %p83 = scmp.ne.s32.totalorder %s66, %s82
    %p84 = scmp.eq.s32.totalorder %s16, 0
    %p85 = por %p83, %p84
    %s87 = sadd.s32 %s86, 1
    %p90 = scmp.eq.s32.totalorder %s10, 1
    %p91 = scmp.ne.s32.totalorder %s86, %s88
    %p92 = scmp.eq.s32.totalorder %s10, 0
    %p93 = por %p91, %p92
    %p94 = scmp.ne.s32.totalorder %s86, %s88
    %p95 = scmp.eq.s32.totalorder %s15, 1
    %p96 = por %p94, %p95
    %p97 = scmp.ne.s32.totalorder %s88, %s89
    %p98 = scmp.eq.s32.totalorder %s15, 0
    %p99 = por %p97, %p98
    %p100 = scmp.ne.s32.totalorder %s88, %s89
    %p101 = scmp.eq.s32.totalorder %s16, 1
    %p102 = por %p100, %p101
    %p104 = scmp.ne.s32.totalorder %s89, %s103
    %p105 = scmp.eq.s32.totalorder %s16, 0
    %p106 = por %p104, %p105
    %s108 = sadd.s32 %s107, 1
    %p111 = scmp.eq.s32.totalorder %s10, 1
    %p112 = scmp.ne.s32.totalorder %s107, %s109
    %p113 = scmp.eq.s32.totalorder %s10, 0
    %p114 = por %p112, %p113
    %p115 = scmp.ne.s32.totalorder %s107, %s109
    %p116 = scmp.eq.s32.totalorder %s15, 1
    %p117 = por %p115, %p116
    %p118 = scmp.ne.s32.totalorder %s109, %s110
    %p119 = scmp.eq.s32.totalorder %s15, 0
    %p120 = por %p118, %p119
    %p121 = scmp.ne.s32.totalorder %s109, %s110
    %p122 = scmp.eq.s32.totalorder %s16, 1
    %p123 = por %p121, %p122
    %p125 = scmp.ne.s32.totalorder %s110, %s124
    %p126 = scmp.eq.s32.totalorder %s16, 0
    %p127 = por %p125, %p126
    %s128 = ssub.s32 %s17, %s29
    %p129 = scmp.eq.s32.totalorder %s128, 0
    %s131 = sadd.s32 %s130, 1
    %s132 = scalar_select %p129, %s130, %s131
    %p135 = pneg %p129
    %p136 = scmp.eq.s32.totalorder %s10, 1
    %p137 = por %p135, %p136
    %p138 = scmp.ne.s32.totalorder %s130, %s133
    %p139 = scmp.eq.s32.totalorder %s10, 0
    %p140 = por %p138, %p139
    %p141 = scmp.ne.s32.totalorder %s130, %s133
    %p142 = scmp.eq.s32.totalorder %s15, 1
    %p143 = por %p141, %p142
    %p144 = scmp.ne.s32.totalorder %s133, %s134
    %p145 = scmp.eq.s32.totalorder %s15, 0
    %p146 = por %p144, %p145
    %p147 = scmp.ne.s32.totalorder %s133, %s134
    %p148 = scmp.eq.s32.totalorder %s16, 1
    %p149 = por %p147, %p148
    %p151 = scmp.ne.s32.totalorder %s134, %s150
    %p152 = scmp.eq.s32.totalorder %s16, 0
    %p153 = por %p151, %p152
    %p154 = scmp.le.s32.totalorder 1, %s10
    %p155 = scmp.lt.s32.totalorder %s10, 3
    %p156 = pnand %p154, %p155
    %p157 = pneg %p156
    // Predicated region
    $region9: #{depth_aware_fe.6} parent=5 // pred_check
      _
    $region10: #{depth_aware_fe.6} parent=5 // pred_check_branch
      %159 = sbr.rel (%p156) target = $region12
    $region11: #{depth_aware_fe.6} parent=5 // pred_region
      %s160 = ssub.s32 %s10, 1
      // Predicated region
      $region13: #{depth_aware_fe.6} parent=11 // pred_check
        %p161 = pneg %p99
      $region14: #{depth_aware_fe.6} parent=11 // pred_check_branch
        %163 = sbr.rel (%p161) target = $region16
      $region15: #{depth_aware_fe.6} parent=11 // pred_region
        _
      $region16: #{depth_aware_fe.6} parent=11 // pred_fallthru
        _
      // Predicated region
      $region17: #{depth_aware_fe.6} parent=11 // pred_check
        %p164 = pneg %p120
      $region18: #{depth_aware_fe.6} parent=11 // pred_check_branch
        %166 = sbr.rel (%p164) target = $region20
      $region19: #{depth_aware_fe.6} parent=11 // pred_region
        _
      $region20: #{depth_aware_fe.6} parent=11 // pred_fallthru
        _
    $region12: #{depth_aware_fe.6} parent=5 // pred_fallthru
      _
    %p167 = scmp.lt.s32.totalorder %s10, 2
    // Predicated region
    $region21: #{depth_aware_fe.6} parent=5 // pred_check
      %p168 = pneg %p167
    $region22: #{depth_aware_fe.6} parent=5 // pred_check_branch
      %170 = sbr.rel (%p168) target = $region24
    $region23: #{depth_aware_fe.6} parent=5 // pred_region
      // Predicated region
      $region25: #{depth_aware_fe.6} parent=23 // pred_check
        %p171 = pneg %p44
      $region26: #{depth_aware_fe.6} parent=23 // pred_check_branch
        %173 = sbr.rel (%p171) target = $region28
      $region27: #{depth_aware_fe.6} parent=23 // pred_region
        %p174 = scmp.lt.s32.totalorder %s17, 1
        %s175 = scalar_select %p174, %s17, 1
        %p176 = scmp.lt.s32.totalorder %s18, 0
        %s177 = scalar_select %p176, %s18, 0
        %s178 = smul.addr %s175, 2
        %s179 = sadd.s32 %s177, %s178
        %s180 = smul.addr %s179, 8
        %s181 = scalar_lea.vmem %s0, %s180
      $region28: #{depth_aware_fe.6} parent=23 // pred_fallthru
        _
      // Predicated region
      $region29: #{depth_aware_fe.6} parent=23 // pred_check
        %p182 = pneg %p72
      $region30: #{depth_aware_fe.6} parent=23 // pred_check_branch
        %184 = sbr.rel (%p182) target = $region32
      $region31: #{depth_aware_fe.6} parent=23 // pred_region
        %s185 = smul.u32 8, %s18
        %p186 = scmp.lt.s32.totalorder %s17, 1
        %s187 = scalar_select %p186, %s17, 1
        %p188 = scmp.lt.s32.totalorder %s185, 7
        %s189 = scalar_select %p188, %s185, 7
        %s190 = smul.addr %s189, 2
        %s191 = smul.addr %s187, 16
        %s192 = sadd.s32 %s190, %s191
        %s193 = smul.addr %s192, 8
        %s194 = scalar_lea.vmem %s1, %s193
        %s195 = smul.u32 8, %s18
      $region32: #{depth_aware_fe.6} parent=23 // pred_fallthru
        _
    $region24: #{depth_aware_fe.6} parent=5 // pred_fallthru
      _
    %p196 = scmp.le.s32.totalorder 1, %s10
    %p197 = scmp.lt.s32.totalorder %s10, 3
    %p198 = pnand %p196, %p197
    %p199 = pneg %p198
    // Predicated region
    $region33: #{depth_aware_fe.6} parent=5 // pred_check
      _
    $region34: #{depth_aware_fe.6} parent=5 // pred_check_branch
      %201 = sbr.rel (%p198) target = $region36
    $region35: #{depth_aware_fe.6} parent=5 // pred_region
      %s202 = ssub.s32 %s10, 1
      %p203 = scmp.lt.s32.totalorder %s19, 1
      %s204 = scalar_select %p203, %s19, 1
      %p205 = scmp.lt.s32.totalorder %s20, 0
      %s206 = scalar_select %p205, %s20, 0
      %s207 = smul.addr %s204, 2
      %s208 = sadd.s32 %s206, %s207
      %s209 = smul.addr %s208, 8
      %s210 = scalar_lea.vmem %s0, %s209
      %p211 = pneg %p50
      %p212 = pneg %p47
      %s213 = smul.u32 8, %s20
      %p214 = scmp.lt.s32.totalorder %s19, 1
      %s215 = scalar_select %p214, %s19, 1
      %p216 = scmp.lt.s32.totalorder %s213, 7
      %s217 = scalar_select %p216, %s213, 7
      %s218 = smul.addr %s217, 2
      %s219 = smul.addr %s215, 16
      %s220 = sadd.s32 %s218, %s219
      %s221 = smul.addr %s220, 8
      %s222 = scalar_lea.vmem %s1, %s221
      %p223 = pneg %p78
      %p224 = pneg %p75
      %p225 = pneg %p99
      %p226 = pneg %p96
      %p227 = pneg %p120
      %p228 = pneg %p117
      %p229 = pneg %p146
      %p230 = pneg %p143
      %p231 = scmp.lt.s32.totalorder %s19, 1
      %s232 = scalar_select %p231, %s19, 1
      %s233 = smul.addr %s232, 4
      %s234 = smul.addr %s233, 8
      %s235 = scalar_lea.vmem %s4, %s234
      %p236 = scmp.lt.s32.totalorder %s19, 1
      %s237 = scalar_select %p236, %s19, 1
      %p238 = scmp.lt.s32.totalorder %s20, 0
      %s239 = scalar_select %p238, %s20, 0
      %s240 = smul.addr %s237, 2
      %s241 = sadd.s32 %s239, %s240
      %s242 = smul.addr %s241, 8
      %s243 = scalar_lea.vmem %s0, %s242
      %s244 = smul.u32 8, %s20
      %p245 = scmp.lt.s32.totalorder %s19, 1
      %s246 = scalar_select %p245, %s19, 1
      %p247 = scmp.lt.s32.totalorder %s244, 7
      %s248 = scalar_select %p247, %s244, 7
      %s249 = smul.addr %s248, 2
      %s250 = smul.addr %s246, 16
      %s251 = sadd.s32 %s249, %s250
      %s252 = smul.addr %s251, 8
      %s253 = scalar_lea.vmem %s1, %s252
      %s254 = smul.u32 8, %s20
      %p255 = scmp.lt.s32.totalorder %s19, 1
      %s256 = scalar_select %p255, %s19, 1
      %s257 = smul.addr %s256, 4
      %s258 = smul.addr %s257, 8
      %s259 = scalar_lea.vmem %s4, %s258
      %p261 = scmp.eq.s32.totalorder %s20, 0
      // Predicated region
      $region37: #{depth_aware_fe.6} parent=35 // pred_check
        %p262 = pneg %p261
      $region38: #{depth_aware_fe.6} parent=35 // pred_check_branch
        %264 = sbr.rel (%p262) target = $region40
      $region39: #{depth_aware_fe.6} parent=35 // pred_region
        %265 = vst [vmem:[%s259] sm:$0xff] 0.0
        %266 = vst [vmem:[%s259 + $0x8] sm:$0xff] 0.0
        %267 = vst [vmem:[%s259 + $0x10] sm:$0xf] 0.0
        %268 = vst [vmem:[%s259 + $0x18] sm:$0xf] 0.0
      $region40: #{depth_aware_fe.6} parent=35 // pred_fallthru
        _
      %v269 = vld [vmem:[%s253] sm:$0xff]
      %v270 = vld [vmem:[%s253 + $0x8] sm:$0xff]
      %v271 = vld [vmem:[%s253 + $0x10] sm:$0xff]
      %v272 = vld [vmem:[%s253 + $0x18] sm:$0xff]
      %v273 = vld [vmem:[%s253 + $0x20] sm:$0xff]
      %v274 = vld [vmem:[%s253 + $0x28] sm:$0xff]
      %v275 = vld [vmem:[%s253 + $0x30] sm:$0xff]
      %v276 = vld [vmem:[%s253 + $0x38] sm:$0xff]
      %v277 = vld [vmem:[%s253 + $0x40] sm:$0xff]
      %v278 = vld [vmem:[%s253 + $0x48] sm:$0xff]
      %v279 = vld [vmem:[%s253 + $0x50] sm:$0xff]
      %v280 = vld [vmem:[%s253 + $0x58] sm:$0xff]
      %v281 = vld [vmem:[%s253 + $0x60] sm:$0xff]
      %v282 = vld [vmem:[%s253 + $0x68] sm:$0xff]
      %v283 = vld [vmem:[%s253 + $0x70] sm:$0xff]
      %v284 = vld [vmem:[%s253 + $0x78] sm:$0xff]
      %v285 = vpack.c.bf16 %v271, %v269
      %v286 = vpack.c.bf16 %v272, %v270
      %v287 = vpack.c.bf16 %v275, %v273
      %v288 = vpack.c.bf16 %v276, %v274
      %v289 = vpack.c.bf16 %v279, %v277
      %v290 = vpack.c.bf16 %v280, %v278
      %v291 = vpack.c.bf16 %v283, %v281
      %v292 = vpack.c.bf16 %v284, %v282
      %v293 = vld [vmem:[%s2] sm:$0xff]
      %v294 = vld [vmem:[%s2 + $0x8] sm:$0xff]
      %v295 = vld [vmem:[%s2 + $0x10] sm:$0xff]
      %v296 = vld [vmem:[%s2 + $0x18] sm:$0xff]
      %v297 = vld [vmem:[%s2 + $0x20] sm:$0xff]
      %v298 = vld [vmem:[%s2 + $0x28] sm:$0xff]
      %v299 = vld [vmem:[%s2 + $0x30] sm:$0xff]
      %v300 = vld [vmem:[%s2 + $0x38] sm:$0xff]
      %v301 = vld [vmem:[%s2 + $0x40] sm:$0xff]
      %v302 = vld [vmem:[%s2 + $0x48] sm:$0xff]
      %v303 = vld [vmem:[%s2 + $0x50] sm:$0xff]
      %v304 = vld [vmem:[%s2 + $0x58] sm:$0xff]
      %v305 = vld [vmem:[%s2 + $0x60] sm:$0xff]
      %v306 = vld [vmem:[%s2 + $0x68] sm:$0xff]
      %v307 = vld [vmem:[%s2 + $0x70] sm:$0xff]
      %v308 = vld [vmem:[%s2 + $0x78] sm:$0xff]
      %v309 = vld [vmem:[%s2 + $0x80] sm:$0xff]
      %v310 = vld [vmem:[%s2 + $0x88] sm:$0xff]
      %v311 = vld [vmem:[%s2 + $0x90] sm:$0xff]
      %v312 = vld [vmem:[%s2 + $0x98] sm:$0xff]
      %v313 = vld [vmem:[%s2 + $0xa0] sm:$0xff]
      %v314 = vld [vmem:[%s2 + $0xa8] sm:$0xff]
      %v315 = vld [vmem:[%s2 + $0xb0] sm:$0xff]
      %v316 = vld [vmem:[%s2 + $0xb8] sm:$0xff]
      %v317 = vld [vmem:[%s2 + $0xc0] sm:$0xff]
      %v318 = vld [vmem:[%s2 + $0xc8] sm:$0xff]
      %v319 = vld [vmem:[%s2 + $0xd0] sm:$0xff]
      %v320 = vld [vmem:[%s2 + $0xd8] sm:$0xff]
      %v321 = vld [vmem:[%s2 + $0xe0] sm:$0xff]
      %v322 = vld [vmem:[%s2 + $0xe8] sm:$0xff]
      %v323 = vld [vmem:[%s2 + $0xf0] sm:$0xff]
      %v324 = vld [vmem:[%s2 + $0xf8] sm:$0xff]
      %v325 = vld [vmem:[%s3] sm:$0x3]
      %v327 = vlaneseq
      %v328 = vshrl.u32 %v327, 7
      %v329 = vsub.s32 0, %v328
      %v330 = vrot.slane %v325, %v329
      %v331 = vlaneseq
      %v332 = vshrl.u32 %v331, 7
      %v333 = vsub.s32 1, %v332
      %v334 = vrot.slane %v325, %v333
      %v369 = vunpack.c.l.b16 %v293
      %v370 = vunpack.c.h.b16 %v293
      %v371 = vunpack.c.l.b16 %v294
      %v372 = vunpack.c.h.b16 %v294
      %v373 = vunpack.c.l.b16 %v295
      %v374 = vunpack.c.h.b16 %v295
      %v375 = vunpack.c.l.b16 %v296
      %v376 = vunpack.c.h.b16 %v296
      %v377 = vunpack.c.l.b16 %v297
      %v378 = vunpack.c.h.b16 %v297
      %v379 = vunpack.c.l.b16 %v298
      %v380 = vunpack.c.h.b16 %v298
      %v381 = vunpack.c.l.b16 %v299
      %v382 = vunpack.c.h.b16 %v299
      %v383 = vunpack.c.l.b16 %v300
      %v384 = vunpack.c.h.b16 %v300
      %v385 = vunpack.c.l.b16 %v301
      %v386 = vunpack.c.h.b16 %v301
      %v387 = vunpack.c.l.b16 %v302
      %v388 = vunpack.c.h.b16 %v302
      %v389 = vunpack.c.l.b16 %v303
      %v390 = vunpack.c.h.b16 %v303
      %v391 = vunpack.c.l.b16 %v304
      %v392 = vunpack.c.h.b16 %v304
      %v393 = vunpack.c.l.b16 %v305
      %v394 = vunpack.c.h.b16 %v305
      %v395 = vunpack.c.l.b16 %v306
      %v396 = vunpack.c.h.b16 %v306
      %v397 = vunpack.c.l.b16 %v307
      %v398 = vunpack.c.h.b16 %v307
      %v399 = vunpack.c.l.b16 %v308
      %v400 = vunpack.c.h.b16 %v308
      %v401 = vunpack.c.l.b16 %v309
      %v402 = vunpack.c.h.b16 %v309
      %v403 = vunpack.c.l.b16 %v310
      %v404 = vunpack.c.h.b16 %v310
      %v405 = vunpack.c.l.b16 %v311
      %v406 = vunpack.c.h.b16 %v311
      %v407 = vunpack.c.l.b16 %v312
      %v408 = vunpack.c.h.b16 %v312
      %v409 = vunpack.c.l.b16 %v313
      %v410 = vunpack.c.h.b16 %v313
      %v411 = vunpack.c.l.b16 %v314
      %v412 = vunpack.c.h.b16 %v314
      %v413 = vunpack.c.l.b16 %v315
      %v414 = vunpack.c.h.b16 %v315
      %v415 = vunpack.c.l.b16 %v316
      %v416 = vunpack.c.h.b16 %v316
      %v417 = vunpack.c.l.b16 %v317
      %v418 = vunpack.c.h.b16 %v317
      %v419 = vunpack.c.l.b16 %v318
      %v420 = vunpack.c.h.b16 %v318
      %v421 = vunpack.c.l.b16 %v319
      %v422 = vunpack.c.h.b16 %v319
      %v423 = vunpack.c.l.b16 %v320
      %v424 = vunpack.c.h.b16 %v320
      %v425 = vunpack.c.l.b16 %v321
      %v426 = vunpack.c.h.b16 %v321
      %v427 = vunpack.c.l.b16 %v322
      %v428 = vunpack.c.h.b16 %v322
      %v429 = vunpack.c.l.b16 %v323
      %v430 = vunpack.c.h.b16 %v323
      %v431 = vunpack.c.l.b16 %v324
      %v432 = vunpack.c.h.b16 %v324
      %v433 = vpack.c.b16 %v371, %v369
      %v434 = vpack.c.b16 %v372, %v370
      %v435 = vpack.c.b16 %v375, %v373
      %v436 = vpack.c.b16 %v376, %v374
      %v437 = vpack.c.b16 %v379, %v377
      %v438 = vpack.c.b16 %v380, %v378
      %v439 = vpack.c.b16 %v383, %v381
      %v440 = vpack.c.b16 %v384, %v382
      %v441 = vpack.c.b16 %v387, %v385
      %v442 = vpack.c.b16 %v388, %v386
      %v443 = vpack.c.b16 %v391, %v389
      %v444 = vpack.c.b16 %v392, %v390
      %v445 = vpack.c.b16 %v395, %v393
      %v446 = vpack.c.b16 %v396, %v394
      %v447 = vpack.c.b16 %v399, %v397
      %v448 = vpack.c.b16 %v400, %v398
      %v449 = vpack.c.b16 %v403, %v401
      %v450 = vpack.c.b16 %v404, %v402
      %v451 = vpack.c.b16 %v407, %v405
      %v452 = vpack.c.b16 %v408, %v406
      %v453 = vpack.c.b16 %v411, %v409
      %v454 = vpack.c.b16 %v412, %v410
      %v455 = vpack.c.b16 %v415, %v413
      %v456 = vpack.c.b16 %v416, %v414
      %v457 = vpack.c.b16 %v419, %v417
      %v458 = vpack.c.b16 %v420, %v418
      %v459 = vpack.c.b16 %v423, %v421
      %v460 = vpack.c.b16 %v424, %v422
      %v461 = vpack.c.b16 %v427, %v425
      %v462 = vpack.c.b16 %v428, %v426
      %v463 = vpack.c.b16 %v431, %v429
      %v464 = vpack.c.b16 %v432, %v430
      %497 = vmatprep.subr.bf16.mxu0 %v434
      %498 = vmatpush1.bf16.msra.mxu0 %v433
      %499 = vmatprep.subr.bf16.mxu0 %v436
      %500 = vmatpush1.bf16.msra.mxu0 %v435
      %501 = vmatprep.subr.bf16.mxu0 %v438
      %502 = vmatpush1.bf16.msra.mxu0 %v437
      %503 = vmatprep.subr.bf16.mxu0 %v440
      %504 = vmatpush1.bf16.msra.mxu0 %v439
      %505 = vmatprep.subr.bf16.mxu0 %v442
      %506 = vmatpush1.bf16.msra.mxu0 %v441
      %507 = vmatprep.subr.bf16.mxu0 %v444
      %508 = vmatpush1.bf16.msra.mxu0 %v443
      %509 = vmatprep.subr.bf16.mxu0 %v446
      %510 = vmatpush1.bf16.msra.mxu0 %v445
      %511 = vmatprep.subr.bf16.mxu0 %v448
      %512 = vmatpush1.bf16.msra.mxu0 %v447
      %513 = vmatprep.subr.bf16.mxu0 %v450
      %514 = vmatpush1.bf16.msra.mxu0 %v449
      %515 = vmatprep.subr.bf16.mxu0 %v452
      %516 = vmatpush1.bf16.msra.mxu0 %v451
      %517 = vmatprep.subr.bf16.mxu0 %v454
      %518 = vmatpush1.bf16.msra.mxu0 %v453
      %519 = vmatprep.subr.bf16.mxu0 %v456
      %520 = vmatpush1.bf16.msra.mxu0 %v455
      %521 = vmatprep.subr.bf16.mxu0 %v458
      %522 = vmatpush1.bf16.msra.mxu0 %v457
      %523 = vmatprep.subr.bf16.mxu0 %v460
      %524 = vmatpush1.bf16.msra.mxu0 %v459
      %525 = vmatprep.subr.bf16.mxu0 %v462
      %526 = vmatpush1.bf16.msra.mxu0 %v461
      %527 = vmatprep.subr.bf16.mxu0 %v464
      %528 = vmatpush1.bf16.msra.mxu0 %v463
      %529 = vmatprep.mubr.bf16.mxu0 %v286
      %530 = vmatmul.mubr.bf16.gmra.mrb[0].mxu0 %v285
      %v531 = vpop.f32.mrb[0].mxu0
      %v532 = vadd.f32 %v330, %v531
      %v533 = vpop.f32.mrb[0].mxu0
      %v534 = vadd.f32 %v334, %v533
      %v535 = vpop.f32.mrb[0].mxu0
      %v536 = vadd.f32 %v330, %v535
      %v537 = vpop.f32.mrb[0].mxu0
      %v538 = vadd.f32 %v334, %v537
      %539 = vmatprep.mubr.bf16.mxu0 %v288
      %540 = vmatmul.mubr.bf16.gmra.mrb[0].mxu0 %v287
      %v541 = vpop.f32.mrb[0].mxu0
      %v542 = vadd.f32 %v330, %v541
      %v543 = vpop.f32.mrb[0].mxu0
      %v544 = vadd.f32 %v334, %v543
      %v545 = vpop.f32.mrb[0].mxu0
      %v546 = vadd.f32 %v330, %v545
      %v547 = vpop.f32.mrb[0].mxu0
      %v548 = vadd.f32 %v334, %v547
      %549 = vmatprep.mubr.bf16.mxu0 %v290
      %550 = vmatmul.mubr.bf16.gmra.mrb[0].mxu0 %v289
      %v551 = vpop.f32.mrb[0].mxu0
      %v552 = vadd.f32 %v330, %v551
      %v553 = vpop.f32.mrb[0].mxu0
      %v554 = vadd.f32 %v334, %v553
      %v555 = vpop.f32.mrb[0].mxu0
      %v556 = vadd.f32 %v330, %v555
      %v557 = vpop.f32.mrb[0].mxu0
      %v558 = vadd.f32 %v334, %v557
      %559 = vmatprep.mubr.bf16.mxu0 %v292
      %560 = vmatmul.mubr.bf16.gmra.mrb[0].mxu0 %v291
      %v561 = vpop.f32.mrb[0].mxu0
      %v562 = vadd.f32 %v330, %v561
      %v563 = vpop.f32.mrb[0].mxu0
      %v564 = vadd.f32 %v334, %v563
      %v565 = vpop.f32.mrb[0].mxu0
      %v566 = vadd.f32 %v330, %v565
      %v567 = vpop.f32.mrb[0].mxu0
      %v568 = vadd.f32 %v334, %v567
      %569 = vdwg.mxu0
      %v570 = vmax.f32 %v532, 0.0
      %v571 = vmax.f32 %v534, 0.0
      %v572 = vmax.f32 %v536, 0.0
      %v573 = vmax.f32 %v538, 0.0
      %v574 = vmax.f32 %v542, 0.0
      %v575 = vmax.f32 %v544, 0.0
      %v576 = vmax.f32 %v546, 0.0
      %v577 = vmax.f32 %v548, 0.0
      %v578 = vmax.f32 %v552, 0.0
      %v579 = vmax.f32 %v554, 0.0
      %v580 = vmax.f32 %v556, 0.0
      %v581 = vmax.f32 %v558, 0.0
      %v582 = vmax.f32 %v562, 0.0
      %v583 = vmax.f32 %v564, 0.0
      %v584 = vmax.f32 %v566, 0.0
      %v585 = vmax.f32 %v568, 0.0
      %v586 = vld [vmem:[%s243] sm:$0xff]
      %v587 = vld [vmem:[%s243 + $0x8] sm:$0xf]
      %v588 = vpack.c.bf16 %v587, %v586
      %v589 = vpack.c.bf16 %v572, %v570
      %v590 = vpack.c.bf16 %v573, %v571
      %v591 = vpack.c.bf16 %v576, %v574
      %v592 = vpack.c.bf16 %v577, %v575
      %v593 = vpack.c.bf16 %v580, %v578
      %v594 = vpack.c.bf16 %v581, %v579
      %v595 = vpack.c.bf16 %v584, %v582
      %v596 = vpack.c.bf16 %v585, %v583
      %vm597 = vcmask 523264
      %v599 = vsel %vm597, %v588, 0
      %601 = vmatprep.subr.bf16.mxu0 %v590
      %602 = vmatpush1.bf16.msra.mxu0 %v589
      %603 = vmatprep.subr.bf16.mxu0 %v592
      %604 = vmatpush1.bf16.msra.mxu0 %v591
      %605 = vmatprep.subr.bf16.mxu0 %v594
      %606 = vmatpush1.bf16.msra.mxu0 %v593
      %607 = vmatprep.subr.bf16.mxu0 %v596
      %608 = vmatpush1.bf16.msra.mxu0 %v595
      %609 = vmatprep.subr.bf16.mxu0 0
      %610 = vmatpush1.bf16.msra.mxu0 0
      %611 = vmatprep.subr.bf16.mxu0 0
      %612 = vmatpush1.bf16.msra.mxu0 0
      %613 = vmatprep.subr.bf16.mxu0 0
      %614 = vmatpush1.bf16.msra.mxu0 0
      %615 = vmatprep.subr.bf16.mxu0 0
      %616 = vmatpush1.bf16.msra.mxu0 0
      %617 = vmatprep.subr.bf16.mxu0 0
      %618 = vmatpush1.bf16.msra.mxu0 0
      %619 = vmatprep.subr.bf16.mxu0 0
      %620 = vmatpush1.bf16.msra.mxu0 0
      %621 = vmatprep.subr.bf16.mxu0 0
      %622 = vmatpush1.bf16.msra.mxu0 0
      %623 = vmatprep.subr.bf16.mxu0 0
      %624 = vmatpush1.bf16.msra.mxu0 0
      %625 = vmatprep.subr.bf16.mxu0 0
      %626 = vmatpush1.bf16.msra.mxu0 0
      %627 = vmatprep.subr.bf16.mxu0 0
      %628 = vmatpush1.bf16.msra.mxu0 0
      %629 = vmatprep.subr.bf16.mxu0 0
      %630 = vmatpush1.bf16.msra.mxu0 0
      %631 = vmatprep.subr.bf16.mxu0 0
      %632 = vmatpush1.bf16.msra.mxu0 0
      %633 = vmatprep.mubr.bf16.mxu0 0
      %634 = vmatmul.mubr.bf16.gmra.mrb[0].mxu0 %v599
      %v635 = vpop.f32.mrb[0].mxu0
      %v636 = vadd.f32 0.0, %v635
      %v637 = vpop.f32.mrb[0].mxu0
      %v638 = vadd.f32 0.0, %v637
      %v639 = vpop.f32.mrb[0].mxu0
      %v640 = vadd.f32 0.0, %v639
      %v641 = vpop.f32.mrb[0].mxu0
      %v642 = vadd.f32 0.0, %v641
      %643 = vdwg.mxu0
      %v644 = vld [vmem:[%s259] sm:$0xff]
      %v645 = vld [vmem:[%s259 + $0x8] sm:$0xff]
      %v646 = vld [vmem:[%s259 + $0x10] sm:$0xf]
      %v647 = vld [vmem:[%s259 + $0x18] sm:$0xf]
      %v648 = vadd.f32 %v644, %v636
      %v649 = vadd.f32 %v645, %v638
      %v650 = vadd.f32 %v646, %v640
      %v651 = vadd.f32 %v647, %v642
      %652 = vst [vmem:[%s259] sm:$0xff] %v648
      %653 = vst [vmem:[%s259 + $0x8] sm:$0xff] %v649
      %654 = vst [vmem:[%s259 + $0x10] sm:$0xf] %v650
      %655 = vst [vmem:[%s259 + $0x18] sm:$0xf] %v651
      %p656 = scmp.lt.s32.totalorder %s19, 1
      %s657 = scalar_select %p656, %s19, 1
      %s658 = smul.addr %s657, 4
      %s659 = smul.addr %s658, 8
      %s660 = scalar_lea.vmem %s4, %s659
      // Predicated region
      $region41: #{depth_aware_fe.6} parent=35 // pred_check
        %p661 = pneg %p143
      $region42: #{depth_aware_fe.6} parent=35 // pred_check_branch
        %663 = sbr.rel (%p661) target = $region44
      $region43: #{depth_aware_fe.6} parent=35 // pred_region
        _
      $region44: #{depth_aware_fe.6} parent=35 // pred_fallthru
        _
    $region36: #{depth_aware_fe.6} parent=5 // pred_fallthru
      _
    %p664 = scmp.le.s32.totalorder 2, %s10
    // Predicated region
    $region45: #{depth_aware_fe.6} parent=5 // pred_check
      %p665 = pneg %p664
    $region46: #{depth_aware_fe.6} parent=5 // pred_check_branch
      %667 = sbr.rel (%p665) target = $region48
    $region47: #{depth_aware_fe.6} parent=5 // pred_region
      %s668 = ssub.s32 %s10, 2
      // Predicated region
      $region49: #{depth_aware_fe.6} parent=47 // pred_check
        %p669 = pneg %p149
      $region50: #{depth_aware_fe.6} parent=47 // pred_check_branch
        %671 = sbr.rel (%p669) target = $region52
      $region51: #{depth_aware_fe.6} parent=47 // pred_region
        %p672 = scmp.lt.s32.totalorder %s21, 1
        %s673 = scalar_select %p672, %s21, 1
        %s674 = smul.addr %s673, 4
        %s675 = smul.addr %s674, 8
        %s676 = scalar_lea.vmem %s4, %s675
      $region52: #{depth_aware_fe.6} parent=47 // pred_fallthru
        _
    $region48: #{depth_aware_fe.6} parent=5 // pred_fallthru
      _
  $region6: #{depth_aware_fe.6} parent=0 // loop_footer
    %s14 = sadd.s32 1, %s10
  $region7: #{depth_aware_fe.6} parent=0 // loop_footer_branch
    %9 = sbr.rel target = $region3
  $region8: #{depth_aware_fe.6} parent=0 // loop_exit
    _

// kernel: depth_aware_fe.7
$region0: #{depth_aware_fe.7}
  #allocation0 [shape = 'u32[]', space=smem, size = 0x4, offset = 0x4, fixed_abs, tag = 'smem constant byte address 0x4 - core index']
  #allocation1 [shape = 'u32[144,128]{1,0:T(1,128)}', space=vmem, size = 0x12000, scoped, tag = 'internal scratch']
  #allocation2 [shape = 'bf16[12,256]{1,0:T(8,128)(2,1)}', space=vmem, size = 0x2000, scoped, tag = 'scratch operand']
  %s0 = inlined_call_operand.vmem [shape: f32[2,12,256], index: 0, kind: input, shape index: {}]
  %s1 = inlined_call_operand.vmem [shape: f32[2,64,12], index: 1, kind: input, shape index: {}]
  %s2 = inlined_call_operand.vmem [shape: f32[2,64,256], index: 2, kind: input, shape index: {}]
  %s3 = inlined_call_operand.vmem [shape: bf16[256,256], index: 3, kind: input, shape index: {}]
  %s4 = inlined_call_operand.vmem [shape: f32[1,256], index: 4, kind: input, shape index: {}]
  %s5 = inlined_call_operand.hbm [shape: f32[2,64,256], index: 5, kind: output, shape index: {}]
  %s6 = sld [smem:[#allocation0]]
  $region57: #{depth_aware_fe.7} parent=0
    _
  %s8 = ssub.s32 1, %s6
  %s9 = scalar_select 0, %s8, %s6
  $region1: #{depth_aware_fe.7} parent=0
    #allocation3 [shape = 'u8[131072]{0}', space=vmem, size = 0x20000, scoped, tag = 'output window, operand 0']
    #allocation4 [shape = 's32[2]{0}', space=sflag, size = 0x8, scoped, tag = 'scoped memory for depth_aware_fe.7']
    %10 = vsyncpa [#allocation4], 0
    %s11 = scalar_lea.sflag [#allocation4], 1
    %12 = vsyncpa %s11, 0
    loop: start=0, step=1, limit=4
    $region2: #{depth_aware_fe.7} parent=1 // loop_pre_header
      _
    $region3: #{depth_aware_fe.7} parent=1 // loop_header
      %s14 = sphi 0, %s18
      %p15 = scmp.ge.s32.totalorder %s14, 4
      %s21 = sphi 0, %s33
      %s22 = sphi 0, %s29
      %s23 = sphi 0, %s21
      %s24 = sphi 0, %s22
      %s25 = sphi 0, %s23
      %s26 = sphi 0, %s24
      %s36 = sphi 0, %s38
      %s39 = sphi 0, %s36
      %s40 = sphi 0, %s39
      %s56 = sphi 0, %s40
      %s64 = sphi 0, %s66
      %s67 = sphi 0, %s64
      %s68 = sphi 0, %s67
      %s84 = sphi 0, %s68
      %s92 = sphi 0, %s94
      %s95 = sphi 0, %s92
      %s96 = sphi 0, %s95
      %s112 = sphi 0, %s96
      %s116 = sphi 0, %s116
      %s118 = sphi 0, %s116
      %s119 = sphi 0, %s118
      %s133 = sphi 0, %s119
      %s137 = sphi 0, %s137
      %s139 = sphi 0, %s137
      %s140 = sphi 0, %s139
      %s154 = sphi 0, %s140
      %s162 = sphi 0, %s164
      %s165 = sphi 0, %s162
      %s166 = sphi 0, %s165
      %s182 = sphi 0, %s166
    $region4: #{depth_aware_fe.7} parent=1 // loop_header_branch
      %17 = sbr.rel (%p15) target = $region8
    $region5: #{depth_aware_fe.7} parent=1 // loop_body
      %s19 = ssub.s32 %s14, 1
      %s20 = ssub.s32 %s14, 2
      %s27 = sadd.s32 1, %s22
      %p28 = scmp.ge.s32.totalorder %s27, 1
      %s29 = scalar_select %p28, 0, %s27
      %s30 = sadd.s32 1, %s21
      %s31 = scalar_select %p28, %s30, %s21
      %p32 = scmp.ge.s32.totalorder %s31, 2
      %s33 = scalar_select %p32, 0, %s31
      %s34 = ssub.s32 %s21, %s33
      %p35 = scmp.eq.s32.totalorder %s34, 0
      %s37 = sadd.s32 %s36, 1
      %s38 = scalar_select %p35, %s36, %s37
      %p41 = pneg %p35
      %p42 = scmp.eq.s32.totalorder %s14, 1
      %p43 = por %p41, %p42
      %p44 = scmp.ne.s32.totalorder %s36, %s39
      %p45 = scmp.eq.s32.totalorder %s14, 0
      %p46 = por %p44, %p45
      %p47 = scmp.ne.s32.totalorder %s36, %s39
      %p48 = scmp.eq.s32.totalorder %s19, 1
      %p49 = por %p47, %p48
      %p50 = scmp.ne.s32.totalorder %s39, %s40
      %p51 = scmp.eq.s32.totalorder %s19, 0
      %p52 = por %p50, %p51
      %p53 = scmp.ne.s32.totalorder %s39, %s40
      %p54 = scmp.eq.s32.totalorder %s20, 1
      %p55 = por %p53, %p54
      %p57 = scmp.ne.s32.totalorder %s40, %s56
      %p58 = scmp.eq.s32.totalorder %s20, 0
      %p59 = por %p57, %p58
      %s60 = ssub.s32 %s21, %s33
      %s61 = ssub.s32 %s22, %s29
      %s62 = sor.u32 %s60, %s61
      %p63 = scmp.eq.s32.totalorder %s62, 0
      %s65 = sadd.s32 %s64, 1
      %s66 = scalar_select %p63, %s64, %s65
      %p69 = pneg %p63
      %p70 = scmp.eq.s32.totalorder %s14, 1
      %p71 = por %p69, %p70
      %p72 = scmp.ne.s32.totalorder %s64, %s67
      %p73 = scmp.eq.s32.totalorder %s14, 0
      %p74 = por %p72, %p73
      %p75 = scmp.ne.s32.totalorder %s64, %s67
      %p76 = scmp.eq.s32.totalorder %s19, 1
      %p77 = por %p75, %p76
      %p78 = scmp.ne.s32.totalorder %s67, %s68
      %p79 = scmp.eq.s32.totalorder %s19, 0
      %p80 = por %p78, %p79
      %p81 = scmp.ne.s32.totalorder %s67, %s68
      %p82 = scmp.eq.s32.totalorder %s20, 1
      %p83 = por %p81, %p82
      %p85 = scmp.ne.s32.totalorder %s68, %s84
      %p86 = scmp.eq.s32.totalorder %s20, 0
      %p87 = por %p85, %p86
      %s88 = ssub.s32 %s21, %s33
      %s89 = ssub.s32 %s22, %s29
      %s90 = sor.u32 %s88, %s89
      %p91 = scmp.eq.s32.totalorder %s90, 0
      %s93 = sadd.s32 %s92, 1
      %s94 = scalar_select %p91, %s92, %s93
      %p97 = pneg %p91
      %p98 = scmp.eq.s32.totalorder %s14, 1
      %p99 = por %p97, %p98
      %p100 = scmp.ne.s32.totalorder %s92, %s95
      %p101 = scmp.eq.s32.totalorder %s14, 0
      %p102 = por %p100, %p101
      %p103 = scmp.ne.s32.totalorder %s92, %s95
      %p104 = scmp.eq.s32.totalorder %s19, 1
      %p105 = por %p103, %p104
      %p106 = scmp.ne.s32.totalorder %s95, %s96
      %p107 = scmp.eq.s32.totalorder %s19, 0
      %p108 = por %p106, %p107
      %p109 = scmp.ne.s32.totalorder %s95, %s96
      %p110 = scmp.eq.s32.totalorder %s20, 1
      %p111 = por %p109, %p110
      %p113 = scmp.ne.s32.totalorder %s96, %s112
      %p114 = scmp.eq.s32.totalorder %s20, 0
      %p115 = por %p113, %p114
      %s117 = sadd.s32 %s116, 1
      %p120 = scmp.eq.s32.totalorder %s14, 1
      %p121 = scmp.ne.s32.totalorder %s116, %s118
      %p122 = scmp.eq.s32.totalorder %s14, 0
      %p123 = por %p121, %p122
      %p124 = scmp.ne.s32.totalorder %s116, %s118
      %p125 = scmp.eq.s32.totalorder %s19, 1
      %p126 = por %p124, %p125
      %p127 = scmp.ne.s32.totalorder %s118, %s119
      %p128 = scmp.eq.s32.totalorder %s19, 0
      %p129 = por %p127, %p128
      %p130 = scmp.ne.s32.totalorder %s118, %s119
      %p131 = scmp.eq.s32.totalorder %s20, 1
      %p132 = por %p130, %p131
      %p134 = scmp.ne.s32.totalorder %s119, %s133
      %p135 = scmp.eq.s32.totalorder %s20, 0
      %p136 = por %p134, %p135
      %s138 = sadd.s32 %s137, 1
      %p141 = scmp.eq.s32.totalorder %s14, 1
      %p142 = scmp.ne.s32.totalorder %s137, %s139
      %p143 = scmp.eq.s32.totalorder %s14, 0
      %p144 = por %p142, %p143
      %p145 = scmp.ne.s32.totalorder %s137, %s139
      %p146 = scmp.eq.s32.totalorder %s19, 1
      %p147 = por %p145, %p146
      %p148 = scmp.ne.s32.totalorder %s139, %s140
      %p149 = scmp.eq.s32.totalorder %s19, 0
      %p150 = por %p148, %p149
      %p151 = scmp.ne.s32.totalorder %s139, %s140
      %p152 = scmp.eq.s32.totalorder %s20, 1
      %p153 = por %p151, %p152
      %p155 = scmp.ne.s32.totalorder %s140, %s154
      %p156 = scmp.eq.s32.totalorder %s20, 0
      %p157 = por %p155, %p156
      %s158 = ssub.s32 %s21, %s33
      %s159 = ssub.s32 %s22, %s29
      %s160 = sor.u32 %s158, %s159
      %p161 = scmp.eq.s32.totalorder %s160, 0
      %s163 = sadd.s32 %s162, 1
      %s164 = scalar_select %p161, %s162, %s163
      %p167 = pneg %p161
      %p168 = scmp.eq.s32.totalorder %s14, 1
      %p169 = por %p167, %p168
      %p170 = scmp.ne.s32.totalorder %s162, %s165
      %p171 = scmp.eq.s32.totalorder %s14, 0
      %p172 = por %p170, %p171
      %p173 = scmp.ne.s32.totalorder %s162, %s165
      %p174 = scmp.eq.s32.totalorder %s19, 1
      %p175 = por %p173, %p174
      %p176 = scmp.ne.s32.totalorder %s165, %s166
      %p177 = scmp.eq.s32.totalorder %s19, 0
      %p178 = por %p176, %p177
      %p179 = scmp.ne.s32.totalorder %s165, %s166
      %p180 = scmp.eq.s32.totalorder %s20, 1
      %p181 = por %p179, %p180
      %p183 = scmp.ne.s32.totalorder %s166, %s182
      %p184 = scmp.eq.s32.totalorder %s20, 0
      %p185 = por %p183, %p184
      %p186 = scmp.le.s32.totalorder 1, %s14
      %p187 = scmp.lt.s32.totalorder %s14, 3
      %p188 = pnand %p186, %p187
      %p189 = pneg %p188
      // Predicated region
      $region9: #{depth_aware_fe.7} parent=5 // pred_check
        _
      $region10: #{depth_aware_fe.7} parent=5 // pred_check_branch
        %191 = sbr.rel (%p188) target = $region12
      $region11: #{depth_aware_fe.7} parent=5 // pred_region
        %s192 = ssub.s32 %s14, 1
        // Predicated region
        $region13: #{depth_aware_fe.7} parent=11 // pred_check
          %p193 = pneg %p129
        $region14: #{depth_aware_fe.7} parent=11 // pred_check_branch
          %195 = sbr.rel (%p193) target = $region16
        $region15: #{depth_aware_fe.7} parent=11 // pred_region
          _
        $region16: #{depth_aware_fe.7} parent=11 // pred_fallthru
          _
        // Predicated region
        $region17: #{depth_aware_fe.7} parent=11 // pred_check
          %p196 = pneg %p150
        $region18: #{depth_aware_fe.7} parent=11 // pred_check_branch
          %198 = sbr.rel (%p196) target = $region20
        $region19: #{depth_aware_fe.7} parent=11 // pred_region
          _
        $region20: #{depth_aware_fe.7} parent=11 // pred_fallthru
          _
      $region12: #{depth_aware_fe.7} parent=5 // pred_fallthru
        _
      %p199 = scmp.lt.s32.totalorder %s14, 2
      // Predicated region
      $region21: #{depth_aware_fe.7} parent=5 // pred_check
        %p200 = pneg %p199
      $region22: #{depth_aware_fe.7} parent=5 // pred_check_branch
        %202 = sbr.rel (%p200) target = $region24
      $region23: #{depth_aware_fe.7} parent=5 // pred_region
        // Predicated region
        $region25: #{depth_aware_fe.7} parent=23 // pred_check
          %p203 = pneg %p46
        $region26: #{depth_aware_fe.7} parent=23 // pred_check_branch
          %205 = sbr.rel (%p203) target = $region28
        $region27: #{depth_aware_fe.7} parent=23 // pred_region
          %p206 = scmp.lt.s32.totalorder %s21, 1
          %s207 = scalar_select %p206, %s21, 1
          %s208 = smul.addr %s207, 4
          %s209 = smul.addr %s208, 8
          %s210 = scalar_lea.vmem %s0, %s209
        $region28: #{depth_aware_fe.7} parent=23 // pred_fallthru
          _
        // Predicated region
        $region29: #{depth_aware_fe.7} parent=23 // pred_check
          %p211 = pneg %p74
        $region30: #{depth_aware_fe.7} parent=23 // pred_check_branch
          %213 = sbr.rel (%p211) target = $region32
        $region31: #{depth_aware_fe.7} parent=23 // pred_region
          %s214 = smul.u32 8, %s22
          %p215 = scmp.lt.s32.totalorder %s21, 1
          %s216 = scalar_select %p215, %s21, 1
          %p217 = scmp.lt.s32.totalorder %s214, 7
          %s218 = scalar_select %p217, %s214, 7
          %s219 = smul.addr %s216, 8
          %s220 = sadd.s32 %s218, %s219
          %s221 = smul.addr %s220, 8
          %s222 = scalar_lea.vmem %s1, %s221
          %s223 = smul.u32 8, %s22
        $region32: #{depth_aware_fe.7} parent=23 // pred_fallthru
          _
        // Predicated region
        $region33: #{depth_aware_fe.7} parent=23 // pred_check
          %p224 = pneg %p102
        $region34: #{depth_aware_fe.7} parent=23 // pred_check_branch
          %226 = sbr.rel (%p224) target = $region36
        $region35: #{depth_aware_fe.7} parent=23 // pred_region
          %s227 = smul.u32 8, %s22
          %p228 = scmp.lt.s32.totalorder %s21, 1
          %s229 = scalar_select %p228, %s21, 1
          %p230 = scmp.lt.s32.totalorder %s227, 7
          %s231 = scalar_select %p230, %s227, 7
          %s232 = smul.addr %s231, 2
          %s233 = smul.addr %s229, 16
          %s234 = sadd.s32 %s232, %s233
          %s235 = smul.addr %s234, 8
          %s236 = scalar_lea.vmem %s2, %s235
          %s237 = smul.u32 8, %s22
        $region36: #{depth_aware_fe.7} parent=23 // pred_fallthru
          _
      $region24: #{depth_aware_fe.7} parent=5 // pred_fallthru
        _
      %p238 = scmp.le.s32.totalorder 1, %s14
      %p239 = scmp.lt.s32.totalorder %s14, 3
      %p240 = pnand %p238, %p239
      %p241 = pneg %p240
      // Predicated region
      $region37: #{depth_aware_fe.7} parent=5 // pred_check
        _
      $region38: #{depth_aware_fe.7} parent=5 // pred_check_branch
        %243 = sbr.rel (%p240) target = $region40
      $region39: #{depth_aware_fe.7} parent=5 // pred_region
        %s244 = ssub.s32 %s14, 1
        %p245 = scmp.lt.s32.totalorder %s23, 1
        %s246 = scalar_select %p245, %s23, 1
        %s247 = smul.addr %s246, 4
        %s248 = smul.addr %s247, 8
        %s249 = scalar_lea.vmem %s0, %s248
        %p250 = pneg %p52
        %p251 = pneg %p49
        %s252 = smul.u32 8, %s24
        %p253 = scmp.lt.s32.totalorder %s23, 1
        %s254 = scalar_select %p253, %s23, 1
        %p255 = scmp.lt.s32.totalorder %s252, 7
        %s256 = scalar_select %p255, %s252, 7
        %s257 = smul.addr %s254, 8
        %s258 = sadd.s32 %s256, %s257
        %s259 = smul.addr %s258, 8
        %s260 = scalar_lea.vmem %s1, %s259
        %p261 = pneg %p80
        %p262 = pneg %p77
        %s263 = smul.u32 8, %s24
        %p264 = scmp.lt.s32.totalorder %s23, 1
        %s265 = scalar_select %p264, %s23, 1
        %p266 = scmp.lt.s32.totalorder %s263, 7
        %s267 = scalar_select %p266, %s263, 7
        %s268 = smul.addr %s267, 2
        %s269 = smul.addr %s265, 16
        %s270 = sadd.s32 %s268, %s269
        %s271 = smul.addr %s270, 8
        %s272 = scalar_lea.vmem %s2, %s271
        %p273 = pneg %p108
        %p274 = pneg %p105
        %p275 = pneg %p129
        %p276 = pneg %p126
        %p277 = pneg %p150
        %p278 = pneg %p147
        %p279 = pneg %p178
        %p280 = pneg %p175
        %s281 = sand.u32 %s165, 1
        %s282 = scalar_lea.sflag [#allocation4], %s281
        %s283 = sand.u32 %s165, 1
        %s284 = smul.addr %s283, 128
        %s285 = scalar_lea.vmem [#allocation3], %s284
        %p286 = scmp.lt.s32.totalorder %s23, 1
        %s287 = scalar_select %p286, %s23, 1
        %s288 = smul.addr %s287, 4
        %s289 = smul.addr %s288, 8
        %s290 = scalar_lea.vmem %s0, %s289
        %s291 = smul.u32 8, %s24
        %p292 = scmp.lt.s32.totalorder %s23, 1
        %s293 = scalar_select %p292, %s23, 1
        %p294 = scmp.lt.s32.totalorder %s291, 7
        %s295 = scalar_select %p294, %s291, 7
        %s296 = smul.addr %s293, 8
        %s297 = sadd.s32 %s295, %s296
        %s298 = smul.addr %s297, 8
        %s299 = scalar_lea.vmem %s1, %s298
        %s300 = smul.u32 8, %s24
        %s301 = smul.u32 8, %s24
        %p302 = scmp.lt.s32.totalorder %s23, 1
        %s303 = scalar_select %p302, %s23, 1
        %p304 = scmp.lt.s32.totalorder %s301, 7
        %s305 = scalar_select %p304, %s301, 7
        %s306 = smul.addr %s305, 2
        %s307 = smul.addr %s303, 16
        %s308 = sadd.s32 %s306, %s307
        %s309 = smul.addr %s308, 8
        %s310 = scalar_lea.vmem %s2, %s309
        %s311 = smul.u32 8, %s24
        %s312 = smul.u32 8, %s24
        %p314 = scmp.eq.s32.totalorder %s24, 0
        // Predicated region
        $region41: #{depth_aware_fe.7} parent=39 // pred_check
          %p315 = pneg %p314
        $region42: #{depth_aware_fe.7} parent=39 // pred_check_branch
          %317 = sbr.rel (%p315) target = $region44
        $region43: #{depth_aware_fe.7} parent=39 // pred_region
          %v318 = vld [vmem:[%s290] sm:$0xff]
          %v319 = vld [vmem:[%s290 + $0x8] sm:$0xff]
          %v320 = vld [vmem:[%s290 + $0x10] sm:$0xf]
          %v321 = vld [vmem:[%s290 + $0x18] sm:$0xf]
          %v322 = vmax.f32 %v318, %v319
          %323 = vmax.xlane.f32.xlu0 %v322
          %v324 = vpop.xlane.xlu0 %323
          %vm325 = vcmask 1043456
          %v326 = vsel %vm325, %v320, -inf
          %v327 = vsel %vm325, %v321, -inf
          %v328 = vmax.f32 %v326, %v327
          %329 = vmax.xlane.f32.xlu0 %v328
          %v330 = vpop.xlane.xlu0 %329
          %v331 = vsub.f32 %v324, %v318
          %v332 = vsub.f32 %v324, %v319
          %v333 = vsub.f32 %v330, %v320
          %v334 = vsub.f32 %v330, %v321
          %v335 = vmax.f32 %v331, %v332
          %336 = vmax.xlane.f32.xlu0 %v335
          %v337 = vpop.xlane.xlu0 %336
          %v338 = vsel %vm325, %v333, -inf
          %v339 = vsel %vm325, %v334, -inf
          %v340 = vmax.f32 %v338, %v339
          %341 = vmax.xlane.f32.xlu0 %v340
          %v342 = vpop.xlane.xlu0 %341
          %v343 = vsub.f32 %v331, %v337
          %v344 = vsub.f32 %v332, %v337
          %v345 = vsub.f32 %v333, %v342
          %v346 = vsub.f32 %v334, %v342
          %v347 = vmul.f32 %v343, 1.442695
          %v348 = vpow.pop %v347
          %v349 = vmul.f32 %v344, 1.442695
          %v350 = vpow.pop %v349
          %v351 = vmul.f32 %v345, 1.442695
          %v352 = vpow.pop %v351
          %v353 = vmul.f32 %v346, 1.442695
          %v354 = vpow.pop %v353
          %v355 = vadd.f32 %v348, %v350
          %356 = vadd.xlane.f32.xlu0 %v355
          %v357 = vpop.xlane.xlu0 %356
          %v358 = vsel %vm325, %v352, 0.0
          %v359 = vsel %vm325, %v354, 0.0
          %v360 = vadd.f32 %v358, %v359
          %361 = vadd.xlane.f32.xlu0 %v360
          %v362 = vpop.xlane.xlu0 %361
          %v363 = vrcp.pop %v357
          %v364 = vmul.f32 %v348, %v363
          %v365 = vmul.f32 %v350, %v363
          %v366 = vrcp.pop %v362
          %v367 = vmul.f32 %v352, %v366
          %v368 = vmul.f32 %v354, %v366
          %v369 = vpack.c.bf16 %v367, %v364
          %v370 = vpack.c.bf16 %v368, %v365
          %v371 = vld [vmem:[%s3] sm:$0xff]
          %v372 = vld [vmem:[%s3 + $0x8] sm:$0xff]
          %v373 = vld [vmem:[%s3 + $0x10] sm:$0xff]
          %v374 = vld [vmem:[%s3 + $0x18] sm:$0xff]
          %v375 = vld [vmem:[%s3 + $0x20] sm:$0xff]
          %v376 = vld [vmem:[%s3 + $0x28] sm:$0xff]
          %v377 = vld [vmem:[%s3 + $0x30] sm:$0xff]
          %v378 = vld [vmem:[%s3 + $0x38] sm:$0xff]
          %v379 = vld [vmem:[%s3 + $0x40] sm:$0xff]
          %v380 = vld [vmem:[%s3 + $0x48] sm:$0xff]
          %v381 = vld [vmem:[%s3 + $0x50] sm:$0xff]
          %v382 = vld [vmem:[%s3 + $0x58] sm:$0xff]
          %v383 = vld [vmem:[%s3 + $0x60] sm:$0xff]
          %v384 = vld [vmem:[%s3 + $0x68] sm:$0xff]
          %v385 = vld [vmem:[%s3 + $0x70] sm:$0xff]
          %v386 = vld [vmem:[%s3 + $0x78] sm:$0xff]
          %v387 = vld [vmem:[%s3 + $0x80] sm:$0xff]
          %v388 = vld [vmem:[%s3 + $0x88] sm:$0xff]
          %v389 = vld [vmem:[%s3 + $0x90] sm:$0xff]
          %v390 = vld [vmem:[%s3 + $0x98] sm:$0xff]
          %v391 = vld [vmem:[%s3 + $0xa0] sm:$0xff]
          %v392 = vld [vmem:[%s3 + $0xa8] sm:$0xff]
          %v393 = vld [vmem:[%s3 + $0xb0] sm:$0xff]
          %v394 = vld [vmem:[%s3 + $0xb8] sm:$0xff]
          %v395 = vld [vmem:[%s3 + $0xc0] sm:$0xff]
          %v396 = vld [vmem:[%s3 + $0xc8] sm:$0xff]
          %v397 = vld [vmem:[%s3 + $0xd0] sm:$0xff]
          %v398 = vld [vmem:[%s3 + $0xd8] sm:$0xff]
          %v399 = vld [vmem:[%s3 + $0xe0] sm:$0xff]
          %v400 = vld [vmem:[%s3 + $0xe8] sm:$0xff]
          %v401 = vld [vmem:[%s3 + $0xf0] sm:$0xff]
          %v402 = vld [vmem:[%s3 + $0xf8] sm:$0xff]
          %v435 = vunpack.c.l.b16 %v371
          %v436 = vunpack.c.h.b16 %v371
          %v437 = vunpack.c.l.b16 %v372
          %v438 = vunpack.c.h.b16 %v372
          %v439 = vunpack.c.l.b16 %v373
          %v440 = vunpack.c.h.b16 %v373
          %v441 = vunpack.c.l.b16 %v374
          %v442 = vunpack.c.h.b16 %v374
          %v443 = vunpack.c.l.b16 %v375
          %v444 = vunpack.c.h.b16 %v375
          %v445 = vunpack.c.l.b16 %v376
          %v446 = vunpack.c.h.b16 %v376
          %v447 = vunpack.c.l.b16 %v377
          %v448 = vunpack.c.h.b16 %v377
          %v449 = vunpack.c.l.b16 %v378
          %v450 = vunpack.c.h.b16 %v378
          %v451 = vunpack.c.l.b16 %v379
          %v452 = vunpack.c.h.b16 %v379
          %v453 = vunpack.c.l.b16 %v380
          %v454 = vunpack.c.h.b16 %v380
          %v455 = vunpack.c.l.b16 %v381
          %v456 = vunpack.c.h.b16 %v381
          %v457 = vunpack.c.l.b16 %v382
          %v458 = vunpack.c.h.b16 %v382
          %v459 = vunpack.c.l.b16 %v383
          %v460 = vunpack.c.h.b16 %v383
          %v461 = vunpack.c.l.b16 %v384
          %v462 = vunpack.c.h.b16 %v384
          %v463 = vunpack.c.l.b16 %v385
          %v464 = vunpack.c.h.b16 %v385
          %v465 = vunpack.c.l.b16 %v386
          %v466 = vunpack.c.h.b16 %v386
          %v467 = vunpack.c.l.b16 %v387
          %v468 = vunpack.c.h.b16 %v387
          %v469 = vunpack.c.l.b16 %v388
          %v470 = vunpack.c.h.b16 %v388
          %v471 = vunpack.c.l.b16 %v389
          %v472 = vunpack.c.h.b16 %v389
          %v473 = vunpack.c.l.b16 %v390
          %v474 = vunpack.c.h.b16 %v390
          %v475 = vunpack.c.l.b16 %v391
          %v476 = vunpack.c.h.b16 %v391
          %v477 = vunpack.c.l.b16 %v392
          %v478 = vunpack.c.h.b16 %v392
          %v479 = vunpack.c.l.b16 %v393
          %v480 = vunpack.c.h.b16 %v393
          %v481 = vunpack.c.l.b16 %v394
          %v482 = vunpack.c.h.b16 %v394
          %v483 = vunpack.c.l.b16 %v395
          %v484 = vunpack.c.h.b16 %v395
          %v485 = vunpack.c.l.b16 %v396
          %v486 = vunpack.c.h.b16 %v396
          %v487 = vunpack.c.l.b16 %v397
          %v488 = vunpack.c.h.b16 %v397
          %v489 = vunpack.c.l.b16 %v398
          %v490 = vunpack.c.h.b16 %v398
          %v491 = vunpack.c.l.b16 %v399
          %v492 = vunpack.c.h.b16 %v399
          %v493 = vunpack.c.l.b16 %v400
          %v494 = vunpack.c.h.b16 %v400
          %v495 = vunpack.c.l.b16 %v401
          %v496 = vunpack.c.h.b16 %v401
          %v497 = vunpack.c.l.b16 %v402
          %v498 = vunpack.c.h.b16 %v402
          %v499 = vpack.c.b16 %v437, %v435
          %v500 = vpack.c.b16 %v438, %v436
          %v501 = vpack.c.b16 %v441, %v439
          %v502 = vpack.c.b16 %v442, %v440
          %v503 = vpack.c.b16 %v445, %v443
          %v504 = vpack.c.b16 %v446, %v444
          %v505 = vpack.c.b16 %v449, %v447
          %v506 = vpack.c.b16 %v450, %v448
          %v507 = vpack.c.b16 %v453, %v451
          %v508 = vpack.c.b16 %v454, %v452
          %v509 = vpack.c.b16 %v457, %v455
          %v510 = vpack.c.b16 %v458, %v456
          %v511 = vpack.c.b16 %v461, %v459
          %v512 = vpack.c.b16 %v462, %v460
          %v513 = vpack.c.b16 %v465, %v463
          %v514 = vpack.c.b16 %v466, %v464
          %v515 = vpack.c.b16 %v469, %v467
          %v516 = vpack.c.b16 %v470, %v468
          %v517 = vpack.c.b16 %v473, %v471
          %v518 = vpack.c.b16 %v474, %v472
          %v519 = vpack.c.b16 %v477, %v475
          %v520 = vpack.c.b16 %v478, %v476
          %v521 = vpack.c.b16 %v481, %v479
          %v522 = vpack.c.b16 %v482, %v480
          %v523 = vpack.c.b16 %v485, %v483
          %v524 = vpack.c.b16 %v486, %v484
          %v525 = vpack.c.b16 %v489, %v487
          %v526 = vpack.c.b16 %v490, %v488
          %v527 = vpack.c.b16 %v493, %v491
          %v528 = vpack.c.b16 %v494, %v492
          %v529 = vpack.c.b16 %v497, %v495
          %v530 = vpack.c.b16 %v498, %v496
          %563 = vmatprep.subr.bf16.mxu0 %v500
          %564 = vmatpush1.bf16.msra.mxu0 %v499
          %565 = vmatprep.subr.bf16.mxu0 %v502
          %566 = vmatpush1.bf16.msra.mxu0 %v501
          %567 = vmatprep.subr.bf16.mxu0 %v504
          %568 = vmatpush1.bf16.msra.mxu0 %v503
          %569 = vmatprep.subr.bf16.mxu0 %v506
          %570 = vmatpush1.bf16.msra.mxu0 %v505
          %571 = vmatprep.subr.bf16.mxu0 %v508
          %572 = vmatpush1.bf16.msra.mxu0 %v507
          %573 = vmatprep.subr.bf16.mxu0 %v510
          %574 = vmatpush1.bf16.msra.mxu0 %v509
          %575 = vmatprep.subr.bf16.mxu0 %v512
          %576 = vmatpush1.bf16.msra.mxu0 %v511
          %577 = vmatprep.subr.bf16.mxu0 %v514
          %578 = vmatpush1.bf16.msra.mxu0 %v513
          %579 = vmatprep.subr.bf16.mxu0 %v516
          %580 = vmatpush1.bf16.msra.mxu0 %v515
          %581 = vmatprep.subr.bf16.mxu0 %v518
          %582 = vmatpush1.bf16.msra.mxu0 %v517
          %583 = vmatprep.subr.bf16.mxu0 %v520
          %584 = vmatpush1.bf16.msra.mxu0 %v519
          %585 = vmatprep.subr.bf16.mxu0 %v522
          %586 = vmatpush1.bf16.msra.mxu0 %v521
          %587 = vmatprep.subr.bf16.mxu0 %v524
          %588 = vmatpush1.bf16.msra.mxu0 %v523
          %589 = vmatprep.subr.bf16.mxu0 %v526
          %590 = vmatpush1.bf16.msra.mxu0 %v525
          %591 = vmatprep.subr.bf16.mxu0 %v528
          %592 = vmatpush1.bf16.msra.mxu0 %v527
          %593 = vmatprep.subr.bf16.mxu0 %v530
          %594 = vmatpush1.bf16.msra.mxu0 %v529
          %595 = vmatprep.mubr.bf16.mxu0 %v370
          %596 = vmatmul.mubr.bf16.gmra.mrb[0].mxu0 %v369
          %v597 = vpop.f32.mrb[0].mxu0
          %v598 = vadd.f32 0.0, %v597
          %v599 = vpop.f32.mrb[0].mxu0
          %v600 = vadd.f32 0.0, %v599
          %v601 = vpop.f32.mrb[0].mxu0
          %v602 = vadd.f32 0.0, %v601
          %v603 = vpop.f32.mrb[0].mxu0
          %v604 = vadd.f32 0.0, %v603
          %605 = vdwg.mxu0
          %v606 = vpack.c.bf16 %v602, %v598
          %v607 = vpack.c.bf16 %v604, %v600
          %v610 = vunpack.c.l.b16 %v606
          %v611 = vunpack.c.l.b16 %v607
          %v612 = vunpack.c.h.b16 %v606
          %v613 = vunpack.c.h.b16 %v607
          %v614 = vpack.c.b16 %v611, %v610
          %v615 = vpack.c.b16 %v613, %v612
          %618 = vst [vmem:[#allocation2] sm:$0xff] %v614
          %619 = vst [vmem:[#allocation2 + $0x8] sm:$0x33] %v615
        $region44: #{depth_aware_fe.7} parent=39 // pred_fallthru
          _
        %v620 = vld [vmem:[%s299] sm:$0xff]
        %v621 = vld [vmem:[%s299 + $0x8] sm:$0xff]
        %v622 = vld [vmem:[%s299 + $0x10] sm:$0xff]
        %v623 = vld [vmem:[%s299 + $0x18] sm:$0xff]
        %v624 = vld [vmem:[%s299 + $0x20] sm:$0xff]
        %v625 = vld [vmem:[%s299 + $0x28] sm:$0xff]
        %v626 = vld [vmem:[%s299 + $0x30] sm:$0xff]
        %v627 = vld [vmem:[%s299 + $0x38] sm:$0xff]
        %v628 = vpack.c.bf16 %v621, %v620
        %v629 = vpack.c.bf16 %v623, %v622
        %v630 = vpack.c.bf16 %v625, %v624
        %v631 = vpack.c.bf16 %v627, %v626
        %v632 = vld [vmem:[#allocation2] sm:$0xff]
        %v633 = vld [vmem:[#allocation2 + $0x8] sm:$0x33]
        %v634 = vld [vmem:[%s4] sm:$0x3]
        %v636 = vlaneseq
        %v637 = vshrl.u32 %v636, 7
        %v638 = vsub.s32 0, %v637
        %v639 = vrot.slane %v634, %v638
        %v640 = vlaneseq
        %v641 = vshrl.u32 %v640, 7
        %v642 = vsub.s32 1, %v641
        %v643 = vrot.slane %v634, %v642
        %v648 = vunpack.c.l.b16 %v632
        %v649 = vunpack.c.h.b16 %v632
        %v650 = vunpack.c.l.b16 %v633
        %v651 = vunpack.c.h.b16 %v633
        %v652 = vpack.c.b16 %v650, %v648
        %v653 = vpack.c.b16 %v651, %v649
        %vm654 = vcmask 97280
        %v656 = vsel %vm654, %v628, 0
        %v659 = vsel %vm654, %v629, 0
        %v662 = vsel %vm654, %v630, 0
        %v665 = vsel %vm654, %v631, 0
        %vm667 = vcmask 1045504
        %v669 = vsel %vm667, %v652, 0
        %v672 = vsel %vm667, %v653, 0
        %674 = vmatprep.subr.bf16.mxu0 %v672
        %675 = vmatpush1.bf16.msra.mxu0 %v669
        %676 = vmatprep.subr.bf16.mxu0 0
        %677 = vmatpush1.bf16.msra.mxu0 0
        %678 = vmatprep.subr.bf16.mxu0 0
        %679 = vmatpush1.bf16.msra.mxu0 0
        %680 = vmatprep.subr.bf16.mxu0 0
        %681 = vmatpush1.bf16.msra.mxu0 0
        %682 = vmatprep.subr.bf16.mxu0 0
        %683 = vmatpush1.bf16.msra.mxu0 0
        %684 = vmatprep.subr.bf16.mxu0 0
        %685 = vmatpush1.bf16.msra.mxu0 0
        %686 = vmatprep.subr.bf16.mxu0 0
        %687 = vmatpush1.bf16.msra.mxu0 0
        %688 = vmatprep.subr.bf16.mxu0 0
        %689 = vmatpush1.bf16.msra.mxu0 0
        %690 = vmatprep.subr.bf16.mxu0 0
        %691 = vmatpush1.bf16.msra.mxu0 0
        %692 = vmatprep.subr.bf16.mxu0 0
        %693 = vmatpush1.bf16.msra.mxu0 0
        %694 = vmatprep.subr.bf16.mxu0 0
        %695 = vmatpush1.bf16.msra.mxu0 0
        %696 = vmatprep.subr.bf16.mxu0 0
        %697 = vmatpush1.bf16.msra.mxu0 0
        %698 = vmatprep.subr.bf16.mxu0 0
        %699 = vmatpush1.bf16.msra.mxu0 0
        %700 = vmatprep.subr.bf16.mxu0 0
        %701 = vmatpush1.bf16.msra.mxu0 0
        %702 = vmatprep.subr.bf16.mxu0 0
        %703 = vmatpush1.bf16.msra.mxu0 0
        %704 = vmatprep.subr.bf16.mxu0 0
        %705 = vmatpush1.bf16.msra.mxu0 0
        %706 = vmatprep.mubr.bf16.mxu0 0
        %707 = vmatmul.mubr.bf16.gmra.mrb[0].mxu0 %v656
        %v708 = vpop.f32.mrb[0].mxu0
        %v709 = vadd.f32 %v639, %v708
        %v710 = vpop.f32.mrb[0].mxu0
        %v711 = vadd.f32 %v643, %v710
        %v712 = vpop.f32.mrb[0].mxu0
        %v713 = vadd.f32 %v639, %v712
        %v714 = vpop.f32.mrb[0].mxu0
        %v715 = vadd.f32 %v643, %v714
        %716 = vmatprep.mubr.bf16.mxu0 0
        %717 = vmatmul.mubr.bf16.gmra.mrb[0].mxu0 %v659
        %v718 = vpop.f32.mrb[0].mxu0
        %v719 = vadd.f32 %v639, %v718
        %v720 = vpop.f32.mrb[0].mxu0
        %v721 = vadd.f32 %v643, %v720
        %v722 = vpop.f32.mrb[0].mxu0
        %v723 = vadd.f32 %v639, %v722
        %v724 = vpop.f32.mrb[0].mxu0
        %v725 = vadd.f32 %v643, %v724
        %726 = vmatprep.mubr.bf16.mxu0 0
        %727 = vmatmul.mubr.bf16.gmra.mrb[0].mxu0 %v662
        %v728 = vpop.f32.mrb[0].mxu0
        %v729 = vadd.f32 %v639, %v728
        %v730 = vpop.f32.mrb[0].mxu0
        %v731 = vadd.f32 %v643, %v730
        %v732 = vpop.f32.mrb[0].mxu0
        %v733 = vadd.f32 %v639, %v732
        %v734 = vpop.f32.mrb[0].mxu0
        %v735 = vadd.f32 %v643, %v734
        %736 = vmatprep.mubr.bf16.mxu0 0
        %737 = vmatmul.mubr.bf16.gmra.mrb[0].mxu0 %v665
        %v738 = vpop.f32.mrb[0].mxu0
        %v739 = vadd.f32 %v639, %v738
        %v740 = vpop.f32.mrb[0].mxu0
        %v741 = vadd.f32 %v643, %v740
        %v742 = vpop.f32.mrb[0].mxu0
        %v743 = vadd.f32 %v639, %v742
        %v744 = vpop.f32.mrb[0].mxu0
        %v745 = vadd.f32 %v643, %v744
        %746 = vdwg.mxu0
        %v747 = vld [vmem:[%s310] sm:$0xff]
        %v748 = vld [vmem:[%s310 + $0x8] sm:$0xff]
        %v749 = vld [vmem:[%s310 + $0x10] sm:$0xff]
        %v750 = vld [vmem:[%s310 + $0x18] sm:$0xff]
        %v751 = vld [vmem:[%s310 + $0x20] sm:$0xff]
        %v752 = vld [vmem:[%s310 + $0x28] sm:$0xff]
        %v753 = vld [vmem:[%s310 + $0x30] sm:$0xff]
        %v754 = vld [vmem:[%s310 + $0x38] sm:$0xff]
        %v755 = vld [vmem:[%s310 + $0x40] sm:$0xff]
        %v756 = vld [vmem:[%s310 + $0x48] sm:$0xff]
        %v757 = vld [vmem:[%s310 + $0x50] sm:$0xff]
        %v758 = vld [vmem:[%s310 + $0x58] sm:$0xff]
        %v759 = vld [vmem:[%s310 + $0x60] sm:$0xff]
        %v760 = vld [vmem:[%s310 + $0x68] sm:$0xff]
        %v761 = vld [vmem:[%s310 + $0x70] sm:$0xff]
        %v762 = vld [vmem:[%s310 + $0x78] sm:$0xff]
        %v763 = vadd.f32 %v747, %v709
        %v764 = vadd.f32 %v748, %v711
        %v765 = vadd.f32 %v749, %v713
        %v766 = vadd.f32 %v750, %v715
        %v767 = vadd.f32 %v751, %v719
        %v768 = vadd.f32 %v752, %v721
        %v769 = vadd.f32 %v753, %v723
        %v770 = vadd.f32 %v754, %v725
        %v771 = vadd.f32 %v755, %v729
        %v772 = vadd.f32 %v756, %v731
        %v773 = vadd.f32 %v757, %v733
        %v774 = vadd.f32 %v758, %v735
        %v775 = vadd.f32 %v759, %v739
        %v776 = vadd.f32 %v760, %v741
        %v777 = vadd.f32 %v761, %v743
        %v778 = vadd.f32 %v762, %v745
        %779 = vst [vmem:[%s285] sm:$0xff] %v763
        %780 = vst [vmem:[%s285 + $0x8] sm:$0xff] %v764
        %781 = vst [vmem:[%s285 + $0x10] sm:$0xff] %v765
        %782 = vst [vmem:[%s285 + $0x18] sm:$0xff] %v766
        %783 = vst [vmem:[%s285 + $0x20] sm:$0xff] %v767
        %784 = vst [vmem:[%s285 + $0x28] sm:$0xff] %v768
        %785 = vst [vmem:[%s285 + $0x30] sm:$0xff] %v769
        %786 = vst [vmem:[%s285 + $0x38] sm:$0xff] %v770
        %787 = vst [vmem:[%s285 + $0x40] sm:$0xff] %v771
        %788 = vst [vmem:[%s285 + $0x48] sm:$0xff] %v772
        %789 = vst [vmem:[%s285 + $0x50] sm:$0xff] %v773
        %790 = vst [vmem:[%s285 + $0x58] sm:$0xff] %v774
        %791 = vst [vmem:[%s285 + $0x60] sm:$0xff] %v775
        %792 = vst [vmem:[%s285 + $0x68] sm:$0xff] %v776
        %793 = vst [vmem:[%s285 + $0x70] sm:$0xff] %v777
        %794 = vst [vmem:[%s285 + $0x78] sm:$0xff] %v778
        %s795 = sand.u32 %s165, 1
        %s796 = scalar_lea.sflag [#allocation4], %s795
        %s797 = sand.u32 %s165, 1
        %s798 = smul.addr %s797, 128
        %s799 = scalar_lea.vmem [#allocation3], %s798
        // Predicated region
        $region45: #{depth_aware_fe.7} parent=39 // pred_check
          %p800 = pneg %p175
        $region46: #{depth_aware_fe.7} parent=39 // pred_check_branch
          %802 = sbr.rel (%p800) target = $region48
        $region47: #{depth_aware_fe.7} parent=39 // pred_region
          %s803 = smul.u32 8, %s24
          %s805 = ssub.s32 2048, 2048
          %806 = vsyncadd %s796, %s805
          %s807 = smul.addr %s803, 2
          %s808 = smul.addr %s23, 16
          %s809 = sadd.s32 %s807, %s808
          %s810 = smul.addr %s809, 128
          %s811 = scalar_lea.hbm %s5, %s810
          %s812 = sshll.u32 %s799, 4
          %s813 = int_to_ptr.vmem [resolvable:$true] %s812
          %818 = dma.vmem_to_hbm [thread:$0]  %s813, 2048, %s811, %s796, 256, 256, 16
        $region48: #{depth_aware_fe.7} parent=39 // pred_fallthru
          _
      $region40: #{depth_aware_fe.7} parent=5 // pred_fallthru
        _
      %p819 = scmp.le.s32.totalorder 2, %s14
      // Predicated region
      $region49: #{depth_aware_fe.7} parent=5 // pred_check
        %p820 = pneg %p819
      $region50: #{depth_aware_fe.7} parent=5 // pred_check_branch
        %822 = sbr.rel (%p820) target = $region52
      $region51: #{depth_aware_fe.7} parent=5 // pred_region
        %s823 = ssub.s32 %s14, 2
        // Predicated region
        $region53: #{depth_aware_fe.7} parent=51 // pred_check
          %p824 = pneg %p181
        $region54: #{depth_aware_fe.7} parent=51 // pred_check_branch
          %826 = sbr.rel (%p824) target = $region56
        $region55: #{depth_aware_fe.7} parent=51 // pred_region
          %s827 = sand.u32 %s166, 1
          %s828 = scalar_lea.sflag [#allocation4], %s827
          %s829 = sand.u32 %s166, 1
          %s830 = smul.addr %s829, 128
          %s831 = scalar_lea.vmem [#allocation3], %s830
          %832 = dma.done %s828, 2048
        $region56: #{depth_aware_fe.7} parent=51 // pred_fallthru
          _
      $region52: #{depth_aware_fe.7} parent=5 // pred_fallthru
        _
    $region6: #{depth_aware_fe.7} parent=1 // loop_footer
      %s18 = sadd.s32 1, %s14
    $region7: #{depth_aware_fe.7} parent=1 // loop_footer_branch
      %13 = sbr.rel target = $region3
    $region8: #{depth_aware_fe.7} parent=1 // loop_exit
      _
    %833 = vsyncpa [#allocation4], 1
    %s834 = scalar_lea.sflag [#allocation4], 1
    %835 = vsyncpa %s834, 1

</llo_original>
